<compile_context>
chip_gen: v5e
topology: v5e:2x2
jax: 0.10.0
libtpu: 0.0.40
codegen_flags: <defaults>
</compile_context>

<pallas_src>
import functools
from math import sqrt

import jax
import jax.numpy as jnp
from jax.experimental import pallas as pl
from jax.experimental.pallas import tpu as pltpu


# --------------------------------------------------------------------------
# Fused FusionBlock kernel: all 4 MultiheadAttentions for one batch element.
# --------------------------------------------------------------------------
def _fusion_block_kernel(mean_ref, res_mean_ref, res_res_ref,
                         w_rr_ref, w_m_ref, w_rm_ref,
                         b_rr_ref, b_m_ref, b_rm_ref,
                         wo_ref, bo01_ref, bo23_ref,
                         res_fused_ref, trend_fused_ref,
                         *, heads, scale):
    mean = mean_ref[0]            # [T, D] bf16
    res_mean = res_mean_ref[0]    # [T, D] bf16
    res_res = res_res_ref[0]      # [T, D] bf16
    D = mean.shape[-1]
    dh = D // heads

    # ---- packed input projections: 3 wide matmuls instead of 8 narrow ones.
    rr_p = (jnp.dot(res_res, w_rr_ref[...],
                    preferred_element_type=jnp.float32)
            + b_rr_ref[...]).astype(jnp.bfloat16)            # [T, 6D]
    m_p = (jnp.dot(mean, w_m_ref[...],
                   preferred_element_type=jnp.float32)
           + b_m_ref[...]).astype(jnp.bfloat16)              # [T, 3D]
    rm_p = (jnp.dot(res_mean, w_rm_ref[...],
                    preferred_element_type=jnp.float32)
            + b_rm_ref[...]).astype(jnp.bfloat16)            # [T, 3D]

    def sl(x, j):                 # j-th D-wide lane slab
        return x[:, j * D:(j + 1) * D]

    # attn0: Q=res_res KV=mean | attn1: Q=res_res KV=res_mean
    # attn2: Q=mean    KV=res_res | attn3: Q=res_mean KV=res_res
    q = (sl(rr_p, 0), sl(rr_p, 1), sl(m_p, 0), sl(rm_p, 0))
    k = (sl(m_p, 1), sl(rm_p, 1), sl(rr_p, 2), sl(rr_p, 4))
    v = (sl(m_p, 2), sl(rm_p, 2), sl(rr_p, 3), sl(rr_p, 5))

    def attn_out(i):
        """softmax(QK^T/sqrt(dh)) V, folded directly through Wo_i (per-head
        slabs, no in-kernel concatenate). Returns f32 [T, D] (no bias)."""
        qi, ki, vi = q[i], k[i], v[i]
        wo_i = wo_ref[i]                                      # [D, D] bf16
        acc = None
        for h in range(heads):    # static unroll: all heads in one grid step
            qh = qi[:, h * dh:(h + 1) * dh]                   # [T, dh]
            kh = ki[:, h * dh:(h + 1) * dh]                   # [S, dh]
            vh = vi[:, h * dh:(h + 1) * dh]                   # [S, dh]
            s = jax.lax.dot_general(qh, kh, (((1,), (1,)), ((), ())),
                                    preferred_element_type=jnp.float32) * scale
            mmax = jnp.max(s, axis=-1, keepdims=True)
            p = jnp.exp(s - mmax)
            denom = jnp.sum(p, axis=-1, keepdims=True)
            oh = jnp.dot(p.astype(jnp.bfloat16), vh,
                         preferred_element_type=jnp.float32)  # [T, dh]
            # Normalize the small [T, dh] output instead of the [T, S] probs;
            # approximate reciprocal runs on the (otherwise idle) EUP slot.
            oh = oh * pl.reciprocal(denom, approx=True)
            contrib = jnp.dot(oh.astype(jnp.bfloat16),
                              wo_i[h * dh:(h + 1) * dh, :],
                              preferred_element_type=jnp.float32)  # [T, D]
            acc = contrib if acc is None else acc + contrib
        return acc

    # The two pairwise sums are fused in-kernel; pair output biases are
    # pre-summed on the host (bo01 = bo0 + bo1, bo23 = bo2 + bo3).
    res_fused = attn_out(0) + attn_out(1) + bo01_ref[...]
    trend_fused = attn_out(2) + attn_out(3) + bo23_ref[...]
    res_fused_ref[0] = res_fused.astype(res_fused_ref.dtype)
    trend_fused_ref[0] = trend_fused.astype(trend_fused_ref.dtype)


def fusion_block_forward(params, mean_i, res_mean_i, res_res_i, *, heads):
    """FusionBlock.forward -> [res_fused, trend_fused], each [B, T, D]."""
    B, T, D = mean_i.shape
    assert D % heads == 0
    scale = 1.0 / sqrt(D // heads)

    seq_spec = pl.BlockSpec((1, T, D), lambda b: (b, 0, 0))

    def full_spec(arr):
        # Same block every grid step -> weights stay VMEM-resident.
        return pl.BlockSpec(arr.shape, lambda b: (0,) * arr.ndim)

    weight_names = ("w_rr", "w_m", "w_rm", "b_rr", "b_m", "b_rm",
                    "wo", "bo01", "bo23")
    weights = [params[n] for n in weight_names]

    kern = functools.partial(_fusion_block_kernel, heads=heads, scale=scale)
    res_fused, trend_fused = pl.pallas_call(
        kern,
        grid=(B,),
        in_specs=[seq_spec, seq_spec, seq_spec]
                 + [full_spec(w) for w in weights],
        out_specs=(pl.BlockSpec((1, T, D), lambda b: (b, 0, 0)),
                   pl.BlockSpec((1, T, D), lambda b: (b, 0, 0))),
        out_shape=(jax.ShapeDtypeStruct((B, T, D), jnp.float32),
                   jax.ShapeDtypeStruct((B, T, D), jnp.float32)),
        compiler_params=pltpu.CompilerParams(
            dimension_semantics=("parallel",)),
    )(mean_i.astype(jnp.bfloat16),
      res_mean_i.astype(jnp.bfloat16),
      res_res_i.astype(jnp.bfloat16),
      *weights)
    return [res_fused, trend_fused]


# --------------------------------------------------------------------------
# Deterministic parameter init.
# Raw per-attention weights (stored [in, out]) are kept for the pure-JAX
# reference; packed-by-shared-input weights are built for the kernel.
# --------------------------------------------------------------------------
def init_fusion_block(key, d_model, n_heads):
    D = d_model
    n_attn = 4
    keys = jax.random.split(key, 8)

    def xavier(k, rows, cols):
        a = sqrt(6.0 / (rows + cols))
        return jax.random.uniform(k, (n_attn, rows, cols), jnp.float32, -a, a)

    wq = xavier(keys[0], D, D)
    wk = xavier(keys[1], D, D)
    wv = xavier(keys[2], D, D)
    wo = xavier(keys[3], D, D)
    bq = 0.02 * jax.random.normal(keys[4], (n_attn, 1, D), jnp.float32)
    bk = 0.02 * jax.random.normal(keys[5], (n_attn, 1, D), jnp.float32)
    bv = 0.02 * jax.random.normal(keys[6], (n_attn, 1, D), jnp.float32)
    bo = 0.02 * jax.random.normal(keys[7], (n_attn, 1, D), jnp.float32)

    raw = dict(wq=wq, wk=wk, wv=wv, wo=wo, bq=bq, bk=bk, bv=bv, bo=bo)

    bf = lambda x: x.astype(jnp.bfloat16)
    packed = {
        # res_res projects to: [Q0 | Q1 | K2 | V2 | K3 | V3]      -> [D, 6D]
        "w_rr": bf(jnp.concatenate(
            [wq[0], wq[1], wk[2], wv[2], wk[3], wv[3]], axis=-1)),
        "b_rr": jnp.concatenate(
            [bq[0], bq[1], bk[2], bv[2], bk[3], bv[3]], axis=-1),   # [1, 6D] f32
        # mean projects to: [Q2 | K0 | V0]                         -> [D, 3D]
        "w_m": bf(jnp.concatenate([wq[2], wk[0], wv[0]], axis=-1)),
        "b_m": jnp.concatenate([bq[2], bk[0], bv[0]], axis=-1),     # [1, 3D] f32
        # res_mean projects to: [Q3 | K1 | V1]                     -> [D, 3D]
        "w_rm": bf(jnp.concatenate([wq[3], wk[1], wv[1]], axis=-1)),
        "b_rm": jnp.concatenate([bq[3], bk[1], bv[1]], axis=-1),    # [1, 3D] f32
        # per-attention output projection weights, pair biases pre-summed
        "wo": bf(wo),                                               # [4, D, D]
        "bo01": bo[0] + bo[1],                                      # [1, D] f32
        "bo23": bo[2] + bo[3],                                      # [1, D] f32
    }
    return raw, packed


# --------------------------------------------------------------------------
# Pure-JAX reference (exact softmax, f32 math on the bf16-rounded params).
# --------------------------------------------------------------------------
def _mha_ref(q_in, kv_in, wq, wk, wv, bq, bk, bv, wo, bo, heads):
    D = wq.shape[0]
    dh = D // heads
    q = q_in @ wq + bq
    k = kv_in @ wk + bk
    v = kv_in @ wv + bv
    T, S = q.shape[0], k.shape[0]
    qh = q.reshape(T, heads, dh).transpose(1, 0, 2)
    kh = k.reshape(S, heads, dh).transpose(1, 0, 2)
    vh = v.reshape(S, heads, dh).transpose(1, 0, 2)
    s = jnp.einsum("htd,hsd->hts", qh, kh) / sqrt(dh)
    p = jax.nn.softmax(s, axis=-1)
    o = jnp.einsum("hts,hsd->htd", p, vh)
    o = o.transpose(1, 0, 2).reshape(T, D)
    return o @ wo + bo


def fusion_block_ref(raw, mean_i, res_mean_i, res_res_i, heads):
    f32 = lambda a: a.astype(jnp.float32)
    bfr = lambda a: f32(a.astype(jnp.bfloat16))   # emulate bf16 rounding
    m, rm, rr = bfr(mean_i), bfr(res_mean_i), bfr(res_res_i)

    def attn(i, q_in, kv_in):
        return _mha_ref(q_in, kv_in,
                        bfr(raw["wq"][i]), bfr(raw["wk"][i]), bfr(raw["wv"][i]),
                        raw["bq"][i], raw["bk"][i], raw["bv"][i],
                        bfr(raw["wo"][i]), raw["bo"][i], heads)

    def per_batch(mb, rmb, rrb):
        res_fused = attn(0, rrb, mb) + attn(1, rrb, rmb)
        trend_fused = attn(2, mb, rrb) + attn(3, rmb, rrb)
        return res_fused, trend_fused

    return jax.vmap(per_batch)(m, rm, rr)


# --------------------------------------------------------------------------
# main
# --------------------------------------------------------------------------
if __name__ == "__main__":
    B, T, D, H = 2, 16, 32, 4
    key = jax.random.PRNGKey(0)
    k_param, k_mean, k_rmean, k_rres = jax.random.split(key, 4)

    raw_params, packed_params = init_fusion_block(k_param, D, H)
    mean_i = jax.random.normal(k_mean, (B, T, D), jnp.float32)
    res_mean_i = jax.random.normal(k_rmean, (B, T, D), jnp.float32)
    res_res_i = jax.random.normal(k_rres, (B, T, D), jnp.float32)

    res_fused, trend_fused = fusion_block_forward(
        packed_params, mean_i, res_mean_i, res_res_i, heads=H)
    res_fused, trend_fused = jax.block_until_ready((res_fused, trend_fused))

    assert res_fused.shape == (B, T, D), res_fused.shape
    assert trend_fused.shape == (B, T, D), trend_fused.shape
    assert bool(jnp.all(jnp.isfinite(res_fused)))
    assert bool(jnp.all(jnp.isfinite(trend_fused)))

    ref_res, ref_trend = fusion_block_ref(raw_params, mean_i, res_mean_i,
                                          res_res_i, H)
    err = max(float(jnp.max(jnp.abs(res_fused - ref_res))),
              float(jnp.max(jnp.abs(trend_fused - ref_trend))))
    # bf16 MXU operands + approximate-reciprocal softmax -> loose tolerance.
    assert err < 1e-1, f"max abs error {err}"
    print("KERNEL_OK")
</pallas_src>

<mosaic_0001>
module attributes {stable_mosaic.version = 11 : i64} {
  func.func @_fusion_block_kernel(%arg0: i32, %arg1: memref<1x16x32xbf16, #tpu.memory_space<vmem>>, %arg2: memref<1x16x32xbf16, #tpu.memory_space<vmem>>, %arg3: memref<1x16x32xbf16, #tpu.memory_space<vmem>>, %arg4: memref<32x192xbf16, #tpu.memory_space<vmem>>, %arg5: memref<32x96xbf16, #tpu.memory_space<vmem>>, %arg6: memref<32x96xbf16, #tpu.memory_space<vmem>>, %arg7: memref<1x192xf32, #tpu.memory_space<vmem>>, %arg8: memref<1x96xf32, #tpu.memory_space<vmem>>, %arg9: memref<1x96xf32, #tpu.memory_space<vmem>>, %arg10: memref<4x32x32xbf16, #tpu.memory_space<vmem>>, %arg11: memref<1x32xf32, #tpu.memory_space<vmem>>, %arg12: memref<1x32xf32, #tpu.memory_space<vmem>>, %arg13: memref<1x16x32xf32, #tpu.memory_space<vmem>>, %arg14: memref<1x16x32xf32, #tpu.memory_space<vmem>>) attributes {dimension_semantics = [#tpu.dimension_semantics<parallel>], iteration_bounds = array<i64: 2>, scalar_prefetch = 0 : i64, scratch_operands = 0 : i64, tpu.core_type = #tpu.core_type<tc>, window_params = [{transform_indices = @transform_0, window_bounds = array<i64: 1, 16, 32>}, {transform_indices = @transform_1, window_bounds = array<i64: 1, 16, 32>}, {transform_indices = @transform_2, window_bounds = array<i64: 1, 16, 32>}, {pipeline_mode = #tpu.pipeline_mode<synchronous>, transform_indices = @transform_3, window_bounds = array<i64: 32, 192>}, {pipeline_mode = #tpu.pipeline_mode<synchronous>, transform_indices = @transform_4, window_bounds = array<i64: 32, 96>}, {pipeline_mode = #tpu.pipeline_mode<synchronous>, transform_indices = @transform_5, window_bounds = array<i64: 32, 96>}, {pipeline_mode = #tpu.pipeline_mode<synchronous>, transform_indices = @transform_6, window_bounds = array<i64: 1, 192>}, {pipeline_mode = #tpu.pipeline_mode<synchronous>, transform_indices = @transform_7, window_bounds = array<i64: 1, 96>}, {pipeline_mode = #tpu.pipeline_mode<synchronous>, transform_indices = @transform_8, window_bounds = array<i64: 1, 96>}, {pipeline_mode = #tpu.pipeline_mode<synchronous>, transform_indices = @transform_9, window_bounds = array<i64: 4, 32, 32>}, {pipeline_mode = #tpu.pipeline_mode<synchronous>, transform_indices = @transform_10, window_bounds = array<i64: 1, 32>}, {pipeline_mode = #tpu.pipeline_mode<synchronous>, transform_indices = @transform_11, window_bounds = array<i64: 1, 32>}, {transform_indices = @transform_12, window_bounds = array<i64: 1, 16, 32>}, {transform_indices = @transform_13, window_bounds = array<i64: 1, 16, 32>}]} {
    %c0 = arith.constant 0 : index
    %c0_0 = arith.constant 0 : index
    %c0_1 = arith.constant 0 : index
    %0 = vector.load %arg1[%c0, %c0_0, %c0_1] : memref<1x16x32xbf16, #tpu.memory_space<vmem>>, vector<1x16x32xbf16>
    %1 = vector.shape_cast %0 : vector<1x16x32xbf16> to vector<16x32xbf16>
    %c0_2 = arith.constant 0 : index
    %c0_3 = arith.constant 0 : index
    %c0_4 = arith.constant 0 : index
    %2 = vector.load %arg2[%c0_2, %c0_3, %c0_4] : memref<1x16x32xbf16, #tpu.memory_space<vmem>>, vector<1x16x32xbf16>
    %3 = vector.shape_cast %2 : vector<1x16x32xbf16> to vector<16x32xbf16>
    %c0_5 = arith.constant 0 : index
    %c0_6 = arith.constant 0 : index
    %c0_7 = arith.constant 0 : index
    %4 = vector.load %arg3[%c0_5, %c0_6, %c0_7] : memref<1x16x32xbf16, #tpu.memory_space<vmem>>, vector<1x16x32xbf16>
    %5 = vector.shape_cast %4 : vector<1x16x32xbf16> to vector<16x32xbf16>
    %c0_8 = arith.constant 0 : index
    %c0_9 = arith.constant 0 : index
    %6 = vector.load %arg4[%c0_8, %c0_9] : memref<32x192xbf16, #tpu.memory_space<vmem>>, vector<32x192xbf16>
    %cst = arith.constant dense<0.000000e+00> : vector<16x192xf32>
    %7 = tpu.matmul %5, %6, %cst {dimension_numbers = #tpu.dot_dimension_numbers<[1], [0], [0], [1], [0, 0, 1, 1], [], []>} : vector<16x32xbf16>, vector<32x192xbf16>, vector<16x192xf32> -> vector<16x192xf32>
    %c0_10 = arith.constant 0 : index
    %c0_11 = arith.constant 0 : index
    %8 = vector.load %arg7[%c0_10, %c0_11] : memref<1x192xf32, #tpu.memory_space<vmem>>, vector<1x192xf32>
    %9 = vector.broadcast %8 : vector<1x192xf32> to vector<16x192xf32>
    %10 = arith.addf %7, %9 : vector<16x192xf32>
    %11 = arith.truncf %10 : vector<16x192xf32> to vector<16x192xbf16>
    %c0_12 = arith.constant 0 : index
    %c0_13 = arith.constant 0 : index
    %12 = vector.load %arg5[%c0_12, %c0_13] : memref<32x96xbf16, #tpu.memory_space<vmem>>, vector<32x96xbf16>
    %cst_14 = arith.constant dense<0.000000e+00> : vector<16x96xf32>
    %13 = tpu.matmul %1, %12, %cst_14 {dimension_numbers = #tpu.dot_dimension_numbers<[1], [0], [0], [1], [0, 0, 1, 1], [], []>} : vector<16x32xbf16>, vector<32x96xbf16>, vector<16x96xf32> -> vector<16x96xf32>
    %c0_15 = arith.constant 0 : index
    %c0_16 = arith.constant 0 : index
    %14 = vector.load %arg8[%c0_15, %c0_16] : memref<1x96xf32, #tpu.memory_space<vmem>>, vector<1x96xf32>
    %15 = vector.broadcast %14 : vector<1x96xf32> to vector<16x96xf32>
    %16 = arith.addf %13, %15 : vector<16x96xf32>
    %17 = arith.truncf %16 : vector<16x96xf32> to vector<16x96xbf16>
    %c0_17 = arith.constant 0 : index
    %c0_18 = arith.constant 0 : index
    %18 = vector.load %arg6[%c0_17, %c0_18] : memref<32x96xbf16, #tpu.memory_space<vmem>>, vector<32x96xbf16>
    %cst_19 = arith.constant dense<0.000000e+00> : vector<16x96xf32>
    %19 = tpu.matmul %3, %18, %cst_19 {dimension_numbers = #tpu.dot_dimension_numbers<[1], [0], [0], [1], [0, 0, 1, 1], [], []>} : vector<16x32xbf16>, vector<32x96xbf16>, vector<16x96xf32> -> vector<16x96xf32>
    %c0_20 = arith.constant 0 : index
    %c0_21 = arith.constant 0 : index
    %20 = vector.load %arg9[%c0_20, %c0_21] : memref<1x96xf32, #tpu.memory_space<vmem>>, vector<1x96xf32>
    %21 = vector.broadcast %20 : vector<1x96xf32> to vector<16x96xf32>
    %22 = arith.addf %19, %21 : vector<16x96xf32>
    %23 = arith.truncf %22 : vector<16x96xf32> to vector<16x96xbf16>
    %24 = vector.extract_strided_slice %11 {offsets = [0, 0], sizes = [16, 32], strides = [1, 1]} : vector<16x192xbf16> to vector<16x32xbf16>
    %25 = vector.extract_strided_slice %11 {offsets = [0, 32], sizes = [16, 32], strides = [1, 1]} : vector<16x192xbf16> to vector<16x32xbf16>
    %26 = vector.extract_strided_slice %17 {offsets = [0, 0], sizes = [16, 32], strides = [1, 1]} : vector<16x96xbf16> to vector<16x32xbf16>
    %27 = vector.extract_strided_slice %23 {offsets = [0, 0], sizes = [16, 32], strides = [1, 1]} : vector<16x96xbf16> to vector<16x32xbf16>
    %28 = vector.extract_strided_slice %17 {offsets = [0, 32], sizes = [16, 32], strides = [1, 1]} : vector<16x96xbf16> to vector<16x32xbf16>
    %29 = vector.extract_strided_slice %23 {offsets = [0, 32], sizes = [16, 32], strides = [1, 1]} : vector<16x96xbf16> to vector<16x32xbf16>
    %30 = vector.extract_strided_slice %11 {offsets = [0, 64], sizes = [16, 32], strides = [1, 1]} : vector<16x192xbf16> to vector<16x32xbf16>
    %31 = vector.extract_strided_slice %11 {offsets = [0, 128], sizes = [16, 32], strides = [1, 1]} : vector<16x192xbf16> to vector<16x32xbf16>
    %32 = vector.extract_strided_slice %17 {offsets = [0, 64], sizes = [16, 32], strides = [1, 1]} : vector<16x96xbf16> to vector<16x32xbf16>
    %33 = vector.extract_strided_slice %23 {offsets = [0, 64], sizes = [16, 32], strides = [1, 1]} : vector<16x96xbf16> to vector<16x32xbf16>
    %34 = vector.extract_strided_slice %11 {offsets = [0, 96], sizes = [16, 32], strides = [1, 1]} : vector<16x192xbf16> to vector<16x32xbf16>
    %35 = vector.extract_strided_slice %11 {offsets = [0, 160], sizes = [16, 32], strides = [1, 1]} : vector<16x192xbf16> to vector<16x32xbf16>
    %c0_22 = arith.constant 0 : index
    %c0_23 = arith.constant 0 : index
    %c0_24 = arith.constant 0 : index
    %36 = vector.load %arg10[%c0_22, %c0_23, %c0_24] : memref<4x32x32xbf16, #tpu.memory_space<vmem>>, vector<1x32x32xbf16>
    %37 = vector.shape_cast %36 : vector<1x32x32xbf16> to vector<32x32xbf16>
    %38 = vector.extract_strided_slice %24 {offsets = [0, 0], sizes = [16, 8], strides = [1, 1]} : vector<16x32xbf16> to vector<16x8xbf16>
    %39 = vector.extract_strided_slice %28 {offsets = [0, 0], sizes = [16, 8], strides = [1, 1]} : vector<16x32xbf16> to vector<16x8xbf16>
    %40 = vector.extract_strided_slice %32 {offsets = [0, 0], sizes = [16, 8], strides = [1, 1]} : vector<16x32xbf16> to vector<16x8xbf16>
    %cst_25 = arith.constant dense<0.000000e+00> : vector<16x16xf32>
    %41 = tpu.matmul %38, %39, %cst_25 {dimension_numbers = #tpu.dot_dimension_numbers<[1], [1], [0], [0], [0, 0, 1, 0], [], []>} : vector<16x8xbf16>, vector<16x8xbf16>, vector<16x16xf32> -> vector<16x16xf32>
    %cst_26 = arith.constant 0.353553385 : f32
    %42 = vector.broadcast %cst_26 : f32 to vector<16x16xf32>
    %43 = arith.mulf %41, %42 : vector<16x16xf32>
    %cst_27 = arith.constant dense<0xFF800000> : vector<16xf32>
    %44 = vector.multi_reduction <maximumf>, %43, %cst_27 [1] : vector<16x16xf32> to vector<16xf32>
    %45 = vector.shape_cast %44 : vector<16xf32> to vector<16x1xf32>
    %46 = vector.broadcast %45 : vector<16x1xf32> to vector<16x16xf32>
    %47 = arith.subf %43, %46 : vector<16x16xf32>
    %48 = math.exp %47 : vector<16x16xf32>
    %cst_28 = arith.constant dense<0.000000e+00> : vector<16xf32>
    %49 = vector.multi_reduction <add>, %48, %cst_28 [1] : vector<16x16xf32> to vector<16xf32>
    %50 = vector.shape_cast %49 : vector<16xf32> to vector<16x1xf32>
    %51 = arith.truncf %48 : vector<16x16xf32> to vector<16x16xbf16>
    %cst_29 = arith.constant dense<0.000000e+00> : vector<16x8xf32>
    %52 = tpu.matmul %51, %40, %cst_29 {dimension_numbers = #tpu.dot_dimension_numbers<[1], [0], [0], [1], [0, 0, 1, 1], [], []>} : vector<16x16xbf16>, vector<16x8xbf16>, vector<16x8xf32> -> vector<16x8xf32>
    %53 = tpu.reciprocal %50 {approx = true} : vector<16x1xf32> -> vector<16x1xf32>
    %54 = vector.broadcast %53 : vector<16x1xf32> to vector<16x8xf32>
    %55 = arith.mulf %52, %54 : vector<16x8xf32>
    %56 = arith.truncf %55 : vector<16x8xf32> to vector<16x8xbf16>
    %57 = vector.extract_strided_slice %37 {offsets = [0, 0], sizes = [8, 32], strides = [1, 1]} : vector<32x32xbf16> to vector<8x32xbf16>
    %cst_30 = arith.constant dense<0.000000e+00> : vector<16x32xf32>
    %58 = tpu.matmul %56, %57, %cst_30 {dimension_numbers = #tpu.dot_dimension_numbers<[1], [0], [0], [1], [0, 0, 1, 1], [], []>} : vector<16x8xbf16>, vector<8x32xbf16>, vector<16x32xf32> -> vector<16x32xf32>
    %59 = vector.extract_strided_slice %24 {offsets = [0, 8], sizes = [16, 8], strides = [1, 1]} : vector<16x32xbf16> to vector<16x8xbf16>
    %60 = vector.extract_strided_slice %28 {offsets = [0, 8], sizes = [16, 8], strides = [1, 1]} : vector<16x32xbf16> to vector<16x8xbf16>
    %61 = vector.extract_strided_slice %32 {offsets = [0, 8], sizes = [16, 8], strides = [1, 1]} : vector<16x32xbf16> to vector<16x8xbf16>
    %cst_31 = arith.constant dense<0.000000e+00> : vector<16x16xf32>
    %62 = tpu.matmul %59, %60, %cst_31 {dimension_numbers = #tpu.dot_dimension_numbers<[1], [1], [0], [0], [0, 0, 1, 0], [], []>} : vector<16x8xbf16>, vector<16x8xbf16>, vector<16x16xf32> -> vector<16x16xf32>
    %cst_32 = arith.constant 0.353553385 : f32
    %63 = vector.broadcast %cst_32 : f32 to vector<16x16xf32>
    %64 = arith.mulf %62, %63 : vector<16x16xf32>
    %cst_33 = arith.constant dense<0xFF800000> : vector<16xf32>
    %65 = vector.multi_reduction <maximumf>, %64, %cst_33 [1] : vector<16x16xf32> to vector<16xf32>
    %66 = vector.shape_cast %65 : vector<16xf32> to vector<16x1xf32>
    %67 = vector.broadcast %66 : vector<16x1xf32> to vector<16x16xf32>
    %68 = arith.subf %64, %67 : vector<16x16xf32>
    %69 = math.exp %68 : vector<16x16xf32>
    %cst_34 = arith.constant dense<0.000000e+00> : vector<16xf32>
    %70 = vector.multi_reduction <add>, %69, %cst_34 [1] : vector<16x16xf32> to vector<16xf32>
    %71 = vector.shape_cast %70 : vector<16xf32> to vector<16x1xf32>
    %72 = arith.truncf %69 : vector<16x16xf32> to vector<16x16xbf16>
    %cst_35 = arith.constant dense<0.000000e+00> : vector<16x8xf32>
    %73 = tpu.matmul %72, %61, %cst_35 {dimension_numbers = #tpu.dot_dimension_numbers<[1], [0], [0], [1], [0, 0, 1, 1], [], []>} : vector<16x16xbf16>, vector<16x8xbf16>, vector<16x8xf32> -> vector<16x8xf32>
    %74 = tpu.reciprocal %71 {approx = true} : vector<16x1xf32> -> vector<16x1xf32>
    %75 = vector.broadcast %74 : vector<16x1xf32> to vector<16x8xf32>
    %76 = arith.mulf %73, %75 : vector<16x8xf32>
    %77 = arith.truncf %76 : vector<16x8xf32> to vector<16x8xbf16>
    %78 = vector.extract_strided_slice %37 {offsets = [8, 0], sizes = [8, 32], strides = [1, 1]} : vector<32x32xbf16> to vector<8x32xbf16>
    %cst_36 = arith.constant dense<0.000000e+00> : vector<16x32xf32>
    %79 = tpu.matmul %77, %78, %cst_36 {dimension_numbers = #tpu.dot_dimension_numbers<[1], [0], [0], [1], [0, 0, 1, 1], [], []>} : vector<16x8xbf16>, vector<8x32xbf16>, vector<16x32xf32> -> vector<16x32xf32>
    %80 = arith.addf %58, %79 : vector<16x32xf32>
    %81 = vector.extract_strided_slice %24 {offsets = [0, 16], sizes = [16, 8], strides = [1, 1]} : vector<16x32xbf16> to vector<16x8xbf16>
    %82 = vector.extract_strided_slice %28 {offsets = [0, 16], sizes = [16, 8], strides = [1, 1]} : vector<16x32xbf16> to vector<16x8xbf16>
    %83 = vector.extract_strided_slice %32 {offsets = [0, 16], sizes = [16, 8], strides = [1, 1]} : vector<16x32xbf16> to vector<16x8xbf16>
    %cst_37 = arith.constant dense<0.000000e+00> : vector<16x16xf32>
    %84 = tpu.matmul %81, %82, %cst_37 {dimension_numbers = #tpu.dot_dimension_numbers<[1], [1], [0], [0], [0, 0, 1, 0], [], []>} : vector<16x8xbf16>, vector<16x8xbf16>, vector<16x16xf32> -> vector<16x16xf32>
    %cst_38 = arith.constant 0.353553385 : f32
    %85 = vector.broadcast %cst_38 : f32 to vector<16x16xf32>
    %86 = arith.mulf %84, %85 : vector<16x16xf32>
    %cst_39 = arith.constant dense<0xFF800000> : vector<16xf32>
    %87 = vector.multi_reduction <maximumf>, %86, %cst_39 [1] : vector<16x16xf32> to vector<16xf32>
    %88 = vector.shape_cast %87 : vector<16xf32> to vector<16x1xf32>
    %89 = vector.broadcast %88 : vector<16x1xf32> to vector<16x16xf32>
    %90 = arith.subf %86, %89 : vector<16x16xf32>
    %91 = math.exp %90 : vector<16x16xf32>
    %cst_40 = arith.constant dense<0.000000e+00> : vector<16xf32>
    %92 = vector.multi_reduction <add>, %91, %cst_40 [1] : vector<16x16xf32> to vector<16xf32>
    %93 = vector.shape_cast %92 : vector<16xf32> to vector<16x1xf32>
    %94 = arith.truncf %91 : vector<16x16xf32> to vector<16x16xbf16>
    %cst_41 = arith.constant dense<0.000000e+00> : vector<16x8xf32>
    %95 = tpu.matmul %94, %83, %cst_41 {dimension_numbers = #tpu.dot_dimension_numbers<[1], [0], [0], [1], [0, 0, 1, 1], [], []>} : vector<16x16xbf16>, vector<16x8xbf16>, vector<16x8xf32> -> vector<16x8xf32>
    %96 = tpu.reciprocal %93 {approx = true} : vector<16x1xf32> -> vector<16x1xf32>
    %97 = vector.broadcast %96 : vector<16x1xf32> to vector<16x8xf32>
    %98 = arith.mulf %95, %97 : vector<16x8xf32>
    %99 = arith.truncf %98 : vector<16x8xf32> to vector<16x8xbf16>
    %100 = vector.extract_strided_slice %37 {offsets = [16, 0], sizes = [8, 32], strides = [1, 1]} : vector<32x32xbf16> to vector<8x32xbf16>
    %cst_42 = arith.constant dense<0.000000e+00> : vector<16x32xf32>
    %101 = tpu.matmul %99, %100, %cst_42 {dimension_numbers = #tpu.dot_dimension_numbers<[1], [0], [0], [1], [0, 0, 1, 1], [], []>} : vector<16x8xbf16>, vector<8x32xbf16>, vector<16x32xf32> -> vector<16x32xf32>
    %102 = arith.addf %80, %101 : vector<16x32xf32>
    %103 = vector.extract_strided_slice %24 {offsets = [0, 24], sizes = [16, 8], strides = [1, 1]} : vector<16x32xbf16> to vector<16x8xbf16>
    %104 = vector.extract_strided_slice %28 {offsets = [0, 24], sizes = [16, 8], strides = [1, 1]} : vector<16x32xbf16> to vector<16x8xbf16>
    %105 = vector.extract_strided_slice %32 {offsets = [0, 24], sizes = [16, 8], strides = [1, 1]} : vector<16x32xbf16> to vector<16x8xbf16>
    %cst_43 = arith.constant dense<0.000000e+00> : vector<16x16xf32>
    %106 = tpu.matmul %103, %104, %cst_43 {dimension_numbers = #tpu.dot_dimension_numbers<[1], [1], [0], [0], [0, 0, 1, 0], [], []>} : vector<16x8xbf16>, vector<16x8xbf16>, vector<16x16xf32> -> vector<16x16xf32>
    %cst_44 = arith.constant 0.353553385 : f32
    %107 = vector.broadcast %cst_44 : f32 to vector<16x16xf32>
    %108 = arith.mulf %106, %107 : vector<16x16xf32>
    %cst_45 = arith.constant dense<0xFF800000> : vector<16xf32>
    %109 = vector.multi_reduction <maximumf>, %108, %cst_45 [1] : vector<16x16xf32> to vector<16xf32>
    %110 = vector.shape_cast %109 : vector<16xf32> to vector<16x1xf32>
    %111 = vector.broadcast %110 : vector<16x1xf32> to vector<16x16xf32>
    %112 = arith.subf %108, %111 : vector<16x16xf32>
    %113 = math.exp %112 : vector<16x16xf32>
    %cst_46 = arith.constant dense<0.000000e+00> : vector<16xf32>
    %114 = vector.multi_reduction <add>, %113, %cst_46 [1] : vector<16x16xf32> to vector<16xf32>
    %115 = vector.shape_cast %114 : vector<16xf32> to vector<16x1xf32>
    %116 = arith.truncf %113 : vector<16x16xf32> to vector<16x16xbf16>
    %cst_47 = arith.constant dense<0.000000e+00> : vector<16x8xf32>
    %117 = tpu.matmul %116, %105, %cst_47 {dimension_numbers = #tpu.dot_dimension_numbers<[1], [0], [0], [1], [0, 0, 1, 1], [], []>} : vector<16x16xbf16>, vector<16x8xbf16>, vector<16x8xf32> -> vector<16x8xf32>
    %118 = tpu.reciprocal %115 {approx = true} : vector<16x1xf32> -> vector<16x1xf32>
    %119 = vector.broadcast %118 : vector<16x1xf32> to vector<16x8xf32>
    %120 = arith.mulf %117, %119 : vector<16x8xf32>
    %121 = arith.truncf %120 : vector<16x8xf32> to vector<16x8xbf16>
    %122 = vector.extract_strided_slice %37 {offsets = [24, 0], sizes = [8, 32], strides = [1, 1]} : vector<32x32xbf16> to vector<8x32xbf16>
    %cst_48 = arith.constant dense<0.000000e+00> : vector<16x32xf32>
    %123 = tpu.matmul %121, %122, %cst_48 {dimension_numbers = #tpu.dot_dimension_numbers<[1], [0], [0], [1], [0, 0, 1, 1], [], []>} : vector<16x8xbf16>, vector<8x32xbf16>, vector<16x32xf32> -> vector<16x32xf32>
    %124 = arith.addf %102, %123 : vector<16x32xf32>
    %c1 = arith.constant 1 : index
    %c0_49 = arith.constant 0 : index
    %c0_50 = arith.constant 0 : index
    %125 = vector.load %arg10[%c1, %c0_49, %c0_50] : memref<4x32x32xbf16, #tpu.memory_space<vmem>>, vector<1x32x32xbf16>
    %126 = vector.shape_cast %125 : vector<1x32x32xbf16> to vector<32x32xbf16>
    %127 = vector.extract_strided_slice %25 {offsets = [0, 0], sizes = [16, 8], strides = [1, 1]} : vector<16x32xbf16> to vector<16x8xbf16>
    %128 = vector.extract_strided_slice %29 {offsets = [0, 0], sizes = [16, 8], strides = [1, 1]} : vector<16x32xbf16> to vector<16x8xbf16>
    %129 = vector.extract_strided_slice %33 {offsets = [0, 0], sizes = [16, 8], strides = [1, 1]} : vector<16x32xbf16> to vector<16x8xbf16>
    %cst_51 = arith.constant dense<0.000000e+00> : vector<16x16xf32>
    %130 = tpu.matmul %127, %128, %cst_51 {dimension_numbers = #tpu.dot_dimension_numbers<[1], [1], [0], [0], [0, 0, 1, 0], [], []>} : vector<16x8xbf16>, vector<16x8xbf16>, vector<16x16xf32> -> vector<16x16xf32>
    %cst_52 = arith.constant 0.353553385 : f32
    %131 = vector.broadcast %cst_52 : f32 to vector<16x16xf32>
    %132 = arith.mulf %130, %131 : vector<16x16xf32>
    %cst_53 = arith.constant dense<0xFF800000> : vector<16xf32>
    %133 = vector.multi_reduction <maximumf>, %132, %cst_53 [1] : vector<16x16xf32> to vector<16xf32>
    %134 = vector.shape_cast %133 : vector<16xf32> to vector<16x1xf32>
    %135 = vector.broadcast %134 : vector<16x1xf32> to vector<16x16xf32>
    %136 = arith.subf %132, %135 : vector<16x16xf32>
    %137 = math.exp %136 : vector<16x16xf32>
    %cst_54 = arith.constant dense<0.000000e+00> : vector<16xf32>
    %138 = vector.multi_reduction <add>, %137, %cst_54 [1] : vector<16x16xf32> to vector<16xf32>
    %139 = vector.shape_cast %138 : vector<16xf32> to vector<16x1xf32>
    %140 = arith.truncf %137 : vector<16x16xf32> to vector<16x16xbf16>
    %cst_55 = arith.constant dense<0.000000e+00> : vector<16x8xf32>
    %141 = tpu.matmul %140, %129, %cst_55 {dimension_numbers = #tpu.dot_dimension_numbers<[1], [0], [0], [1], [0, 0, 1, 1], [], []>} : vector<16x16xbf16>, vector<16x8xbf16>, vector<16x8xf32> -> vector<16x8xf32>
    %142 = tpu.reciprocal %139 {approx = true} : vector<16x1xf32> -> vector<16x1xf32>
    %143 = vector.broadcast %142 : vector<16x1xf32> to vector<16x8xf32>
    %144 = arith.mulf %141, %143 : vector<16x8xf32>
    %145 = arith.truncf %144 : vector<16x8xf32> to vector<16x8xbf16>
    %146 = vector.extract_strided_slice %126 {offsets = [0, 0], sizes = [8, 32], strides = [1, 1]} : vector<32x32xbf16> to vector<8x32xbf16>
    %cst_56 = arith.constant dense<0.000000e+00> : vector<16x32xf32>
    %147 = tpu.matmul %145, %146, %cst_56 {dimension_numbers = #tpu.dot_dimension_numbers<[1], [0], [0], [1], [0, 0, 1, 1], [], []>} : vector<16x8xbf16>, vector<8x32xbf16>, vector<16x32xf32> -> vector<16x32xf32>
    %148 = vector.extract_strided_slice %25 {offsets = [0, 8], sizes = [16, 8], strides = [1, 1]} : vector<16x32xbf16> to vector<16x8xbf16>
    %149 = vector.extract_strided_slice %29 {offsets = [0, 8], sizes = [16, 8], strides = [1, 1]} : vector<16x32xbf16> to vector<16x8xbf16>
    %150 = vector.extract_strided_slice %33 {offsets = [0, 8], sizes = [16, 8], strides = [1, 1]} : vector<16x32xbf16> to vector<16x8xbf16>
    %cst_57 = arith.constant dense<0.000000e+00> : vector<16x16xf32>
    %151 = tpu.matmul %148, %149, %cst_57 {dimension_numbers = #tpu.dot_dimension_numbers<[1], [1], [0], [0], [0, 0, 1, 0], [], []>} : vector<16x8xbf16>, vector<16x8xbf16>, vector<16x16xf32> -> vector<16x16xf32>
    %cst_58 = arith.constant 0.353553385 : f32
    %152 = vector.broadcast %cst_58 : f32 to vector<16x16xf32>
    %153 = arith.mulf %151, %152 : vector<16x16xf32>
    %cst_59 = arith.constant dense<0xFF800000> : vector<16xf32>
    %154 = vector.multi_reduction <maximumf>, %153, %cst_59 [1] : vector<16x16xf32> to vector<16xf32>
    %155 = vector.shape_cast %154 : vector<16xf32> to vector<16x1xf32>
    %156 = vector.broadcast %155 : vector<16x1xf32> to vector<16x16xf32>
    %157 = arith.subf %153, %156 : vector<16x16xf32>
    %158 = math.exp %157 : vector<16x16xf32>
    %cst_60 = arith.constant dense<0.000000e+00> : vector<16xf32>
    %159 = vector.multi_reduction <add>, %158, %cst_60 [1] : vector<16x16xf32> to vector<16xf32>
    %160 = vector.shape_cast %159 : vector<16xf32> to vector<16x1xf32>
    %161 = arith.truncf %158 : vector<16x16xf32> to vector<16x16xbf16>
    %cst_61 = arith.constant dense<0.000000e+00> : vector<16x8xf32>
    %162 = tpu.matmul %161, %150, %cst_61 {dimension_numbers = #tpu.dot_dimension_numbers<[1], [0], [0], [1], [0, 0, 1, 1], [], []>} : vector<16x16xbf16>, vector<16x8xbf16>, vector<16x8xf32> -> vector<16x8xf32>
    %163 = tpu.reciprocal %160 {approx = true} : vector<16x1xf32> -> vector<16x1xf32>
    %164 = vector.broadcast %163 : vector<16x1xf32> to vector<16x8xf32>
    %165 = arith.mulf %162, %164 : vector<16x8xf32>
    %166 = arith.truncf %165 : vector<16x8xf32> to vector<16x8xbf16>
    %167 = vector.extract_strided_slice %126 {offsets = [8, 0], sizes = [8, 32], strides = [1, 1]} : vector<32x32xbf16> to vector<8x32xbf16>
    %cst_62 = arith.constant dense<0.000000e+00> : vector<16x32xf32>
    %168 = tpu.matmul %166, %167, %cst_62 {dimension_numbers = #tpu.dot_dimension_numbers<[1], [0], [0], [1], [0, 0, 1, 1], [], []>} : vector<16x8xbf16>, vector<8x32xbf16>, vector<16x32xf32> -> vector<16x32xf32>
    %169 = arith.addf %147, %168 : vector<16x32xf32>
    %170 = vector.extract_strided_slice %25 {offsets = [0, 16], sizes = [16, 8], strides = [1, 1]} : vector<16x32xbf16> to vector<16x8xbf16>
    %171 = vector.extract_strided_slice %29 {offsets = [0, 16], sizes = [16, 8], strides = [1, 1]} : vector<16x32xbf16> to vector<16x8xbf16>
    %172 = vector.extract_strided_slice %33 {offsets = [0, 16], sizes = [16, 8], strides = [1, 1]} : vector<16x32xbf16> to vector<16x8xbf16>
    %cst_63 = arith.constant dense<0.000000e+00> : vector<16x16xf32>
    %173 = tpu.matmul %170, %171, %cst_63 {dimension_numbers = #tpu.dot_dimension_numbers<[1], [1], [0], [0], [0, 0, 1, 0], [], []>} : vector<16x8xbf16>, vector<16x8xbf16>, vector<16x16xf32> -> vector<16x16xf32>
    %cst_64 = arith.constant 0.353553385 : f32
    %174 = vector.broadcast %cst_64 : f32 to vector<16x16xf32>
    %175 = arith.mulf %173, %174 : vector<16x16xf32>
    %cst_65 = arith.constant dense<0xFF800000> : vector<16xf32>
    %176 = vector.multi_reduction <maximumf>, %175, %cst_65 [1] : vector<16x16xf32> to vector<16xf32>
    %177 = vector.shape_cast %176 : vector<16xf32> to vector<16x1xf32>
    %178 = vector.broadcast %177 : vector<16x1xf32> to vector<16x16xf32>
    %179 = arith.subf %175, %178 : vector<16x16xf32>
    %180 = math.exp %179 : vector<16x16xf32>
    %cst_66 = arith.constant dense<0.000000e+00> : vector<16xf32>
    %181 = vector.multi_reduction <add>, %180, %cst_66 [1] : vector<16x16xf32> to vector<16xf32>
    %182 = vector.shape_cast %181 : vector<16xf32> to vector<16x1xf32>
    %183 = arith.truncf %180 : vector<16x16xf32> to vector<16x16xbf16>
    %cst_67 = arith.constant dense<0.000000e+00> : vector<16x8xf32>
    %184 = tpu.matmul %183, %172, %cst_67 {dimension_numbers = #tpu.dot_dimension_numbers<[1], [0], [0], [1], [0, 0, 1, 1], [], []>} : vector<16x16xbf16>, vector<16x8xbf16>, vector<16x8xf32> -> vector<16x8xf32>
    %185 = tpu.reciprocal %182 {approx = true} : vector<16x1xf32> -> vector<16x1xf32>
    %186 = vector.broadcast %185 : vector<16x1xf32> to vector<16x8xf32>
    %187 = arith.mulf %184, %186 : vector<16x8xf32>
    %188 = arith.truncf %187 : vector<16x8xf32> to vector<16x8xbf16>
    %189 = vector.extract_strided_slice %126 {offsets = [16, 0], sizes = [8, 32], strides = [1, 1]} : vector<32x32xbf16> to vector<8x32xbf16>
    %cst_68 = arith.constant dense<0.000000e+00> : vector<16x32xf32>
    %190 = tpu.matmul %188, %189, %cst_68 {dimension_numbers = #tpu.dot_dimension_numbers<[1], [0], [0], [1], [0, 0, 1, 1], [], []>} : vector<16x8xbf16>, vector<8x32xbf16>, vector<16x32xf32> -> vector<16x32xf32>
    %191 = arith.addf %169, %190 : vector<16x32xf32>
    %192 = vector.extract_strided_slice %25 {offsets = [0, 24], sizes = [16, 8], strides = [1, 1]} : vector<16x32xbf16> to vector<16x8xbf16>
    %193 = vector.extract_strided_slice %29 {offsets = [0, 24], sizes = [16, 8], strides = [1, 1]} : vector<16x32xbf16> to vector<16x8xbf16>
    %194 = vector.extract_strided_slice %33 {offsets = [0, 24], sizes = [16, 8], strides = [1, 1]} : vector<16x32xbf16> to vector<16x8xbf16>
    %cst_69 = arith.constant dense<0.000000e+00> : vector<16x16xf32>
    %195 = tpu.matmul %192, %193, %cst_69 {dimension_numbers = #tpu.dot_dimension_numbers<[1], [1], [0], [0], [0, 0, 1, 0], [], []>} : vector<16x8xbf16>, vector<16x8xbf16>, vector<16x16xf32> -> vector<16x16xf32>
    %cst_70 = arith.constant 0.353553385 : f32
    %196 = vector.broadcast %cst_70 : f32 to vector<16x16xf32>
    %197 = arith.mulf %195, %196 : vector<16x16xf32>
    %cst_71 = arith.constant dense<0xFF800000> : vector<16xf32>
    %198 = vector.multi_reduction <maximumf>, %197, %cst_71 [1] : vector<16x16xf32> to vector<16xf32>
    %199 = vector.shape_cast %198 : vector<16xf32> to vector<16x1xf32>
    %200 = vector.broadcast %199 : vector<16x1xf32> to vector<16x16xf32>
    %201 = arith.subf %197, %200 : vector<16x16xf32>
    %202 = math.exp %201 : vector<16x16xf32>
    %cst_72 = arith.constant dense<0.000000e+00> : vector<16xf32>
    %203 = vector.multi_reduction <add>, %202, %cst_72 [1] : vector<16x16xf32> to vector<16xf32>
    %204 = vector.shape_cast %203 : vector<16xf32> to vector<16x1xf32>
    %205 = arith.truncf %202 : vector<16x16xf32> to vector<16x16xbf16>
    %cst_73 = arith.constant dense<0.000000e+00> : vector<16x8xf32>
    %206 = tpu.matmul %205, %194, %cst_73 {dimension_numbers = #tpu.dot_dimension_numbers<[1], [0], [0], [1], [0, 0, 1, 1], [], []>} : vector<16x16xbf16>, vector<16x8xbf16>, vector<16x8xf32> -> vector<16x8xf32>
    %207 = tpu.reciprocal %204 {approx = true} : vector<16x1xf32> -> vector<16x1xf32>
    %208 = vector.broadcast %207 : vector<16x1xf32> to vector<16x8xf32>
    %209 = arith.mulf %206, %208 : vector<16x8xf32>
    %210 = arith.truncf %209 : vector<16x8xf32> to vector<16x8xbf16>
    %211 = vector.extract_strided_slice %126 {offsets = [24, 0], sizes = [8, 32], strides = [1, 1]} : vector<32x32xbf16> to vector<8x32xbf16>
    %cst_74 = arith.constant dense<0.000000e+00> : vector<16x32xf32>
    %212 = tpu.matmul %210, %211, %cst_74 {dimension_numbers = #tpu.dot_dimension_numbers<[1], [0], [0], [1], [0, 0, 1, 1], [], []>} : vector<16x8xbf16>, vector<8x32xbf16>, vector<16x32xf32> -> vector<16x32xf32>
    %213 = arith.addf %191, %212 : vector<16x32xf32>
    %214 = arith.addf %124, %213 : vector<16x32xf32>
    %c0_75 = arith.constant 0 : index
    %c0_76 = arith.constant 0 : index
    %215 = vector.load %arg11[%c0_75, %c0_76] : memref<1x32xf32, #tpu.memory_space<vmem>>, vector<1x32xf32>
    %216 = vector.broadcast %215 : vector<1x32xf32> to vector<16x32xf32>
    %217 = arith.addf %214, %216 : vector<16x32xf32>
    %c2 = arith.constant 2 : index
    %c0_77 = arith.constant 0 : index
    %c0_78 = arith.constant 0 : index
    %218 = vector.load %arg10[%c2, %c0_77, %c0_78] : memref<4x32x32xbf16, #tpu.memory_space<vmem>>, vector<1x32x32xbf16>
    %219 = vector.shape_cast %218 : vector<1x32x32xbf16> to vector<32x32xbf16>
    %220 = vector.extract_strided_slice %26 {offsets = [0, 0], sizes = [16, 8], strides = [1, 1]} : vector<16x32xbf16> to vector<16x8xbf16>
    %221 = vector.extract_strided_slice %30 {offsets = [0, 0], sizes = [16, 8], strides = [1, 1]} : vector<16x32xbf16> to vector<16x8xbf16>
    %222 = vector.extract_strided_slice %34 {offsets = [0, 0], sizes = [16, 8], strides = [1, 1]} : vector<16x32xbf16> to vector<16x8xbf16>
    %cst_79 = arith.constant dense<0.000000e+00> : vector<16x16xf32>
    %223 = tpu.matmul %220, %221, %cst_79 {dimension_numbers = #tpu.dot_dimension_numbers<[1], [1], [0], [0], [0, 0, 1, 0], [], []>} : vector<16x8xbf16>, vector<16x8xbf16>, vector<16x16xf32> -> vector<16x16xf32>
    %cst_80 = arith.constant 0.353553385 : f32
    %224 = vector.broadcast %cst_80 : f32 to vector<16x16xf32>
    %225 = arith.mulf %223, %224 : vector<16x16xf32>
    %cst_81 = arith.constant dense<0xFF800000> : vector<16xf32>
    %226 = vector.multi_reduction <maximumf>, %225, %cst_81 [1] : vector<16x16xf32> to vector<16xf32>
    %227 = vector.shape_cast %226 : vector<16xf32> to vector<16x1xf32>
    %228 = vector.broadcast %227 : vector<16x1xf32> to vector<16x16xf32>
    %229 = arith.subf %225, %228 : vector<16x16xf32>
    %230 = math.exp %229 : vector<16x16xf32>
    %cst_82 = arith.constant dense<0.000000e+00> : vector<16xf32>
    %231 = vector.multi_reduction <add>, %230, %cst_82 [1] : vector<16x16xf32> to vector<16xf32>
    %232 = vector.shape_cast %231 : vector<16xf32> to vector<16x1xf32>
    %233 = arith.truncf %230 : vector<16x16xf32> to vector<16x16xbf16>
    %cst_83 = arith.constant dense<0.000000e+00> : vector<16x8xf32>
    %234 = tpu.matmul %233, %222, %cst_83 {dimension_numbers = #tpu.dot_dimension_numbers<[1], [0], [0], [1], [0, 0, 1, 1], [], []>} : vector<16x16xbf16>, vector<16x8xbf16>, vector<16x8xf32> -> vector<16x8xf32>
    %235 = tpu.reciprocal %232 {approx = true} : vector<16x1xf32> -> vector<16x1xf32>
    %236 = vector.broadcast %235 : vector<16x1xf32> to vector<16x8xf32>
    %237 = arith.mulf %234, %236 : vector<16x8xf32>
    %238 = arith.truncf %237 : vector<16x8xf32> to vector<16x8xbf16>
    %239 = vector.extract_strided_slice %219 {offsets = [0, 0], sizes = [8, 32], strides = [1, 1]} : vector<32x32xbf16> to vector<8x32xbf16>
    %cst_84 = arith.constant dense<0.000000e+00> : vector<16x32xf32>
    %240 = tpu.matmul %238, %239, %cst_84 {dimension_numbers = #tpu.dot_dimension_numbers<[1], [0], [0], [1], [0, 0, 1, 1], [], []>} : vector<16x8xbf16>, vector<8x32xbf16>, vector<16x32xf32> -> vector<16x32xf32>
    %241 = vector.extract_strided_slice %26 {offsets = [0, 8], sizes = [16, 8], strides = [1, 1]} : vector<16x32xbf16> to vector<16x8xbf16>
    %242 = vector.extract_strided_slice %30 {offsets = [0, 8], sizes = [16, 8], strides = [1, 1]} : vector<16x32xbf16> to vector<16x8xbf16>
    %243 = vector.extract_strided_slice %34 {offsets = [0, 8], sizes = [16, 8], strides = [1, 1]} : vector<16x32xbf16> to vector<16x8xbf16>
    %cst_85 = arith.constant dense<0.000000e+00> : vector<16x16xf32>
    %244 = tpu.matmul %241, %242, %cst_85 {dimension_numbers = #tpu.dot_dimension_numbers<[1], [1], [0], [0], [0, 0, 1, 0], [], []>} : vector<16x8xbf16>, vector<16x8xbf16>, vector<16x16xf32> -> vector<16x16xf32>
    %cst_86 = arith.constant 0.353553385 : f32
    %245 = vector.broadcast %cst_86 : f32 to vector<16x16xf32>
    %246 = arith.mulf %244, %245 : vector<16x16xf32>
    %cst_87 = arith.constant dense<0xFF800000> : vector<16xf32>
    %247 = vector.multi_reduction <maximumf>, %246, %cst_87 [1] : vector<16x16xf32> to vector<16xf32>
    %248 = vector.shape_cast %247 : vector<16xf32> to vector<16x1xf32>
    %249 = vector.broadcast %248 : vector<16x1xf32> to vector<16x16xf32>
    %250 = arith.subf %246, %249 : vector<16x16xf32>
    %251 = math.exp %250 : vector<16x16xf32>
    %cst_88 = arith.constant dense<0.000000e+00> : vector<16xf32>
    %252 = vector.multi_reduction <add>, %251, %cst_88 [1] : vector<16x16xf32> to vector<16xf32>
    %253 = vector.shape_cast %252 : vector<16xf32> to vector<16x1xf32>
    %254 = arith.truncf %251 : vector<16x16xf32> to vector<16x16xbf16>
    %cst_89 = arith.constant dense<0.000000e+00> : vector<16x8xf32>
    %255 = tpu.matmul %254, %243, %cst_89 {dimension_numbers = #tpu.dot_dimension_numbers<[1], [0], [0], [1], [0, 0, 1, 1], [], []>} : vector<16x16xbf16>, vector<16x8xbf16>, vector<16x8xf32> -> vector<16x8xf32>
    %256 = tpu.reciprocal %253 {approx = true} : vector<16x1xf32> -> vector<16x1xf32>
    %257 = vector.broadcast %256 : vector<16x1xf32> to vector<16x8xf32>
    %258 = arith.mulf %255, %257 : vector<16x8xf32>
    %259 = arith.truncf %258 : vector<16x8xf32> to vector<16x8xbf16>
    %260 = vector.extract_strided_slice %219 {offsets = [8, 0], sizes = [8, 32], strides = [1, 1]} : vector<32x32xbf16> to vector<8x32xbf16>
    %cst_90 = arith.constant dense<0.000000e+00> : vector<16x32xf32>
    %261 = tpu.matmul %259, %260, %cst_90 {dimension_numbers = #tpu.dot_dimension_numbers<[1], [0], [0], [1], [0, 0, 1, 1], [], []>} : vector<16x8xbf16>, vector<8x32xbf16>, vector<16x32xf32> -> vector<16x32xf32>
    %262 = arith.addf %240, %261 : vector<16x32xf32>
    %263 = vector.extract_strided_slice %26 {offsets = [0, 16], sizes = [16, 8], strides = [1, 1]} : vector<16x32xbf16> to vector<16x8xbf16>
    %264 = vector.extract_strided_slice %30 {offsets = [0, 16], sizes = [16, 8], strides = [1, 1]} : vector<16x32xbf16> to vector<16x8xbf16>
    %265 = vector.extract_strided_slice %34 {offsets = [0, 16], sizes = [16, 8], strides = [1, 1]} : vector<16x32xbf16> to vector<16x8xbf16>
    %cst_91 = arith.constant dense<0.000000e+00> : vector<16x16xf32>
    %266 = tpu.matmul %263, %264, %cst_91 {dimension_numbers = #tpu.dot_dimension_numbers<[1], [1], [0], [0], [0, 0, 1, 0], [], []>} : vector<16x8xbf16>, vector<16x8xbf16>, vector<16x16xf32> -> vector<16x16xf32>
    %cst_92 = arith.constant 0.353553385 : f32
    %267 = vector.broadcast %cst_92 : f32 to vector<16x16xf32>
    %268 = arith.mulf %266, %267 : vector<16x16xf32>
    %cst_93 = arith.constant dense<0xFF800000> : vector<16xf32>
    %269 = vector.multi_reduction <maximumf>, %268, %cst_93 [1] : vector<16x16xf32> to vector<16xf32>
    %270 = vector.shape_cast %269 : vector<16xf32> to vector<16x1xf32>
    %271 = vector.broadcast %270 : vector<16x1xf32> to vector<16x16xf32>
    %272 = arith.subf %268, %271 : vector<16x16xf32>
    %273 = math.exp %272 : vector<16x16xf32>
    %cst_94 = arith.constant dense<0.000000e+00> : vector<16xf32>
    %274 = vector.multi_reduction <add>, %273, %cst_94 [1] : vector<16x16xf32> to vector<16xf32>
    %275 = vector.shape_cast %274 : vector<16xf32> to vector<16x1xf32>
    %276 = arith.truncf %273 : vector<16x16xf32> to vector<16x16xbf16>
    %cst_95 = arith.constant dense<0.000000e+00> : vector<16x8xf32>
    %277 = tpu.matmul %276, %265, %cst_95 {dimension_numbers = #tpu.dot_dimension_numbers<[1], [0], [0], [1], [0, 0, 1, 1], [], []>} : vector<16x16xbf16>, vector<16x8xbf16>, vector<16x8xf32> -> vector<16x8xf32>
    %278 = tpu.reciprocal %275 {approx = true} : vector<16x1xf32> -> vector<16x1xf32>
    %279 = vector.broadcast %278 : vector<16x1xf32> to vector<16x8xf32>
    %280 = arith.mulf %277, %279 : vector<16x8xf32>
    %281 = arith.truncf %280 : vector<16x8xf32> to vector<16x8xbf16>
    %282 = vector.extract_strided_slice %219 {offsets = [16, 0], sizes = [8, 32], strides = [1, 1]} : vector<32x32xbf16> to vector<8x32xbf16>
    %cst_96 = arith.constant dense<0.000000e+00> : vector<16x32xf32>
    %283 = tpu.matmul %281, %282, %cst_96 {dimension_numbers = #tpu.dot_dimension_numbers<[1], [0], [0], [1], [0, 0, 1, 1], [], []>} : vector<16x8xbf16>, vector<8x32xbf16>, vector<16x32xf32> -> vector<16x32xf32>
    %284 = arith.addf %262, %283 : vector<16x32xf32>
    %285 = vector.extract_strided_slice %26 {offsets = [0, 24], sizes = [16, 8], strides = [1, 1]} : vector<16x32xbf16> to vector<16x8xbf16>
    %286 = vector.extract_strided_slice %30 {offsets = [0, 24], sizes = [16, 8], strides = [1, 1]} : vector<16x32xbf16> to vector<16x8xbf16>
    %287 = vector.extract_strided_slice %34 {offsets = [0, 24], sizes = [16, 8], strides = [1, 1]} : vector<16x32xbf16> to vector<16x8xbf16>
    %cst_97 = arith.constant dense<0.000000e+00> : vector<16x16xf32>
    %288 = tpu.matmul %285, %286, %cst_97 {dimension_numbers = #tpu.dot_dimension_numbers<[1], [1], [0], [0], [0, 0, 1, 0], [], []>} : vector<16x8xbf16>, vector<16x8xbf16>, vector<16x16xf32> -> vector<16x16xf32>
    %cst_98 = arith.constant 0.353553385 : f32
    %289 = vector.broadcast %cst_98 : f32 to vector<16x16xf32>
    %290 = arith.mulf %288, %289 : vector<16x16xf32>
    %cst_99 = arith.constant dense<0xFF800000> : vector<16xf32>
    %291 = vector.multi_reduction <maximumf>, %290, %cst_99 [1] : vector<16x16xf32> to vector<16xf32>
    %292 = vector.shape_cast %291 : vector<16xf32> to vector<16x1xf32>
    %293 = vector.broadcast %292 : vector<16x1xf32> to vector<16x16xf32>
    %294 = arith.subf %290, %293 : vector<16x16xf32>
    %295 = math.exp %294 : vector<16x16xf32>
    %cst_100 = arith.constant dense<0.000000e+00> : vector<16xf32>
    %296 = vector.multi_reduction <add>, %295, %cst_100 [1] : vector<16x16xf32> to vector<16xf32>
    %297 = vector.shape_cast %296 : vector<16xf32> to vector<16x1xf32>
    %298 = arith.truncf %295 : vector<16x16xf32> to vector<16x16xbf16>
    %cst_101 = arith.constant dense<0.000000e+00> : vector<16x8xf32>
    %299 = tpu.matmul %298, %287, %cst_101 {dimension_numbers = #tpu.dot_dimension_numbers<[1], [0], [0], [1], [0, 0, 1, 1], [], []>} : vector<16x16xbf16>, vector<16x8xbf16>, vector<16x8xf32> -> vector<16x8xf32>
    %300 = tpu.reciprocal %297 {approx = true} : vector<16x1xf32> -> vector<16x1xf32>
    %301 = vector.broadcast %300 : vector<16x1xf32> to vector<16x8xf32>
    %302 = arith.mulf %299, %301 : vector<16x8xf32>
    %303 = arith.truncf %302 : vector<16x8xf32> to vector<16x8xbf16>
    %304 = vector.extract_strided_slice %219 {offsets = [24, 0], sizes = [8, 32], strides = [1, 1]} : vector<32x32xbf16> to vector<8x32xbf16>
    %cst_102 = arith.constant dense<0.000000e+00> : vector<16x32xf32>
    %305 = tpu.matmul %303, %304, %cst_102 {dimension_numbers = #tpu.dot_dimension_numbers<[1], [0], [0], [1], [0, 0, 1, 1], [], []>} : vector<16x8xbf16>, vector<8x32xbf16>, vector<16x32xf32> -> vector<16x32xf32>
    %306 = arith.addf %284, %305 : vector<16x32xf32>
    %c3 = arith.constant 3 : index
    %c0_103 = arith.constant 0 : index
    %c0_104 = arith.constant 0 : index
    %307 = vector.load %arg10[%c3, %c0_103, %c0_104] : memref<4x32x32xbf16, #tpu.memory_space<vmem>>, vector<1x32x32xbf16>
    %308 = vector.shape_cast %307 : vector<1x32x32xbf16> to vector<32x32xbf16>
    %309 = vector.extract_strided_slice %27 {offsets = [0, 0], sizes = [16, 8], strides = [1, 1]} : vector<16x32xbf16> to vector<16x8xbf16>
    %310 = vector.extract_strided_slice %31 {offsets = [0, 0], sizes = [16, 8], strides = [1, 1]} : vector<16x32xbf16> to vector<16x8xbf16>
    %311 = vector.extract_strided_slice %35 {offsets = [0, 0], sizes = [16, 8], strides = [1, 1]} : vector<16x32xbf16> to vector<16x8xbf16>
    %cst_105 = arith.constant dense<0.000000e+00> : vector<16x16xf32>
    %312 = tpu.matmul %309, %310, %cst_105 {dimension_numbers = #tpu.dot_dimension_numbers<[1], [1], [0], [0], [0, 0, 1, 0], [], []>} : vector<16x8xbf16>, vector<16x8xbf16>, vector<16x16xf32> -> vector<16x16xf32>
    %cst_106 = arith.constant 0.353553385 : f32
    %313 = vector.broadcast %cst_106 : f32 to vector<16x16xf32>
    %314 = arith.mulf %312, %313 : vector<16x16xf32>
    %cst_107 = arith.constant dense<0xFF800000> : vector<16xf32>
    %315 = vector.multi_reduction <maximumf>, %314, %cst_107 [1] : vector<16x16xf32> to vector<16xf32>
    %316 = vector.shape_cast %315 : vector<16xf32> to vector<16x1xf32>
    %317 = vector.broadcast %316 : vector<16x1xf32> to vector<16x16xf32>
    %318 = arith.subf %314, %317 : vector<16x16xf32>
    %319 = math.exp %318 : vector<16x16xf32>
    %cst_108 = arith.constant dense<0.000000e+00> : vector<16xf32>
    %320 = vector.multi_reduction <add>, %319, %cst_108 [1] : vector<16x16xf32> to vector<16xf32>
    %321 = vector.shape_cast %320 : vector<16xf32> to vector<16x1xf32>
    %322 = arith.truncf %319 : vector<16x16xf32> to vector<16x16xbf16>
    %cst_109 = arith.constant dense<0.000000e+00> : vector<16x8xf32>
    %323 = tpu.matmul %322, %311, %cst_109 {dimension_numbers = #tpu.dot_dimension_numbers<[1], [0], [0], [1], [0, 0, 1, 1], [], []>} : vector<16x16xbf16>, vector<16x8xbf16>, vector<16x8xf32> -> vector<16x8xf32>
    %324 = tpu.reciprocal %321 {approx = true} : vector<16x1xf32> -> vector<16x1xf32>
    %325 = vector.broadcast %324 : vector<16x1xf32> to vector<16x8xf32>
    %326 = arith.mulf %323, %325 : vector<16x8xf32>
    %327 = arith.truncf %326 : vector<16x8xf32> to vector<16x8xbf16>
    %328 = vector.extract_strided_slice %308 {offsets = [0, 0], sizes = [8, 32], strides = [1, 1]} : vector<32x32xbf16> to vector<8x32xbf16>
    %cst_110 = arith.constant dense<0.000000e+00> : vector<16x32xf32>
    %329 = tpu.matmul %327, %328, %cst_110 {dimension_numbers = #tpu.dot_dimension_numbers<[1], [0], [0], [1], [0, 0, 1, 1], [], []>} : vector<16x8xbf16>, vector<8x32xbf16>, vector<16x32xf32> -> vector<16x32xf32>
    %330 = vector.extract_strided_slice %27 {offsets = [0, 8], sizes = [16, 8], strides = [1, 1]} : vector<16x32xbf16> to vector<16x8xbf16>
    %331 = vector.extract_strided_slice %31 {offsets = [0, 8], sizes = [16, 8], strides = [1, 1]} : vector<16x32xbf16> to vector<16x8xbf16>
    %332 = vector.extract_strided_slice %35 {offsets = [0, 8], sizes = [16, 8], strides = [1, 1]} : vector<16x32xbf16> to vector<16x8xbf16>
    %cst_111 = arith.constant dense<0.000000e+00> : vector<16x16xf32>
    %333 = tpu.matmul %330, %331, %cst_111 {dimension_numbers = #tpu.dot_dimension_numbers<[1], [1], [0], [0], [0, 0, 1, 0], [], []>} : vector<16x8xbf16>, vector<16x8xbf16>, vector<16x16xf32> -> vector<16x16xf32>
    %cst_112 = arith.constant 0.353553385 : f32
    %334 = vector.broadcast %cst_112 : f32 to vector<16x16xf32>
    %335 = arith.mulf %333, %334 : vector<16x16xf32>
    %cst_113 = arith.constant dense<0xFF800000> : vector<16xf32>
    %336 = vector.multi_reduction <maximumf>, %335, %cst_113 [1] : vector<16x16xf32> to vector<16xf32>
    %337 = vector.shape_cast %336 : vector<16xf32> to vector<16x1xf32>
    %338 = vector.broadcast %337 : vector<16x1xf32> to vector<16x16xf32>
    %339 = arith.subf %335, %338 : vector<16x16xf32>
    %340 = math.exp %339 : vector<16x16xf32>
    %cst_114 = arith.constant dense<0.000000e+00> : vector<16xf32>
    %341 = vector.multi_reduction <add>, %340, %cst_114 [1] : vector<16x16xf32> to vector<16xf32>
    %342 = vector.shape_cast %341 : vector<16xf32> to vector<16x1xf32>
    %343 = arith.truncf %340 : vector<16x16xf32> to vector<16x16xbf16>
    %cst_115 = arith.constant dense<0.000000e+00> : vector<16x8xf32>
    %344 = tpu.matmul %343, %332, %cst_115 {dimension_numbers = #tpu.dot_dimension_numbers<[1], [0], [0], [1], [0, 0, 1, 1], [], []>} : vector<16x16xbf16>, vector<16x8xbf16>, vector<16x8xf32> -> vector<16x8xf32>
    %345 = tpu.reciprocal %342 {approx = true} : vector<16x1xf32> -> vector<16x1xf32>
    %346 = vector.broadcast %345 : vector<16x1xf32> to vector<16x8xf32>
    %347 = arith.mulf %344, %346 : vector<16x8xf32>
    %348 = arith.truncf %347 : vector<16x8xf32> to vector<16x8xbf16>
    %349 = vector.extract_strided_slice %308 {offsets = [8, 0], sizes = [8, 32], strides = [1, 1]} : vector<32x32xbf16> to vector<8x32xbf16>
    %cst_116 = arith.constant dense<0.000000e+00> : vector<16x32xf32>
    %350 = tpu.matmul %348, %349, %cst_116 {dimension_numbers = #tpu.dot_dimension_numbers<[1], [0], [0], [1], [0, 0, 1, 1], [], []>} : vector<16x8xbf16>, vector<8x32xbf16>, vector<16x32xf32> -> vector<16x32xf32>
    %351 = arith.addf %329, %350 : vector<16x32xf32>
    %352 = vector.extract_strided_slice %27 {offsets = [0, 16], sizes = [16, 8], strides = [1, 1]} : vector<16x32xbf16> to vector<16x8xbf16>
    %353 = vector.extract_strided_slice %31 {offsets = [0, 16], sizes = [16, 8], strides = [1, 1]} : vector<16x32xbf16> to vector<16x8xbf16>
    %354 = vector.extract_strided_slice %35 {offsets = [0, 16], sizes = [16, 8], strides = [1, 1]} : vector<16x32xbf16> to vector<16x8xbf16>
    %cst_117 = arith.constant dense<0.000000e+00> : vector<16x16xf32>
    %355 = tpu.matmul %352, %353, %cst_117 {dimension_numbers = #tpu.dot_dimension_numbers<[1], [1], [0], [0], [0, 0, 1, 0], [], []>} : vector<16x8xbf16>, vector<16x8xbf16>, vector<16x16xf32> -> vector<16x16xf32>
    %cst_118 = arith.constant 0.353553385 : f32
    %356 = vector.broadcast %cst_118 : f32 to vector<16x16xf32>
    %357 = arith.mulf %355, %356 : vector<16x16xf32>
    %cst_119 = arith.constant dense<0xFF800000> : vector<16xf32>
    %358 = vector.multi_reduction <maximumf>, %357, %cst_119 [1] : vector<16x16xf32> to vector<16xf32>
    %359 = vector.shape_cast %358 : vector<16xf32> to vector<16x1xf32>
    %360 = vector.broadcast %359 : vector<16x1xf32> to vector<16x16xf32>
    %361 = arith.subf %357, %360 : vector<16x16xf32>
    %362 = math.exp %361 : vector<16x16xf32>
    %cst_120 = arith.constant dense<0.000000e+00> : vector<16xf32>
    %363 = vector.multi_reduction <add>, %362, %cst_120 [1] : vector<16x16xf32> to vector<16xf32>
    %364 = vector.shape_cast %363 : vector<16xf32> to vector<16x1xf32>
    %365 = arith.truncf %362 : vector<16x16xf32> to vector<16x16xbf16>
    %cst_121 = arith.constant dense<0.000000e+00> : vector<16x8xf32>
    %366 = tpu.matmul %365, %354, %cst_121 {dimension_numbers = #tpu.dot_dimension_numbers<[1], [0], [0], [1], [0, 0, 1, 1], [], []>} : vector<16x16xbf16>, vector<16x8xbf16>, vector<16x8xf32> -> vector<16x8xf32>
    %367 = tpu.reciprocal %364 {approx = true} : vector<16x1xf32> -> vector<16x1xf32>
    %368 = vector.broadcast %367 : vector<16x1xf32> to vector<16x8xf32>
    %369 = arith.mulf %366, %368 : vector<16x8xf32>
    %370 = arith.truncf %369 : vector<16x8xf32> to vector<16x8xbf16>
    %371 = vector.extract_strided_slice %308 {offsets = [16, 0], sizes = [8, 32], strides = [1, 1]} : vector<32x32xbf16> to vector<8x32xbf16>
    %cst_122 = arith.constant dense<0.000000e+00> : vector<16x32xf32>
    %372 = tpu.matmul %370, %371, %cst_122 {dimension_numbers = #tpu.dot_dimension_numbers<[1], [0], [0], [1], [0, 0, 1, 1], [], []>} : vector<16x8xbf16>, vector<8x32xbf16>, vector<16x32xf32> -> vector<16x32xf32>
    %373 = arith.addf %351, %372 : vector<16x32xf32>
    %374 = vector.extract_strided_slice %27 {offsets = [0, 24], sizes = [16, 8], strides = [1, 1]} : vector<16x32xbf16> to vector<16x8xbf16>
    %375 = vector.extract_strided_slice %31 {offsets = [0, 24], sizes = [16, 8], strides = [1, 1]} : vector<16x32xbf16> to vector<16x8xbf16>
    %376 = vector.extract_strided_slice %35 {offsets = [0, 24], sizes = [16, 8], strides = [1, 1]} : vector<16x32xbf16> to vector<16x8xbf16>
    %cst_123 = arith.constant dense<0.000000e+00> : vector<16x16xf32>
    %377 = tpu.matmul %374, %375, %cst_123 {dimension_numbers = #tpu.dot_dimension_numbers<[1], [1], [0], [0], [0, 0, 1, 0], [], []>} : vector<16x8xbf16>, vector<16x8xbf16>, vector<16x16xf32> -> vector<16x16xf32>
    %cst_124 = arith.constant 0.353553385 : f32
    %378 = vector.broadcast %cst_124 : f32 to vector<16x16xf32>
    %379 = arith.mulf %377, %378 : vector<16x16xf32>
    %cst_125 = arith.constant dense<0xFF800000> : vector<16xf32>
    %380 = vector.multi_reduction <maximumf>, %379, %cst_125 [1] : vector<16x16xf32> to vector<16xf32>
    %381 = vector.shape_cast %380 : vector<16xf32> to vector<16x1xf32>
    %382 = vector.broadcast %381 : vector<16x1xf32> to vector<16x16xf32>
    %383 = arith.subf %379, %382 : vector<16x16xf32>
    %384 = math.exp %383 : vector<16x16xf32>
    %cst_126 = arith.constant dense<0.000000e+00> : vector<16xf32>
    %385 = vector.multi_reduction <add>, %384, %cst_126 [1] : vector<16x16xf32> to vector<16xf32>
    %386 = vector.shape_cast %385 : vector<16xf32> to vector<16x1xf32>
    %387 = arith.truncf %384 : vector<16x16xf32> to vector<16x16xbf16>
    %cst_127 = arith.constant dense<0.000000e+00> : vector<16x8xf32>
    %388 = tpu.matmul %387, %376, %cst_127 {dimension_numbers = #tpu.dot_dimension_numbers<[1], [0], [0], [1], [0, 0, 1, 1], [], []>} : vector<16x16xbf16>, vector<16x8xbf16>, vector<16x8xf32> -> vector<16x8xf32>
    %389 = tpu.reciprocal %386 {approx = true} : vector<16x1xf32> -> vector<16x1xf32>
    %390 = vector.broadcast %389 : vector<16x1xf32> to vector<16x8xf32>
    %391 = arith.mulf %388, %390 : vector<16x8xf32>
    %392 = arith.truncf %391 : vector<16x8xf32> to vector<16x8xbf16>
    %393 = vector.extract_strided_slice %308 {offsets = [24, 0], sizes = [8, 32], strides = [1, 1]} : vector<32x32xbf16> to vector<8x32xbf16>
    %cst_128 = arith.constant dense<0.000000e+00> : vector<16x32xf32>
    %394 = tpu.matmul %392, %393, %cst_128 {dimension_numbers = #tpu.dot_dimension_numbers<[1], [0], [0], [1], [0, 0, 1, 1], [], []>} : vector<16x8xbf16>, vector<8x32xbf16>, vector<16x32xf32> -> vector<16x32xf32>
    %395 = arith.addf %373, %394 : vector<16x32xf32>
    %396 = arith.addf %306, %395 : vector<16x32xf32>
    %c0_129 = arith.constant 0 : index
    %c0_130 = arith.constant 0 : index
    %397 = vector.load %arg12[%c0_129, %c0_130] : memref<1x32xf32, #tpu.memory_space<vmem>>, vector<1x32xf32>
    %398 = vector.broadcast %397 : vector<1x32xf32> to vector<16x32xf32>
    %399 = arith.addf %396, %398 : vector<16x32xf32>
    %c0_131 = arith.constant 0 : index
    %c0_132 = arith.constant 0 : index
    %c0_133 = arith.constant 0 : index
    %400 = vector.load %arg13[%c0_131, %c0_132, %c0_133] : memref<1x16x32xf32, #tpu.memory_space<vmem>>, vector<1x16x32xf32>
    %401 = vector.shape_cast %400 : vector<1x16x32xf32> to vector<16x32xf32>
    %402 = vector.shape_cast %217 : vector<16x32xf32> to vector<1x16x32xf32>
    tpu.vector_store %arg13[%c0_131, %c0_132, %c0_133], %402 {strides = array<i32>} : memref<1x16x32xf32, #tpu.memory_space<vmem>>, vector<1x16x32xf32>,
    %c0_134 = arith.constant 0 : index
    %c0_135 = arith.constant 0 : index
    %c0_136 = arith.constant 0 : index
    %403 = vector.load %arg14[%c0_134, %c0_135, %c0_136] : memref<1x16x32xf32, #tpu.memory_space<vmem>>, vector<1x16x32xf32>
    %404 = vector.shape_cast %403 : vector<1x16x32xf32> to vector<16x32xf32>
    %405 = vector.shape_cast %399 : vector<16x32xf32> to vector<1x16x32xf32>
    tpu.vector_store %arg14[%c0_134, %c0_135, %c0_136], %405 {strides = array<i32>} : memref<1x16x32xf32, #tpu.memory_space<vmem>>, vector<1x16x32xf32>,
    return
  }
  func.func @transform_0(%arg0: i32) -> (i32, i32, i32) {
    %c0_i32 = arith.constant 0 : i32
    %c0_i32_0 = arith.constant 0 : i32
    %c0_i32_1 = arith.constant 0 : i32
    return %arg0, %c0_i32, %c0_i32_0 : i32, i32, i32
  }
  func.func @transform_1(%arg0: i32) -> (i32, i32, i32) {
    %c0_i32 = arith.constant 0 : i32
    %c0_i32_0 = arith.constant 0 : i32
    %c0_i32_1 = arith.constant 0 : i32
    return %arg0, %c0_i32, %c0_i32_0 : i32, i32, i32
  }
  func.func @transform_2(%arg0: i32) -> (i32, i32, i32) {
    %c0_i32 = arith.constant 0 : i32
    %c0_i32_0 = arith.constant 0 : i32
    %c0_i32_1 = arith.constant 0 : i32
    return %arg0, %c0_i32, %c0_i32_0 : i32, i32, i32
  }
  func.func @transform_3(%arg0: i32) -> (i32, i32) {
    %c0_i32 = arith.constant 0 : i32
    %c0_i32_0 = arith.constant 0 : i32
    %c0_i32_1 = arith.constant 0 : i32
    return %c0_i32, %c0_i32_0 : i32, i32
  }
  func.func @transform_4(%arg0: i32) -> (i32, i32) {
    %c0_i32 = arith.constant 0 : i32
    %c0_i32_0 = arith.constant 0 : i32
    %c0_i32_1 = arith.constant 0 : i32
    return %c0_i32, %c0_i32_0 : i32, i32
  }
  func.func @transform_5(%arg0: i32) -> (i32, i32) {
    %c0_i32 = arith.constant 0 : i32
    %c0_i32_0 = arith.constant 0 : i32
    %c0_i32_1 = arith.constant 0 : i32
    return %c0_i32, %c0_i32_0 : i32, i32
  }
  func.func @transform_6(%arg0: i32) -> (i32, i32) {
    %c0_i32 = arith.constant 0 : i32
    %c0_i32_0 = arith.constant 0 : i32
    %c0_i32_1 = arith.constant 0 : i32
    return %c0_i32, %c0_i32_0 : i32, i32
  }
  func.func @transform_7(%arg0: i32) -> (i32, i32) {
    %c0_i32 = arith.constant 0 : i32
    %c0_i32_0 = arith.constant 0 : i32
    %c0_i32_1 = arith.constant 0 : i32
    return %c0_i32, %c0_i32_0 : i32, i32
  }
  func.func @transform_8(%arg0: i32) -> (i32, i32) {
    %c0_i32 = arith.constant 0 : i32
    %c0_i32_0 = arith.constant 0 : i32
    %c0_i32_1 = arith.constant 0 : i32
    return %c0_i32, %c0_i32_0 : i32, i32
  }
  func.func @transform_9(%arg0: i32) -> (i32, i32, i32) {
    %c0_i32 = arith.constant 0 : i32
    %c0_i32_0 = arith.constant 0 : i32
    %c0_i32_1 = arith.constant 0 : i32
    %c0_i32_2 = arith.constant 0 : i32
    return %c0_i32, %c0_i32_0, %c0_i32_1 : i32, i32, i32
  }
  func.func @transform_10(%arg0: i32) -> (i32, i32) {
    %c0_i32 = arith.constant 0 : i32
    %c0_i32_0 = arith.constant 0 : i32
    %c0_i32_1 = arith.constant 0 : i32
    return %c0_i32, %c0_i32_0 : i32, i32
  }
  func.func @transform_11(%arg0: i32) -> (i32, i32) {
    %c0_i32 = arith.constant 0 : i32
    %c0_i32_0 = arith.constant 0 : i32
    %c0_i32_1 = arith.constant 0 : i32
    return %c0_i32, %c0_i32_0 : i32, i32
  }
  func.func @transform_12(%arg0: i32) -> (i32, i32, i32) {
    %c0_i32 = arith.constant 0 : i32
    %c0_i32_0 = arith.constant 0 : i32
    %c0_i32_1 = arith.constant 0 : i32
    return %arg0, %c0_i32, %c0_i32_0 : i32, i32, i32
  }
  func.func @transform_13(%arg0: i32) -> (i32, i32, i32) {
    %c0_i32 = arith.constant 0 : i32
    %c0_i32_0 = arith.constant 0 : i32
    %c0_i32_1 = arith.constant 0 : i32
    return %arg0, %c0_i32, %c0_i32_0 : i32, i32, i32
  }
}

</mosaic_0001>

<llo_original>
// kernel: tpu_custom_call.1
$region0: #{tpu_custom_call.1}
  #allocation0 [shape = 'u32[]', space=smem, size = 0x4, offset = 0x4, fixed_abs, tag = 'smem constant byte address 0x4 - core index']
  #allocation1 [shape = 'u32[72,128]{1,0:T(1,128)}', space=vmem, size = 0x9000, scoped, tag = 'internal scratch']
  %s0 = inlined_call_operand.hbm [shape: bf16[2,16,32], index: 0, kind: input, shape index: {}]
  %s1 = inlined_call_operand.hbm [shape: bf16[2,16,32], index: 1, kind: input, shape index: {}]
  %s2 = inlined_call_operand.hbm [shape: bf16[2,16,32], index: 2, kind: input, shape index: {}]
  %s3 = inlined_call_operand.hbm [shape: bf16[32,192], index: 3, kind: input, shape index: {}]
  %s4 = inlined_call_operand.hbm [shape: bf16[32,96], index: 4, kind: input, shape index: {}]
  %s5 = inlined_call_operand.hbm [shape: bf16[32,96], index: 5, kind: input, shape index: {}]
  %s6 = inlined_call_operand.vmem [shape: f32[1,192], index: 6, kind: input, shape index: {}]
  %s7 = inlined_call_operand.vmem [shape: f32[1,96], index: 7, kind: input, shape index: {}]
  %s8 = inlined_call_operand.vmem [shape: f32[1,96], index: 8, kind: input, shape index: {}]
  %s9 = inlined_call_operand.hbm [shape: bf16[4,32,32], index: 9, kind: input, shape index: {}]
  %s10 = inlined_call_operand.vmem [shape: f32[1,32], index: 10, kind: input, shape index: {}]
  %s11 = inlined_call_operand.vmem [shape: f32[1,32], index: 11, kind: input, shape index: {}]
  %s12 = inlined_call_operand.hbm [shape: f32[2,16,32], index: 12, kind: output, shape index: {0}]
  %s13 = inlined_call_operand.hbm [shape: f32[2,16,32], index: 13, kind: output, shape index: {1}]
  %14 = xla_tuple %s12, %s13
  %s15 = sld [smem:[#allocation0]]
  $region117: #{tpu_custom_call.1} parent=0
    _
  %s17 = ssub.s32 1, %s15
  %s18 = scalar_select 0, %s17, %s15
  $region1: #{tpu_custom_call.1} parent=0
    #allocation2 [shape = 'u8[8192]{0}', space=vmem, size = 0x2000, scoped, tag = 'input window, operand 0']
    #allocation3 [shape = 's32[2]{0}', space=sflag, size = 0x8, scoped, tag = 'scoped memory for tpu_custom_call.1']
    #allocation4 [shape = 's32[2]{0}', space=sflag, size = 0x8, scoped, tag = 'scoped memory for tpu_custom_call.1']
    #allocation5 [shape = 'u8[8192]{0}', space=vmem, size = 0x2000, scoped, tag = 'input window, operand 1']
    #allocation6 [shape = 's32[2]{0}', space=sflag, size = 0x8, scoped, tag = 'scoped memory for tpu_custom_call.1']
    #allocation7 [shape = 'u8[8192]{0}', space=vmem, size = 0x2000, scoped, tag = 'input window, operand 2']
    #allocation8 [shape = 'u8[16384]{0}', space=vmem, size = 0x4000, scoped, tag = 'input window, operand 3, single buffered']
    #allocation9 [shape = 's32[1]{0}', space=sflag, size = 0x4, scoped, tag = 'scoped memory for tpu_custom_call.1']
    #allocation10 [shape = 'u8[8192]{0}', space=vmem, size = 0x2000, scoped, tag = 'input window, operand 4, single buffered']
    #allocation11 [shape = 'u8[8192]{0}', space=vmem, size = 0x2000, scoped, tag = 'input window, operand 5, single buffered']
    #allocation12 [shape = 's32[1]{0}', space=sflag, size = 0x4, scoped, tag = 'scoped memory for tpu_custom_call.1']
    #allocation13 [shape = 'u8[32768]{0}', space=vmem, size = 0x8000, scoped, tag = 'input window, operand 9, single buffered']
    #allocation14 [shape = 'u8[16384]{0}', space=vmem, size = 0x4000, scoped, tag = 'output window, operand 0']
    #allocation15 [shape = 'u8[16384]{0}', space=vmem, size = 0x4000, scoped, tag = 'output window, operand 1']
    #allocation16 [shape = 's32[2]{0}', space=sflag, size = 0x8, scoped, tag = 'scoped memory for tpu_custom_call.1']
    %19 = vsyncpa [#allocation3], 0
    %s20 = scalar_lea.sflag [#allocation3], 1
    %21 = vsyncpa %s20, 0
    %22 = vsyncpa [#allocation6], 0
    %s23 = scalar_lea.sflag [#allocation6], 1
    %24 = vsyncpa %s23, 0
    %25 = vsyncpa [#allocation9], 0
    %26 = vsyncpa [#allocation12], 0
    %27 = vsyncpa [#allocation4], 0
    %s28 = scalar_lea.sflag [#allocation4], 1
    %29 = vsyncpa %s28, 0
    %30 = vsyncpa [#allocation16], 0
    %s31 = scalar_lea.sflag [#allocation16], 1
    %32 = vsyncpa %s31, 0
    loop: start=0, step=1, limit=4
    $region2: #{tpu_custom_call.1} parent=1 // loop_pre_header
      _
    $region3: #{tpu_custom_call.1} parent=1 // loop_header
      %s34 = sphi 0, %s38
      %p35 = scmp.ge.s32.totalorder %s34, 4
      %s44 = sphi 0, %s46
      %s47 = sphi 0, %s44
      %s48 = sphi 0, %s47
      %s64 = sphi 0, %s48
      %s70 = sphi 0, %s72
      %s73 = sphi 0, %s70
      %s74 = sphi 0, %s73
      %s90 = sphi 0, %s74
      %s96 = sphi 0, %s98
      %s99 = sphi 0, %s96
      %s100 = sphi 0, %s99
      %s116 = sphi 0, %s100
      %s120 = sphi 0, %s120
      %s122 = sphi 0, %s120
      %s123 = sphi 0, %s122
      %s137 = sphi 0, %s123
      %s141 = sphi 0, %s141
      %s143 = sphi 0, %s141
      %s144 = sphi 0, %s143
      %s158 = sphi 0, %s144
      %s162 = sphi 0, %s162
      %s164 = sphi 0, %s162
      %s165 = sphi 0, %s164
      %s179 = sphi 0, %s165
      %s183 = sphi 0, %s183
      %s185 = sphi 0, %s183
      %s186 = sphi 0, %s185
      %s200 = sphi 0, %s186
      %s204 = sphi 0, %s204
      %s206 = sphi 0, %s204
      %s207 = sphi 0, %s206
      %s221 = sphi 0, %s207
      %s225 = sphi 0, %s225
      %s227 = sphi 0, %s225
      %s228 = sphi 0, %s227
      %s242 = sphi 0, %s228
      %s246 = sphi 0, %s246
      %s248 = sphi 0, %s246
      %s249 = sphi 0, %s248
      %s263 = sphi 0, %s249
      %s267 = sphi 0, %s267
      %s269 = sphi 0, %s267
      %s270 = sphi 0, %s269
      %s284 = sphi 0, %s270
      %s288 = sphi 0, %s288
      %s290 = sphi 0, %s288
      %s291 = sphi 0, %s290
      %s305 = sphi 0, %s291
      %s311 = sphi 0, %s313
      %s314 = sphi 0, %s311
      %s315 = sphi 0, %s314
      %s331 = sphi 0, %s315
      %s337 = sphi 0, %s339
      %s340 = sphi 0, %s337
      %s341 = sphi 0, %s340
      %s357 = sphi 0, %s341
    $region4: #{tpu_custom_call.1} parent=1 // loop_header_branch
      %37 = sbr.rel (%p35) target = $region8
    $region5: #{tpu_custom_call.1} parent=1 // loop_body
      %s39 = ssub.s32 %s34, 1
      %s40 = ssub.s32 %s34, 2
      %s41 = sadd.s32 %s34, 1
      %s42 = ssub.s32 %s34, %s41
      %p43 = scmp.eq.s32.totalorder %s42, 0
      %s45 = sadd.s32 %s44, 1
      %s46 = scalar_select %p43, %s44, %s45
      %p49 = pneg %p43
      %p50 = scmp.eq.s32.totalorder %s34, 1
      %p51 = por %p49, %p50
      %p52 = scmp.ne.s32.totalorder %s44, %s47
      %p53 = scmp.eq.s32.totalorder %s34, 0
      %p54 = por %p52, %p53
      %p55 = scmp.ne.s32.totalorder %s44, %s47
      %p56 = scmp.eq.s32.totalorder %s39, 1
      %p57 = por %p55, %p56
      %p58 = scmp.ne.s32.totalorder %s47, %s48
      %p59 = scmp.eq.s32.totalorder %s39, 0
      %p60 = por %p58, %p59
      %p61 = scmp.ne.s32.totalorder %s47, %s48
      %p62 = scmp.eq.s32.totalorder %s40, 1
      %p63 = por %p61, %p62
      %p65 = scmp.ne.s32.totalorder %s48, %s64
      %p66 = scmp.eq.s32.totalorder %s40, 0
      %p67 = por %p65, %p66
      %s68 = ssub.s32 %s34, %s41
      %p69 = scmp.eq.s32.totalorder %s68, 0
      %s71 = sadd.s32 %s70, 1
      %s72 = scalar_select %p69, %s70, %s71
      %p75 = pneg %p69
      %p76 = scmp.eq.s32.totalorder %s34, 1
      %p77 = por %p75, %p76
      %p78 = scmp.ne.s32.totalorder %s70, %s73
      %p79 = scmp.eq.s32.totalorder %s34, 0
      %p80 = por %p78, %p79
      %p81 = scmp.ne.s32.totalorder %s70, %s73
      %p82 = scmp.eq.s32.totalorder %s39, 1
      %p83 = por %p81, %p82
      %p84 = scmp.ne.s32.totalorder %s73, %s74
      %p85 = scmp.eq.s32.totalorder %s39, 0
      %p86 = por %p84, %p85
      %p87 = scmp.ne.s32.totalorder %s73, %s74
      %p88 = scmp.eq.s32.totalorder %s40, 1
      %p89 = por %p87, %p88
      %p91 = scmp.ne.s32.totalorder %s74, %s90
      %p92 = scmp.eq.s32.totalorder %s40, 0
      %p93 = por %p91, %p92
      %s94 = ssub.s32 %s34, %s41
      %p95 = scmp.eq.s32.totalorder %s94, 0
      %s97 = sadd.s32 %s96, 1
      %s98 = scalar_select %p95, %s96, %s97
      %p101 = pneg %p95
      %p102 = scmp.eq.s32.totalorder %s34, 1
      %p103 = por %p101, %p102
      %p104 = scmp.ne.s32.totalorder %s96, %s99
      %p105 = scmp.eq.s32.totalorder %s34, 0
      %p106 = por %p104, %p105
      %p107 = scmp.ne.s32.totalorder %s96, %s99
      %p108 = scmp.eq.s32.totalorder %s39, 1
      %p109 = por %p107, %p108
      %p110 = scmp.ne.s32.totalorder %s99, %s100
      %p111 = scmp.eq.s32.totalorder %s39, 0
      %p112 = por %p110, %p111
      %p113 = scmp.ne.s32.totalorder %s99, %s100
      %p114 = scmp.eq.s32.totalorder %s40, 1
      %p115 = por %p113, %p114
      %p117 = scmp.ne.s32.totalorder %s100, %s116
      %p118 = scmp.eq.s32.totalorder %s40, 0
      %p119 = por %p117, %p118
      %s121 = sadd.s32 %s120, 1
      %p124 = scmp.eq.s32.totalorder %s34, 1
      %p125 = scmp.ne.s32.totalorder %s120, %s122
      %p126 = scmp.eq.s32.totalorder %s34, 0
      %p127 = por %p125, %p126
      %p128 = scmp.ne.s32.totalorder %s120, %s122
      %p129 = scmp.eq.s32.totalorder %s39, 1
      %p130 = por %p128, %p129
      %p131 = scmp.ne.s32.totalorder %s122, %s123
      %p132 = scmp.eq.s32.totalorder %s39, 0
      %p133 = por %p131, %p132
      %p134 = scmp.ne.s32.totalorder %s122, %s123
      %p135 = scmp.eq.s32.totalorder %s40, 1
      %p136 = por %p134, %p135
      %p138 = scmp.ne.s32.totalorder %s123, %s137
      %p139 = scmp.eq.s32.totalorder %s40, 0
      %p140 = por %p138, %p139
      %s142 = sadd.s32 %s141, 1
      %p145 = scmp.eq.s32.totalorder %s34, 1
      %p146 = scmp.ne.s32.totalorder %s141, %s143
      %p147 = scmp.eq.s32.totalorder %s34, 0
      %p148 = por %p146, %p147
      %p149 = scmp.ne.s32.totalorder %s141, %s143
      %p150 = scmp.eq.s32.totalorder %s39, 1
      %p151 = por %p149, %p150
      %p152 = scmp.ne.s32.totalorder %s143, %s144
      %p153 = scmp.eq.s32.totalorder %s39, 0
      %p154 = por %p152, %p153
      %p155 = scmp.ne.s32.totalorder %s143, %s144
      %p156 = scmp.eq.s32.totalorder %s40, 1
      %p157 = por %p155, %p156
      %p159 = scmp.ne.s32.totalorder %s144, %s158
      %p160 = scmp.eq.s32.totalorder %s40, 0
      %p161 = por %p159, %p160
      %s163 = sadd.s32 %s162, 1
      %p166 = scmp.eq.s32.totalorder %s34, 1
      %p167 = scmp.ne.s32.totalorder %s162, %s164
      %p168 = scmp.eq.s32.totalorder %s34, 0
      %p169 = por %p167, %p168
      %p170 = scmp.ne.s32.totalorder %s162, %s164
      %p171 = scmp.eq.s32.totalorder %s39, 1
      %p172 = por %p170, %p171
      %p173 = scmp.ne.s32.totalorder %s164, %s165
      %p174 = scmp.eq.s32.totalorder %s39, 0
      %p175 = por %p173, %p174
      %p176 = scmp.ne.s32.totalorder %s164, %s165
      %p177 = scmp.eq.s32.totalorder %s40, 1
      %p178 = por %p176, %p177
      %p180 = scmp.ne.s32.totalorder %s165, %s179
      %p181 = scmp.eq.s32.totalorder %s40, 0
      %p182 = por %p180, %p181
      %s184 = sadd.s32 %s183, 1
      %p187 = scmp.eq.s32.totalorder %s34, 1
      %p188 = scmp.ne.s32.totalorder %s183, %s185
      %p189 = scmp.eq.s32.totalorder %s34, 0
      %p190 = por %p188, %p189
      %p191 = scmp.ne.s32.totalorder %s183, %s185
      %p192 = scmp.eq.s32.totalorder %s39, 1
      %p193 = por %p191, %p192
      %p194 = scmp.ne.s32.totalorder %s185, %s186
      %p195 = scmp.eq.s32.totalorder %s39, 0
      %p196 = por %p194, %p195
      %p197 = scmp.ne.s32.totalorder %s185, %s186
      %p198 = scmp.eq.s32.totalorder %s40, 1
      %p199 = por %p197, %p198
      %p201 = scmp.ne.s32.totalorder %s186, %s200
      %p202 = scmp.eq.s32.totalorder %s40, 0
      %p203 = por %p201, %p202
      %s205 = sadd.s32 %s204, 1
      %p208 = scmp.eq.s32.totalorder %s34, 1
      %p209 = scmp.ne.s32.totalorder %s204, %s206
      %p210 = scmp.eq.s32.totalorder %s34, 0
      %p211 = por %p209, %p210
      %p212 = scmp.ne.s32.totalorder %s204, %s206
      %p213 = scmp.eq.s32.totalorder %s39, 1
      %p214 = por %p212, %p213
      %p215 = scmp.ne.s32.totalorder %s206, %s207
      %p216 = scmp.eq.s32.totalorder %s39, 0
      %p217 = por %p215, %p216
      %p218 = scmp.ne.s32.totalorder %s206, %s207
      %p219 = scmp.eq.s32.totalorder %s40, 1
      %p220 = por %p218, %p219
      %p222 = scmp.ne.s32.totalorder %s207, %s221
      %p223 = scmp.eq.s32.totalorder %s40, 0
      %p224 = por %p222, %p223
      %s226 = sadd.s32 %s225, 1
      %p229 = scmp.eq.s32.totalorder %s34, 1
      %p230 = scmp.ne.s32.totalorder %s225, %s227
      %p231 = scmp.eq.s32.totalorder %s34, 0
      %p232 = por %p230, %p231
      %p233 = scmp.ne.s32.totalorder %s225, %s227
      %p234 = scmp.eq.s32.totalorder %s39, 1
      %p235 = por %p233, %p234
      %p236 = scmp.ne.s32.totalorder %s227, %s228
      %p237 = scmp.eq.s32.totalorder %s39, 0
      %p238 = por %p236, %p237
      %p239 = scmp.ne.s32.totalorder %s227, %s228
      %p240 = scmp.eq.s32.totalorder %s40, 1
      %p241 = por %p239, %p240
      %p243 = scmp.ne.s32.totalorder %s228, %s242
      %p244 = scmp.eq.s32.totalorder %s40, 0
      %p245 = por %p243, %p244
      %s247 = sadd.s32 %s246, 1
      %p250 = scmp.eq.s32.totalorder %s34, 1
      %p251 = scmp.ne.s32.totalorder %s246, %s248
      %p252 = scmp.eq.s32.totalorder %s34, 0
      %p253 = por %p251, %p252
      %p254 = scmp.ne.s32.totalorder %s246, %s248
      %p255 = scmp.eq.s32.totalorder %s39, 1
      %p256 = por %p254, %p255
      %p257 = scmp.ne.s32.totalorder %s248, %s249
      %p258 = scmp.eq.s32.totalorder %s39, 0
      %p259 = por %p257, %p258
      %p260 = scmp.ne.s32.totalorder %s248, %s249
      %p261 = scmp.eq.s32.totalorder %s40, 1
      %p262 = por %p260, %p261
      %p264 = scmp.ne.s32.totalorder %s249, %s263
      %p265 = scmp.eq.s32.totalorder %s40, 0
      %p266 = por %p264, %p265
      %s268 = sadd.s32 %s267, 1
      %p271 = scmp.eq.s32.totalorder %s34, 1
      %p272 = scmp.ne.s32.totalorder %s267, %s269
      %p273 = scmp.eq.s32.totalorder %s34, 0
      %p274 = por %p272, %p273
      %p275 = scmp.ne.s32.totalorder %s267, %s269
      %p276 = scmp.eq.s32.totalorder %s39, 1
      %p277 = por %p275, %p276
      %p278 = scmp.ne.s32.totalorder %s269, %s270
      %p279 = scmp.eq.s32.totalorder %s39, 0
      %p280 = por %p278, %p279
      %p281 = scmp.ne.s32.totalorder %s269, %s270
      %p282 = scmp.eq.s32.totalorder %s40, 1
      %p283 = por %p281, %p282
      %p285 = scmp.ne.s32.totalorder %s270, %s284
      %p286 = scmp.eq.s32.totalorder %s40, 0
      %p287 = por %p285, %p286
      %s289 = sadd.s32 %s288, 1
      %p292 = scmp.eq.s32.totalorder %s34, 1
      %p293 = scmp.ne.s32.totalorder %s288, %s290
      %p294 = scmp.eq.s32.totalorder %s34, 0
      %p295 = por %p293, %p294
      %p296 = scmp.ne.s32.totalorder %s288, %s290
      %p297 = scmp.eq.s32.totalorder %s39, 1
      %p298 = por %p296, %p297
      %p299 = scmp.ne.s32.totalorder %s290, %s291
      %p300 = scmp.eq.s32.totalorder %s39, 0
      %p301 = por %p299, %p300
      %p302 = scmp.ne.s32.totalorder %s290, %s291
      %p303 = scmp.eq.s32.totalorder %s40, 1
      %p304 = por %p302, %p303
      %p306 = scmp.ne.s32.totalorder %s291, %s305
      %p307 = scmp.eq.s32.totalorder %s40, 0
      %p308 = por %p306, %p307
      %s309 = ssub.s32 %s34, %s41
      %p310 = scmp.eq.s32.totalorder %s309, 0
      %s312 = sadd.s32 %s311, 1
      %s313 = scalar_select %p310, %s311, %s312
      %p316 = pneg %p310
      %p317 = scmp.eq.s32.totalorder %s34, 1
      %p318 = por %p316, %p317
      %p319 = scmp.ne.s32.totalorder %s311, %s314
      %p320 = scmp.eq.s32.totalorder %s34, 0
      %p321 = por %p319, %p320
      %p322 = scmp.ne.s32.totalorder %s311, %s314
      %p323 = scmp.eq.s32.totalorder %s39, 1
      %p324 = por %p322, %p323
      %p325 = scmp.ne.s32.totalorder %s314, %s315
      %p326 = scmp.eq.s32.totalorder %s39, 0
      %p327 = por %p325, %p326
      %p328 = scmp.ne.s32.totalorder %s314, %s315
      %p329 = scmp.eq.s32.totalorder %s40, 1
      %p330 = por %p328, %p329
      %p332 = scmp.ne.s32.totalorder %s315, %s331
      %p333 = scmp.eq.s32.totalorder %s40, 0
      %p334 = por %p332, %p333
      %s335 = ssub.s32 %s34, %s41
      %p336 = scmp.eq.s32.totalorder %s335, 0
      %s338 = sadd.s32 %s337, 1
      %s339 = scalar_select %p336, %s337, %s338
      %p342 = pneg %p336
      %p343 = scmp.eq.s32.totalorder %s34, 1
      %p344 = por %p342, %p343
      %p345 = scmp.ne.s32.totalorder %s337, %s340
      %p346 = scmp.eq.s32.totalorder %s34, 0
      %p347 = por %p345, %p346
      %p348 = scmp.ne.s32.totalorder %s337, %s340
      %p349 = scmp.eq.s32.totalorder %s39, 1
      %p350 = por %p348, %p349
      %p351 = scmp.ne.s32.totalorder %s340, %s341
      %p352 = scmp.eq.s32.totalorder %s39, 0
      %p353 = por %p351, %p352
      %p354 = scmp.ne.s32.totalorder %s340, %s341
      %p355 = scmp.eq.s32.totalorder %s40, 1
      %p356 = por %p354, %p355
      %p358 = scmp.ne.s32.totalorder %s341, %s357
      %p359 = scmp.eq.s32.totalorder %s40, 0
      %p360 = por %p358, %p359
      %p361 = scmp.le.s32.totalorder 1, %s34
      %p362 = scmp.lt.s32.totalorder %s34, 3
      %p363 = pnand %p361, %p362
      %p364 = pneg %p363
      // Predicated region
      $region9: #{tpu_custom_call.1} parent=5 // pred_check
        _
      $region10: #{tpu_custom_call.1} parent=5 // pred_check_branch
        %366 = sbr.rel (%p363) target = $region12
      $region11: #{tpu_custom_call.1} parent=5 // pred_region
        %s367 = ssub.s32 %s34, 1
        // Predicated region
        $region13: #{tpu_custom_call.1} parent=11 // pred_check
          %p368 = pneg %p133
        $region14: #{tpu_custom_call.1} parent=11 // pred_check_branch
          %370 = sbr.rel (%p368) target = $region16
        $region15: #{tpu_custom_call.1} parent=11 // pred_region
          %372 = vsyncadd [#allocation9], 0
          %s373 = sshll.u32 %s3, 4
          %s374 = int_to_ptr.hbm [resolvable:$true] %s373
          %s375 = sshll.u32 [#allocation8], 4
          %s376 = int_to_ptr.vmem [resolvable:$true] %s375
          %381 = dma.hbm_to_vmem [thread:$0]  %s374, 512, %s376, [#allocation9], 128, 128, 8
        $region16: #{tpu_custom_call.1} parent=11 // pred_fallthru
          _
        // Predicated region
        $region17: #{tpu_custom_call.1} parent=11 // pred_check
          %p382 = pneg %p154
        $region18: #{tpu_custom_call.1} parent=11 // pred_check_branch
          %384 = sbr.rel (%p382) target = $region20
        $region19: #{tpu_custom_call.1} parent=11 // pred_region
          %386 = vsyncadd [#allocation9], 0
          %s387 = sshll.u32 %s4, 4
          %s388 = int_to_ptr.hbm [resolvable:$true] %s387
          %s389 = sshll.u32 [#allocation10], 4
          %s390 = int_to_ptr.vmem [resolvable:$true] %s389
          %395 = dma.hbm_to_vmem [thread:$0]  %s388, 256, %s390, [#allocation9], 64, 64, 4
        $region20: #{tpu_custom_call.1} parent=11 // pred_fallthru
          _
        // Predicated region
        $region21: #{tpu_custom_call.1} parent=11 // pred_check
          %p396 = pneg %p175
        $region22: #{tpu_custom_call.1} parent=11 // pred_check_branch
          %398 = sbr.rel (%p396) target = $region24
        $region23: #{tpu_custom_call.1} parent=11 // pred_region
          %400 = vsyncadd [#allocation12], 0
          %s401 = sshll.u32 %s5, 4
          %s402 = int_to_ptr.hbm [resolvable:$true] %s401
          %s403 = sshll.u32 [#allocation11], 4
          %s404 = int_to_ptr.vmem [resolvable:$true] %s403
          %409 = dma.hbm_to_vmem [thread:$0]  %s402, 256, %s404, [#allocation12], 64, 64, 4
        $region24: #{tpu_custom_call.1} parent=11 // pred_fallthru
          _
        // Predicated region
        $region25: #{tpu_custom_call.1} parent=11 // pred_check
          %p410 = pneg %p196
        $region26: #{tpu_custom_call.1} parent=11 // pred_check_branch
          %412 = sbr.rel (%p410) target = $region28
        $region27: #{tpu_custom_call.1} parent=11 // pred_region
          _
        $region28: #{tpu_custom_call.1} parent=11 // pred_fallthru
          _
        // Predicated region
        $region29: #{tpu_custom_call.1} parent=11 // pred_check
          %p413 = pneg %p217
        $region30: #{tpu_custom_call.1} parent=11 // pred_check_branch
          %415 = sbr.rel (%p413) target = $region32
        $region31: #{tpu_custom_call.1} parent=11 // pred_region
          _
        $region32: #{tpu_custom_call.1} parent=11 // pred_fallthru
          _
        // Predicated region
        $region33: #{tpu_custom_call.1} parent=11 // pred_check
          %p416 = pneg %p238
        $region34: #{tpu_custom_call.1} parent=11 // pred_check_branch
          %418 = sbr.rel (%p416) target = $region36
        $region35: #{tpu_custom_call.1} parent=11 // pred_region
          _
        $region36: #{tpu_custom_call.1} parent=11 // pred_fallthru
          _
        // Predicated region
        $region37: #{tpu_custom_call.1} parent=11 // pred_check
          %p419 = pneg %p259
        $region38: #{tpu_custom_call.1} parent=11 // pred_check_branch
          %421 = sbr.rel (%p419) target = $region40
        $region39: #{tpu_custom_call.1} parent=11 // pred_region
          %423 = vsyncadd [#allocation12], 0
          %s424 = sshll.u32 %s9, 4
          %s425 = int_to_ptr.hbm [resolvable:$true] %s424
          %s426 = sshll.u32 [#allocation13], 4
          %s427 = int_to_ptr.vmem [resolvable:$true] %s426
          %432 = dma.hbm_to_vmem [thread:$0]  %s425, 1024, %s427, [#allocation12], 64, 64, 4
        $region40: #{tpu_custom_call.1} parent=11 // pred_fallthru
          _
        // Predicated region
        $region41: #{tpu_custom_call.1} parent=11 // pred_check
          %p433 = pneg %p280
        $region42: #{tpu_custom_call.1} parent=11 // pred_check_branch
          %435 = sbr.rel (%p433) target = $region44
        $region43: #{tpu_custom_call.1} parent=11 // pred_region
          _
        $region44: #{tpu_custom_call.1} parent=11 // pred_fallthru
          _
        // Predicated region
        $region45: #{tpu_custom_call.1} parent=11 // pred_check
          %p436 = pneg %p301
        $region46: #{tpu_custom_call.1} parent=11 // pred_check_branch
          %438 = sbr.rel (%p436) target = $region48
        $region47: #{tpu_custom_call.1} parent=11 // pred_region
          _
        $region48: #{tpu_custom_call.1} parent=11 // pred_fallthru
          _
      $region12: #{tpu_custom_call.1} parent=5 // pred_fallthru
        _
      %p439 = scmp.lt.s32.totalorder %s34, 2
      // Predicated region
      $region49: #{tpu_custom_call.1} parent=5 // pred_check
        %p440 = pneg %p439
      $region50: #{tpu_custom_call.1} parent=5 // pred_check_branch
        %442 = sbr.rel (%p440) target = $region52
      $region51: #{tpu_custom_call.1} parent=5 // pred_region
        // Predicated region
        $region53: #{tpu_custom_call.1} parent=51 // pred_check
          %p443 = pneg %p54
        $region54: #{tpu_custom_call.1} parent=51 // pred_check_branch
          %445 = sbr.rel (%p443) target = $region56
        $region55: #{tpu_custom_call.1} parent=51 // pred_region
          %s446 = sand.u32 %s44, 1
          %s447 = scalar_lea.sflag [#allocation3], %s446
          %s448 = sand.u32 %s44, 1
          %s449 = smul.addr %s448, 8
          %s450 = scalar_lea.vmem [#allocation2], %s449
          %452 = vsyncadd %s447, 0
          %s453 = smul.addr %s34, 2
          %s454 = smul.addr %s453, 4
          %s455 = scalar_lea.hbm %s0, %s454
          %s456 = sshll.u32 %s455, 4
          %s457 = int_to_ptr.hbm [resolvable:$true] %s456
          %s458 = sshll.u32 %s450, 4
          %s459 = int_to_ptr.vmem [resolvable:$true] %s458
          %464 = dma.hbm_to_vmem [thread:$0]  %s457, 128, %s459, %s447, 64, 64, 4
        $region56: #{tpu_custom_call.1} parent=51 // pred_fallthru
          _
        // Predicated region
        $region57: #{tpu_custom_call.1} parent=51 // pred_check
          %p465 = pneg %p80
        $region58: #{tpu_custom_call.1} parent=51 // pred_check_branch
          %467 = sbr.rel (%p465) target = $region60
        $region59: #{tpu_custom_call.1} parent=51 // pred_region
          %s468 = sand.u32 %s34, 1
          %s469 = scalar_lea.sflag [#allocation6], %s468
          %s470 = sand.u32 %s70, 1
          %s471 = smul.addr %s470, 8
          %s472 = scalar_lea.vmem [#allocation5], %s471
          %474 = vsyncadd %s469, 0
          %s475 = smul.addr %s34, 2
          %s476 = smul.addr %s475, 4
          %s477 = scalar_lea.hbm %s1, %s476
          %s478 = sshll.u32 %s477, 4
          %s479 = int_to_ptr.hbm [resolvable:$true] %s478
          %s480 = sshll.u32 %s472, 4
          %s481 = int_to_ptr.vmem [resolvable:$true] %s480
          %486 = dma.hbm_to_vmem [thread:$0]  %s479, 128, %s481, %s469, 64, 64, 4
        $region60: #{tpu_custom_call.1} parent=51 // pred_fallthru
          _
        // Predicated region
        $region61: #{tpu_custom_call.1} parent=51 // pred_check
          %p487 = pneg %p106
        $region62: #{tpu_custom_call.1} parent=51 // pred_check_branch
          %489 = sbr.rel (%p487) target = $region64
        $region63: #{tpu_custom_call.1} parent=51 // pred_region
          %s490 = sand.u32 %s34, 1
          %s491 = scalar_lea.sflag [#allocation6], %s490
          %s492 = sand.u32 %s96, 1
          %s493 = smul.addr %s492, 8
          %s494 = scalar_lea.vmem [#allocation7], %s493
          %496 = vsyncadd %s491, 0
          %s497 = smul.addr %s34, 2
          %s498 = smul.addr %s497, 4
          %s499 = scalar_lea.hbm %s2, %s498
          %s500 = sshll.u32 %s499, 4
          %s501 = int_to_ptr.hbm [resolvable:$true] %s500
          %s502 = sshll.u32 %s494, 4
          %s503 = int_to_ptr.vmem [resolvable:$true] %s502
          %508 = dma.hbm_to_vmem [thread:$0]  %s501, 128, %s503, %s491, 64, 64, 4
        $region64: #{tpu_custom_call.1} parent=51 // pred_fallthru
          _
      $region52: #{tpu_custom_call.1} parent=5 // pred_fallthru
        _
      %p509 = scmp.le.s32.totalorder 1, %s34
      %p510 = scmp.lt.s32.totalorder %s34, 3
      %p511 = pnand %p509, %p510
      %p512 = pneg %p511
      // Predicated region
      $region65: #{tpu_custom_call.1} parent=5 // pred_check
        _
      $region66: #{tpu_custom_call.1} parent=5 // pred_check_branch
        %514 = sbr.rel (%p511) target = $region68
      $region67: #{tpu_custom_call.1} parent=5 // pred_region
        %s515 = ssub.s32 %s34, 1
        %s516 = sand.u32 %s47, 1
        %s517 = scalar_lea.sflag [#allocation3], %s516
        %s518 = sand.u32 %s47, 1
        %s519 = smul.addr %s518, 8
        %s520 = scalar_lea.vmem [#allocation2], %s519
        // Predicated region
        $region69: #{tpu_custom_call.1} parent=67 // pred_check
          %p521 = pneg %p60
        $region70: #{tpu_custom_call.1} parent=67 // pred_check_branch
          %523 = sbr.rel (%p521) target = $region72
        $region71: #{tpu_custom_call.1} parent=67 // pred_region
          %525 = dma.done %s517, 128
        $region72: #{tpu_custom_call.1} parent=67 // pred_fallthru
          _
        %s526 = sand.u32 %s39, 1
        %s527 = scalar_lea.sflag [#allocation6], %s526
        %s528 = sand.u32 %s73, 1
        %s529 = smul.addr %s528, 8
        %s530 = scalar_lea.vmem [#allocation5], %s529
        // Predicated region
        $region73: #{tpu_custom_call.1} parent=67 // pred_check
          %p531 = pneg %p86
        $region74: #{tpu_custom_call.1} parent=67 // pred_check_branch
          %533 = sbr.rel (%p531) target = $region76
        $region75: #{tpu_custom_call.1} parent=67 // pred_region
          %535 = dma.done %s527, 128
        $region76: #{tpu_custom_call.1} parent=67 // pred_fallthru
          _
        %s536 = sand.u32 %s39, 1
        %s537 = scalar_lea.sflag [#allocation6], %s536
        %s538 = sand.u32 %s99, 1
        %s539 = smul.addr %s538, 8
        %s540 = scalar_lea.vmem [#allocation7], %s539
        // Predicated region
        $region77: #{tpu_custom_call.1} parent=67 // pred_check
          %p541 = pneg %p112
        $region78: #{tpu_custom_call.1} parent=67 // pred_check_branch
          %543 = sbr.rel (%p541) target = $region80
        $region79: #{tpu_custom_call.1} parent=67 // pred_region
          %545 = dma.done %s537, 128
        $region80: #{tpu_custom_call.1} parent=67 // pred_fallthru
          _
        // Predicated region
        $region81: #{tpu_custom_call.1} parent=67 // pred_check
          %p546 = pneg %p133
        $region82: #{tpu_custom_call.1} parent=67 // pred_check_branch
          %548 = sbr.rel (%p546) target = $region84
        $region83: #{tpu_custom_call.1} parent=67 // pred_region
          %550 = dma.done [#allocation9], 512
        $region84: #{tpu_custom_call.1} parent=67 // pred_fallthru
          _
        // Predicated region
        $region85: #{tpu_custom_call.1} parent=67 // pred_check
          %p551 = pneg %p154
        $region86: #{tpu_custom_call.1} parent=67 // pred_check_branch
          %553 = sbr.rel (%p551) target = $region88
        $region87: #{tpu_custom_call.1} parent=67 // pred_region
          %555 = dma.done [#allocation9], 256
        $region88: #{tpu_custom_call.1} parent=67 // pred_fallthru
          _
        // Predicated region
        $region89: #{tpu_custom_call.1} parent=67 // pred_check
          %p556 = pneg %p175
        $region90: #{tpu_custom_call.1} parent=67 // pred_check_branch
          %558 = sbr.rel (%p556) target = $region92
        $region91: #{tpu_custom_call.1} parent=67 // pred_region
          %560 = dma.done [#allocation12], 256
        $region92: #{tpu_custom_call.1} parent=67 // pred_fallthru
          _
        // Predicated region
        $region93: #{tpu_custom_call.1} parent=67 // pred_check
          %p561 = pneg %p259
        $region94: #{tpu_custom_call.1} parent=67 // pred_check_branch
          %563 = sbr.rel (%p561) target = $region96
        $region95: #{tpu_custom_call.1} parent=67 // pred_region
          %565 = dma.done [#allocation12], 1024
        $region96: #{tpu_custom_call.1} parent=67 // pred_fallthru
          _
        %s566 = sand.u32 %s47, 1
        %s567 = scalar_lea.sflag [#allocation3], %s566
        %s568 = sand.u32 %s47, 1
        %s569 = smul.addr %s568, 8
        %s570 = scalar_lea.vmem [#allocation2], %s569
        %p571 = pneg %p60
        %p572 = pneg %p57
        %s573 = sand.u32 %s39, 1
        %s574 = scalar_lea.sflag [#allocation6], %s573
        %s575 = sand.u32 %s73, 1
        %s576 = smul.addr %s575, 8
        %s577 = scalar_lea.vmem [#allocation5], %s576
        %p578 = pneg %p86
        %p579 = pneg %p83
        %s580 = sand.u32 %s39, 1
        %s581 = scalar_lea.sflag [#allocation6], %s580
        %s582 = sand.u32 %s99, 1
        %s583 = smul.addr %s582, 8
        %s584 = scalar_lea.vmem [#allocation7], %s583
        %p585 = pneg %p112
        %p586 = pneg %p109
        %p587 = pneg %p133
        %p588 = pneg %p130
        %p589 = pneg %p154
        %p590 = pneg %p151
        %p591 = pneg %p175
        %p592 = pneg %p172
        %p593 = pneg %p196
        %p594 = pneg %p193
        %p595 = pneg %p217
        %p596 = pneg %p214
        %p597 = pneg %p238
        %p598 = pneg %p235
        %p599 = pneg %p259
        %p600 = pneg %p256
        %p601 = pneg %p280
        %p602 = pneg %p277
        %p603 = pneg %p301
        %p604 = pneg %p298
        %p605 = pneg %p327
        %p606 = pneg %p324
        %s607 = sand.u32 %s314, 1
        %s608 = scalar_lea.sflag [#allocation4], %s607
        %s609 = sand.u32 %s314, 1
        %s610 = smul.addr %s609, 16
        %s611 = scalar_lea.vmem [#allocation14], %s610
        %p612 = pneg %p353
        %p613 = pneg %p350
        %s614 = sand.u32 %s340, 1
        %s615 = scalar_lea.sflag [#allocation16], %s614
        %s616 = sand.u32 %s340, 1
        %s617 = smul.addr %s616, 16
        %s618 = scalar_lea.vmem [#allocation15], %s617
        %v620 = vld [vmem:[%s520] sm:$0xf]
        %v621 = vld [vmem:[%s520 + $0x4] sm:$0xf]
        %v622 = vld [vmem:[%s530] sm:$0xf]
        %v623 = vld [vmem:[%s530 + $0x4] sm:$0xf]
        %v624 = vld [vmem:[%s540] sm:$0xf]
        %v625 = vld [vmem:[%s540 + $0x4] sm:$0xf]
        %v626 = vld [vmem:[#allocation8] sm:$0xff]
        %v627 = vld [vmem:[#allocation8 + $0x8] sm:$0xff]
        %v628 = vld [vmem:[#allocation8 + $0x10] sm:$0xff]
        %v629 = vld [vmem:[#allocation8 + $0x18] sm:$0xff]
        %v630 = vld [vmem:[%s6] sm:$0x3]
        %v632 = vperm.slane %v630, 0
        %v633 = vperm.slane %v630, 1
        %v638 = vunpack.c.l.b16 %v624
        %v639 = vunpack.c.l.b16 %v625
        %v640 = vpack.c.b16 %v639, %v638
        %v645 = vunpack.c.l.b16 %v626
        %v646 = vunpack.c.h.b16 %v626
        %v647 = vunpack.c.l.b16 %v627
        %v648 = vunpack.c.h.b16 %v627
        %v649 = vunpack.c.l.b16 %v628
        %v650 = vunpack.c.h.b16 %v628
        %v651 = vunpack.c.l.b16 %v629
        %v652 = vunpack.c.h.b16 %v629
        %v653 = vpack.c.b16 %v647, %v645
        %v654 = vpack.c.b16 %v648, %v646
        %v655 = vpack.c.b16 %v651, %v649
        %v656 = vpack.c.b16 %v652, %v650
        %vm661 = vcmask 261120
        %v663 = vsel %vm661, %v640, 0
        %665 = vmatpush.bf16.msra.mxu0 0
        %666 = vmatpush.bf16.msra.mxu0 0
        %667 = vmatpush.bf16.msra.mxu0 0
        %668 = vmatpush.bf16.msra.mxu0 0
        %669 = vmatpush.bf16.msra.mxu0 0
        %670 = vmatpush.bf16.msra.mxu0 0
        %671 = vmatpush.bf16.msra.mxu0 %v655
        %672 = vmatpush.bf16.msra.mxu0 %v653
        %673 = vmatmul.bf16.gmra.mxu0 %v663
        %v674 = vpop.f32.mrf.mxu0
        %v675 = vadd.f32 %v632, %v674
        %v676 = vpop.f32.mrf.mxu0
        %v677 = vadd.f32 %v632, %v676
        %678 = vdwg.mxu0
        %679 = vmatpush.bf16.msra.mxu0 0
        %680 = vmatpush.bf16.msra.mxu0 0
        %681 = vmatpush.bf16.msra.mxu0 0
        %682 = vmatpush.bf16.msra.mxu0 0
        %683 = vmatpush.bf16.msra.mxu0 0
        %684 = vmatpush.bf16.msra.mxu0 0
        %685 = vmatpush.bf16.msra.mxu0 %v656
        %686 = vmatpush.bf16.msra.mxu0 %v654
        %687 = vmatmul.bf16.gmra.mxu0 %v663
        %v688 = vpop.f32.mrf.mxu0
        %v689 = vadd.f32 %v633, %v688
        %v690 = vpop.f32.mrf.mxu0
        %v691 = vadd.f32 %v633, %v690
        %692 = vdwg.mxu0
        %v693 = vpack.c.bf16 %v689, %v675
        %v694 = vpack.c.bf16 %v691, %v677
        %v695 = vld [vmem:[#allocation10] sm:$0xf]
        %v696 = vld [vmem:[#allocation10 + $0x4] sm:$0xf]
        %v697 = vld [vmem:[#allocation10 + $0x8] sm:$0xf]
        %v698 = vld [vmem:[#allocation10 + $0xc] sm:$0xf]
        %v699 = vld [vmem:[%s7] sm:$0x1]
        %v701 = vperm.slane %v699, 0
        %v705 = vunpack.c.l.b16 %v620
        %v706 = vunpack.c.l.b16 %v621
        %v707 = vpack.c.b16 %v706, %v705
        %v712 = vunpack.c.l.b16 %v695
        %v713 = vunpack.c.l.b16 %v696
        %v714 = vunpack.c.l.b16 %v697
        %v715 = vunpack.c.l.b16 %v698
        %v716 = vpack.c.b16 %v713, %v712
        %v717 = vpack.c.b16 %v715, %v714
        %v721 = vsel %vm661, %v707, 0
        %723 = vmatpush.bf16.msra.mxu0 0
        %724 = vmatpush.bf16.msra.mxu0 0
        %725 = vmatpush.bf16.msra.mxu0 0
        %726 = vmatpush.bf16.msra.mxu0 0
        %727 = vmatpush.bf16.msra.mxu0 0
        %728 = vmatpush.bf16.msra.mxu0 0
        %729 = vmatpush.bf16.msra.mxu0 %v717
        %730 = vmatpush.bf16.msra.mxu0 %v716
        %731 = vmatmul.bf16.gmra.mxu0 %v721
        %v732 = vpop.f32.mrf.mxu0
        %v733 = vadd.f32 %v701, %v732
        %v734 = vpop.f32.mrf.mxu0
        %v735 = vadd.f32 %v701, %v734
        %736 = vdwg.mxu0
        %v737 = vpack.c.bf16 %v733, %v733
        %v738 = vpack.c.bf16 %v735, %v735
        %v739 = vld [vmem:[#allocation11] sm:$0xf]
        %v740 = vld [vmem:[#allocation11 + $0x4] sm:$0xf]
        %v741 = vld [vmem:[#allocation11 + $0x8] sm:$0xf]
        %v742 = vld [vmem:[#allocation11 + $0xc] sm:$0xf]
        %v743 = vld [vmem:[%s8] sm:$0x1]
        %v745 = vperm.slane %v743, 0
        %v749 = vunpack.c.l.b16 %v622
        %v750 = vunpack.c.l.b16 %v623
        %v751 = vpack.c.b16 %v750, %v749
        %v756 = vunpack.c.l.b16 %v739
        %v757 = vunpack.c.l.b16 %v740
        %v758 = vunpack.c.l.b16 %v741
        %v759 = vunpack.c.l.b16 %v742
        %v760 = vpack.c.b16 %v757, %v756
        %v761 = vpack.c.b16 %v759, %v758
        %v765 = vsel %vm661, %v751, 0
        %767 = vmatpush.bf16.msra.mxu0 0
        %768 = vmatpush.bf16.msra.mxu0 0
        %769 = vmatpush.bf16.msra.mxu0 0
        %770 = vmatpush.bf16.msra.mxu0 0
        %771 = vmatpush.bf16.msra.mxu0 0
        %772 = vmatpush.bf16.msra.mxu0 0
        %773 = vmatpush.bf16.msra.mxu0 %v761
        %774 = vmatpush.bf16.msra.mxu0 %v760
        %775 = vmatmul.bf16.gmra.mxu0 %v765
        %v776 = vpop.f32.mrf.mxu0
        %v777 = vadd.f32 %v745, %v776
        %v778 = vpop.f32.mrf.mxu0
        %v779 = vadd.f32 %v745, %v778
        %780 = vdwg.mxu0
        %v781 = vpack.c.bf16 %v777, %v777
        %v782 = vpack.c.bf16 %v779, %v779
        %v783 = vld [vmem:[#allocation13] sm:$0xf]
        %v784 = vld [vmem:[#allocation13 + $0x4] sm:$0xf]
        %v785 = vld [vmem:[#allocation13 + $0x8] sm:$0xf]
        %v786 = vld [vmem:[#allocation13 + $0xc] sm:$0xf]
        %v789 = vunpack.c.l.b16 %v693
        %v790 = vunpack.c.l.b16 %v694
        %v791 = vpack.c.b16 %v790, %v789
        %v794 = vunpack.c.l.b16 %v737
        %v795 = vunpack.c.l.b16 %v738
        %v796 = vpack.c.b16 %v795, %v794
        %797 = vrot.lane.b32.xlu0 %v796, 96
        %v798 = vpop.permute.xlu0 %797
        %vm799 = vcmask 64512
        %v801 = vsel %vm799, %v791, 0
        %v804 = vsel %vm799, %v798, 0
        %806 = vmatpush.bf16.xpose.msra.mxu0 0
        %807 = vmatpush.bf16.xpose.msra.mxu0 0
        %808 = vmatpush.bf16.xpose.msra.mxu0 0
        %809 = vmatpush.bf16.xpose.msra.mxu0 0
        %810 = vmatpush.bf16.xpose.msra.mxu0 0
        %811 = vmatpush.bf16.xpose.msra.mxu0 0
        %812 = vmatpush.bf16.xpose.msra.mxu0 0
        %813 = vmatpush.bf16.xpose.msra.mxu0 %v804
        %814 = vmatmul.bf16.gmra.mxu0 %v801
        %v815 = vpop.f32.mrf.mxu0
        %v816 = vadd.f32 0.0, %v815
        %v817 = vpop.f32.mrf.mxu0
        %v818 = vadd.f32 0.0, %v817
        %819 = vdwg.mxu0
        %v820 = vmul.f32 %v816, 0.35355338
        %v821 = vmul.f32 %v818, 0.35355338
        %vm822 = vcmask 130048
        %v823 = vsel %vm822, %v820, -inf
        %824 = vmax.xlane.f32.xlu0 %v823
        %v825 = vpop.xlane.xlu0 %824
        %v826 = vsel %vm822, %v821, -inf
        %827 = vmax.xlane.f32.xlu0 %v826
        %v828 = vpop.xlane.xlu0 %827
        %v829 = vsub.f32 %v820, %v825
        %v830 = vsub.f32 %v821, %v828
        %v831 = vmul.f32 %v829, 1.442695
        %v832 = vpow.pop %v831
        %v833 = vmul.f32 %v830, 1.442695
        %v834 = vpow.pop %v833
        %v835 = vsel %vm822, %v832, 0.0
        %836 = vadd.xlane.f32.xlu0 %v835
        %v837 = vpop.xlane.xlu0 %836
        %v838 = vsel %vm822, %v834, 0.0
        %839 = vadd.xlane.f32.xlu0 %v838
        %v840 = vpop.xlane.xlu0 %839
        %v841 = vpack.c.bf16 %v834, %v832
        %842 = vrot.lane.b32.xlu0 %v796, 64
        %v843 = vpop.permute.xlu0 %842
        %v846 = vsel %vm822, %v841, 0
        %848 = vmatpush.bf16.msra.mxu0 0
        %849 = vmatpush.bf16.msra.mxu0 0
        %850 = vmatpush.bf16.msra.mxu0 0
        %851 = vmatpush.bf16.msra.mxu0 0
        %852 = vmatpush.bf16.msra.mxu0 0
        %853 = vmatpush.bf16.msra.mxu0 0
        %854 = vmatpush.bf16.msra.mxu0 0
        %855 = vmatpush.bf16.msra.mxu0 %v843
        %856 = vmatmul.bf16.gmra.mxu0 %v846
        %v857 = vpop.f32.mrf.mxu0
        %v858 = vadd.f32 0.0, %v857
        %v859 = vpop.f32.mrf.mxu0
        %v860 = vadd.f32 0.0, %v859
        %861 = vdwg.mxu0
        %v862 = vrcp.pop %v837
        %v863 = vrcp.pop %v840
        %v864 = vmul.f32 %v858, %v862
        %v865 = vmul.f32 %v860, %v863
        %v866 = vpack.c.bf16 %v865, %v864
        %867 = vrot.lane.b32.xlu0 %v791, 120
        %v868 = vpop.permute.xlu0 %867
        %869 = vrot.lane.b32.xlu0 %v796, 88
        %v870 = vpop.permute.xlu0 %869
        %v872 = vsel %vm799, %v868, 0
        %v875 = vsel %vm799, %v870, 0
        %877 = vmatpush.bf16.xpose.msra.mxu0 0
        %878 = vmatpush.bf16.xpose.msra.mxu0 0
        %879 = vmatpush.bf16.xpose.msra.mxu0 0
        %880 = vmatpush.bf16.xpose.msra.mxu0 0
        %881 = vmatpush.bf16.xpose.msra.mxu0 0
        %882 = vmatpush.bf16.xpose.msra.mxu0 0
        %883 = vmatpush.bf16.xpose.msra.mxu0 0
        %884 = vmatpush.bf16.xpose.msra.mxu0 %v875
        %885 = vmatmul.bf16.gmra.mxu0 %v872
        %v886 = vpop.f32.mrf.mxu0
        %v887 = vadd.f32 0.0, %v886
        %v888 = vpop.f32.mrf.mxu0
        %v889 = vadd.f32 0.0, %v888
        %890 = vdwg.mxu0
        %v891 = vmul.f32 %v887, 0.35355338
        %v892 = vmul.f32 %v889, 0.35355338
        %v893 = vsel %vm822, %v891, -inf
        %894 = vmax.xlane.f32.xlu0 %v893
        %v895 = vpop.xlane.xlu0 %894
        %v896 = vsel %vm822, %v892, -inf
        %897 = vmax.xlane.f32.xlu0 %v896
        %v898 = vpop.xlane.xlu0 %897
        %v899 = vsub.f32 %v891, %v895
        %v900 = vsub.f32 %v892, %v898
        %v901 = vmul.f32 %v899, 1.442695
        %v902 = vpow.pop %v901
        %v903 = vmul.f32 %v900, 1.442695
        %v904 = vpow.pop %v903
        %v905 = vsel %vm822, %v902, 0.0
        %906 = vadd.xlane.f32.xlu0 %v905
        %v907 = vpop.xlane.xlu0 %906
        %v908 = vsel %vm822, %v904, 0.0
        %909 = vadd.xlane.f32.xlu0 %v908
        %v910 = vpop.xlane.xlu0 %909
        %v911 = vpack.c.bf16 %v904, %v902
        %912 = vrot.lane.b32.xlu0 %v796, 56
        %v913 = vpop.permute.xlu0 %912
        %v916 = vsel %vm822, %v911, 0
        %918 = vmatpush.bf16.msra.mxu0 0
        %919 = vmatpush.bf16.msra.mxu0 0
        %920 = vmatpush.bf16.msra.mxu0 0
        %921 = vmatpush.bf16.msra.mxu0 0
        %922 = vmatpush.bf16.msra.mxu0 0
        %923 = vmatpush.bf16.msra.mxu0 0
        %924 = vmatpush.bf16.msra.mxu0 0
        %925 = vmatpush.bf16.msra.mxu0 %v913
        %926 = vmatmul.bf16.gmra.mxu0 %v916
        %v927 = vpop.f32.mrf.mxu0
        %v928 = vadd.f32 0.0, %v927
        %v929 = vpop.f32.mrf.mxu0
        %v930 = vadd.f32 0.0, %v929
        %931 = vdwg.mxu0
        %v932 = vrcp.pop %v907
        %v933 = vrcp.pop %v910
        %v934 = vmul.f32 %v928, %v932
        %v935 = vmul.f32 %v930, %v933
        %v936 = vpack.c.bf16 %v935, %v934
        %v938 = vsel %vm799, %v936, 0
        %vm940 = vcmask 1043456
        %v942 = vsel %vm940, %v784, 0
        %944 = vmatpush.bf16.msra.mxu0 0
        %945 = vmatpush.bf16.msra.mxu0 0
        %946 = vmatpush.bf16.msra.mxu0 0
        %947 = vmatpush.bf16.msra.mxu0 0
        %948 = vmatpush.bf16.msra.mxu0 0
        %949 = vmatpush.bf16.msra.mxu0 0
        %950 = vmatpush.bf16.msra.mxu0 0
        %951 = vmatpush.bf16.msra.mxu0 %v942
        %952 = vmatmul.bf16.gmra.mxu0 %v938
        %v953 = vpop.f32.mrf.mxu0
        %v954 = vadd.f32 0.0, %v953
        %v955 = vpop.f32.mrf.mxu0
        %v956 = vadd.f32 0.0, %v955
        %957 = vdwg.mxu0
        %v959 = vsel %vm799, %v866, 0
        %v962 = vsel %vm940, %v783, 0
        %964 = vmatpush.bf16.msra.mxu0 0
        %965 = vmatpush.bf16.msra.mxu0 0
        %966 = vmatpush.bf16.msra.mxu0 0
        %967 = vmatpush.bf16.msra.mxu0 0
        %968 = vmatpush.bf16.msra.mxu0 0
        %969 = vmatpush.bf16.msra.mxu0 0
        %970 = vmatpush.bf16.msra.mxu0 0
        %971 = vmatpush.bf16.msra.mxu0 %v962
        %972 = vmatmul.bf16.gmra.mxu0 %v959
        %v973 = vpop.f32.mrf.mxu0
        %v974 = vadd.f32 %v954, %v973
        %v975 = vpop.f32.mrf.mxu0
        %v976 = vadd.f32 %v956, %v975
        %977 = vdwg.mxu0
        %978 = vrot.lane.b32.xlu0 %v791, 112
        %v979 = vpop.permute.xlu0 %978
        %980 = vrot.lane.b32.xlu0 %v796, 80
        %v981 = vpop.permute.xlu0 %980
        %v983 = vsel %vm799, %v979, 0
        %v986 = vsel %vm799, %v981, 0
        %988 = vmatpush.bf16.xpose.msra.mxu0 0
        %989 = vmatpush.bf16.xpose.msra.mxu0 0
        %990 = vmatpush.bf16.xpose.msra.mxu0 0
        %991 = vmatpush.bf16.xpose.msra.mxu0 0
        %992 = vmatpush.bf16.xpose.msra.mxu0 0
        %993 = vmatpush.bf16.xpose.msra.mxu0 0
        %994 = vmatpush.bf16.xpose.msra.mxu0 0
        %995 = vmatpush.bf16.xpose.msra.mxu0 %v986
        %996 = vmatmul.bf16.gmra.mxu0 %v983
        %v997 = vpop.f32.mrf.mxu0
        %v998 = vadd.f32 0.0, %v997
        %v999 = vpop.f32.mrf.mxu0
        %v1000 = vadd.f32 0.0, %v999
        %1001 = vdwg.mxu0
        %v1002 = vmul.f32 %v998, 0.35355338
        %v1003 = vmul.f32 %v1000, 0.35355338
        %v1004 = vsel %vm822, %v1002, -inf
        %1005 = vmax.xlane.f32.xlu0 %v1004
        %v1006 = vpop.xlane.xlu0 %1005
        %v1007 = vsel %vm822, %v1003, -inf
        %1008 = vmax.xlane.f32.xlu0 %v1007
        %v1009 = vpop.xlane.xlu0 %1008
        %v1010 = vsub.f32 %v1002, %v1006
        %v1011 = vsub.f32 %v1003, %v1009
        %v1012 = vmul.f32 %v1010, 1.442695
        %v1013 = vpow.pop %v1012
        %v1014 = vmul.f32 %v1011, 1.442695
        %v1015 = vpow.pop %v1014
        %v1016 = vsel %vm822, %v1013, 0.0
        %1017 = vadd.xlane.f32.xlu0 %v1016
        %v1018 = vpop.xlane.xlu0 %1017
        %v1019 = vsel %vm822, %v1015, 0.0
        %1020 = vadd.xlane.f32.xlu0 %v1019
        %v1021 = vpop.xlane.xlu0 %1020
        %v1022 = vpack.c.bf16 %v1015, %v1013
        %1023 = vrot.lane.b32.xlu0 %v796, 48
        %v1024 = vpop.permute.xlu0 %1023
        %v1027 = vsel %vm822, %v1022, 0
        %1029 = vmatpush.bf16.msra.mxu0 0
        %1030 = vmatpush.bf16.msra.mxu0 0
        %1031 = vmatpush.bf16.msra.mxu0 0
        %1032 = vmatpush.bf16.msra.mxu0 0
        %1033 = vmatpush.bf16.msra.mxu0 0
        %1034 = vmatpush.bf16.msra.mxu0 0
        %1035 = vmatpush.bf16.msra.mxu0 0
        %1036 = vmatpush.bf16.msra.mxu0 %v1024
        %1037 = vmatmul.bf16.gmra.mxu0 %v1027
        %v1038 = vpop.f32.mrf.mxu0
        %v1039 = vadd.f32 0.0, %v1038
        %v1040 = vpop.f32.mrf.mxu0
        %v1041 = vadd.f32 0.0, %v1040
        %1042 = vdwg.mxu0
        %v1043 = vrcp.pop %v1018
        %v1044 = vrcp.pop %v1021
        %v1045 = vmul.f32 %v1039, %v1043
        %v1046 = vmul.f32 %v1041, %v1044
        %v1047 = vpack.c.bf16 %v1046, %v1045
        %v1049 = vsel %vm799, %v1047, 0
        %v1052 = vsel %vm940, %v785, 0
        %1054 = vmatpush.bf16.msra.mxu0 0
        %1055 = vmatpush.bf16.msra.mxu0 0
        %1056 = vmatpush.bf16.msra.mxu0 0
        %1057 = vmatpush.bf16.msra.mxu0 0
        %1058 = vmatpush.bf16.msra.mxu0 0
        %1059 = vmatpush.bf16.msra.mxu0 0
        %1060 = vmatpush.bf16.msra.mxu0 0
        %1061 = vmatpush.bf16.msra.mxu0 %v1052
        %1062 = vmatmul.bf16.gmra.mxu0 %v1049
        %v1063 = vpop.f32.mrf.mxu0
        %v1064 = vadd.f32 0.0, %v1063
        %v1065 = vpop.f32.mrf.mxu0
        %v1066 = vadd.f32 0.0, %v1065
        %1067 = vdwg.mxu0
        %v1068 = vadd.f32 %v974, %v1064
        %v1069 = vadd.f32 %v976, %v1066
        %1070 = vrot.lane.b32.xlu0 %v791, 104
        %v1071 = vpop.permute.xlu0 %1070
        %1072 = vrot.lane.b32.xlu0 %v796, 72
        %v1073 = vpop.permute.xlu0 %1072
        %v1075 = vsel %vm799, %v1071, 0
        %v1078 = vsel %vm799, %v1073, 0
        %1080 = vmatpush.bf16.xpose.msra.mxu0 0
        %1081 = vmatpush.bf16.xpose.msra.mxu0 0
        %1082 = vmatpush.bf16.xpose.msra.mxu0 0
        %1083 = vmatpush.bf16.xpose.msra.mxu0 0
        %1084 = vmatpush.bf16.xpose.msra.mxu0 0
        %1085 = vmatpush.bf16.xpose.msra.mxu0 0
        %1086 = vmatpush.bf16.xpose.msra.mxu0 0
        %1087 = vmatpush.bf16.xpose.msra.mxu0 %v1078
        %1088 = vmatmul.bf16.gmra.mxu0 %v1075
        %v1089 = vpop.f32.mrf.mxu0
        %v1090 = vadd.f32 0.0, %v1089
        %v1091 = vpop.f32.mrf.mxu0
        %v1092 = vadd.f32 0.0, %v1091
        %1093 = vdwg.mxu0
        %v1094 = vmul.f32 %v1090, 0.35355338
        %v1095 = vmul.f32 %v1092, 0.35355338
        %v1096 = vsel %vm822, %v1094, -inf
        %1097 = vmax.xlane.f32.xlu0 %v1096
        %v1098 = vpop.xlane.xlu0 %1097
        %v1099 = vsel %vm822, %v1095, -inf
        %1100 = vmax.xlane.f32.xlu0 %v1099
        %v1101 = vpop.xlane.xlu0 %1100
        %v1102 = vsub.f32 %v1094, %v1098
        %v1103 = vsub.f32 %v1095, %v1101
        %v1104 = vmul.f32 %v1102, 1.442695
        %v1105 = vpow.pop %v1104
        %v1106 = vmul.f32 %v1103, 1.442695
        %v1107 = vpow.pop %v1106
        %v1108 = vsel %vm822, %v1105, 0.0
        %1109 = vadd.xlane.f32.xlu0 %v1108
        %v1110 = vpop.xlane.xlu0 %1109
        %v1111 = vsel %vm822, %v1107, 0.0
        %1112 = vadd.xlane.f32.xlu0 %v1111
        %v1113 = vpop.xlane.xlu0 %1112
        %v1114 = vpack.c.bf16 %v1107, %v1105
        %1115 = vrot.lane.b32.xlu0 %v796, 40
        %v1116 = vpop.permute.xlu0 %1115
        %v1119 = vsel %vm822, %v1114, 0
        %1121 = vmatpush.bf16.msra.mxu0 0
        %1122 = vmatpush.bf16.msra.mxu0 0
        %1123 = vmatpush.bf16.msra.mxu0 0
        %1124 = vmatpush.bf16.msra.mxu0 0
        %1125 = vmatpush.bf16.msra.mxu0 0
        %1126 = vmatpush.bf16.msra.mxu0 0
        %1127 = vmatpush.bf16.msra.mxu0 0
        %1128 = vmatpush.bf16.msra.mxu0 %v1116
        %1129 = vmatmul.bf16.gmra.mxu0 %v1119
        %v1130 = vpop.f32.mrf.mxu0
        %v1131 = vadd.f32 0.0, %v1130
        %v1132 = vpop.f32.mrf.mxu0
        %v1133 = vadd.f32 0.0, %v1132
        %1134 = vdwg.mxu0
        %v1135 = vrcp.pop %v1110
        %v1136 = vrcp.pop %v1113
        %v1137 = vmul.f32 %v1131, %v1135
        %v1138 = vmul.f32 %v1133, %v1136
        %v1139 = vpack.c.bf16 %v1138, %v1137
        %v1141 = vsel %vm799, %v1139, 0
        %v1144 = vsel %vm940, %v786, 0
        %1146 = vmatpush.bf16.msra.mxu0 0
        %1147 = vmatpush.bf16.msra.mxu0 0
        %1148 = vmatpush.bf16.msra.mxu0 0
        %1149 = vmatpush.bf16.msra.mxu0 0
        %1150 = vmatpush.bf16.msra.mxu0 0
        %1151 = vmatpush.bf16.msra.mxu0 0
        %1152 = vmatpush.bf16.msra.mxu0 0
        %1153 = vmatpush.bf16.msra.mxu0 %v1144
        %1154 = vmatmul.bf16.gmra.mxu0 %v1141
        %v1155 = vpop.f32.mrf.mxu0
        %v1156 = vadd.f32 0.0, %v1155
        %v1157 = vpop.f32.mrf.mxu0
        %v1158 = vadd.f32 0.0, %v1157
        %1159 = vdwg.mxu0
        %v1160 = vadd.f32 %v1068, %v1156
        %v1161 = vadd.f32 %v1069, %v1158
        %s1162 = scalar_lea.vmem [#allocation13], 16
        %v1163 = vld [vmem:[%s1162] sm:$0xf]
        %v1164 = vld [vmem:[%s1162 + $0x4] sm:$0xf]
        %v1165 = vld [vmem:[%s1162 + $0x8] sm:$0xf]
        %v1166 = vld [vmem:[%s1162 + $0xc] sm:$0xf]
        %1167 = vrot.lane.b32.xlu0 %v791, 96
        %v1168 = vpop.permute.xlu0 %1167
        %v1171 = vunpack.c.l.b16 %v781
        %v1172 = vunpack.c.l.b16 %v782
        %v1173 = vpack.c.b16 %v1172, %v1171
        %1174 = vrot.lane.b32.xlu0 %v1173, 96
        %v1175 = vpop.permute.xlu0 %1174
        %v1177 = vsel %vm799, %v1168, 0
        %v1180 = vsel %vm799, %v1175, 0
        %1182 = vmatpush.bf16.xpose.msra.mxu0 0
        %1183 = vmatpush.bf16.xpose.msra.mxu0 0
        %1184 = vmatpush.bf16.xpose.msra.mxu0 0
        %1185 = vmatpush.bf16.xpose.msra.mxu0 0
        %1186 = vmatpush.bf16.xpose.msra.mxu0 0
        %1187 = vmatpush.bf16.xpose.msra.mxu0 0
        %1188 = vmatpush.bf16.xpose.msra.mxu0 0
        %1189 = vmatpush.bf16.xpose.msra.mxu0 %v1180
        %1190 = vmatmul.bf16.gmra.mxu0 %v1177
        %v1191 = vpop.f32.mrf.mxu0
        %v1192 = vadd.f32 0.0, %v1191
        %v1193 = vpop.f32.mrf.mxu0
        %v1194 = vadd.f32 0.0, %v1193
        %1195 = vdwg.mxu0
        %v1196 = vmul.f32 %v1192, 0.35355338
        %v1197 = vmul.f32 %v1194, 0.35355338
        %v1198 = vsel %vm822, %v1196, -inf
        %1199 = vmax.xlane.f32.xlu0 %v1198
        %v1200 = vpop.xlane.xlu0 %1199
        %v1201 = vsel %vm822, %v1197, -inf
        %1202 = vmax.xlane.f32.xlu0 %v1201
        %v1203 = vpop.xlane.xlu0 %1202
        %v1204 = vsub.f32 %v1196, %v1200
        %v1205 = vsub.f32 %v1197, %v1203
        %v1206 = vmul.f32 %v1204, 1.442695
        %v1207 = vpow.pop %v1206
        %v1208 = vmul.f32 %v1205, 1.442695
        %v1209 = vpow.pop %v1208
        %v1210 = vsel %vm822, %v1207, 0.0
        %1211 = vadd.xlane.f32.xlu0 %v1210
        %v1212 = vpop.xlane.xlu0 %1211
        %v1213 = vsel %vm822, %v1209, 0.0
        %1214 = vadd.xlane.f32.xlu0 %v1213
        %v1215 = vpop.xlane.xlu0 %1214
        %v1216 = vpack.c.bf16 %v1209, %v1207
        %1217 = vrot.lane.b32.xlu0 %v1173, 64
        %v1218 = vpop.permute.xlu0 %1217
        %v1221 = vsel %vm822, %v1216, 0
        %1223 = vmatpush.bf16.msra.mxu0 0
        %1224 = vmatpush.bf16.msra.mxu0 0
        %1225 = vmatpush.bf16.msra.mxu0 0
        %1226 = vmatpush.bf16.msra.mxu0 0
        %1227 = vmatpush.bf16.msra.mxu0 0
        %1228 = vmatpush.bf16.msra.mxu0 0
        %1229 = vmatpush.bf16.msra.mxu0 0
        %1230 = vmatpush.bf16.msra.mxu0 %v1218
        %1231 = vmatmul.bf16.gmra.mxu0 %v1221
        %v1232 = vpop.f32.mrf.mxu0
        %v1233 = vadd.f32 0.0, %v1232
        %v1234 = vpop.f32.mrf.mxu0
        %v1235 = vadd.f32 0.0, %v1234
        %1236 = vdwg.mxu0
        %v1237 = vrcp.pop %v1212
        %v1238 = vrcp.pop %v1215
        %v1239 = vmul.f32 %v1233, %v1237
        %v1240 = vmul.f32 %v1235, %v1238
        %v1241 = vpack.c.bf16 %v1240, %v1239
        %1242 = vrot.lane.b32.xlu0 %v791, 88
        %v1243 = vpop.permute.xlu0 %1242
        %1244 = vrot.lane.b32.xlu0 %v1173, 88
        %v1245 = vpop.permute.xlu0 %1244
        %v1247 = vsel %vm799, %v1243, 0
        %v1250 = vsel %vm799, %v1245, 0
        %1252 = vmatpush.bf16.xpose.msra.mxu0 0
        %1253 = vmatpush.bf16.xpose.msra.mxu0 0
        %1254 = vmatpush.bf16.xpose.msra.mxu0 0
        %1255 = vmatpush.bf16.xpose.msra.mxu0 0
        %1256 = vmatpush.bf16.xpose.msra.mxu0 0
        %1257 = vmatpush.bf16.xpose.msra.mxu0 0
        %1258 = vmatpush.bf16.xpose.msra.mxu0 0
        %1259 = vmatpush.bf16.xpose.msra.mxu0 %v1250
        %1260 = vmatmul.bf16.gmra.mxu0 %v1247
        %v1261 = vpop.f32.mrf.mxu0
        %v1262 = vadd.f32 0.0, %v1261
        %v1263 = vpop.f32.mrf.mxu0
        %v1264 = vadd.f32 0.0, %v1263
        %1265 = vdwg.mxu0
        %v1266 = vmul.f32 %v1262, 0.35355338
        %v1267 = vmul.f32 %v1264, 0.35355338
        %v1268 = vsel %vm822, %v1266, -inf
        %1269 = vmax.xlane.f32.xlu0 %v1268
        %v1270 = vpop.xlane.xlu0 %1269
        %v1271 = vsel %vm822, %v1267, -inf
        %1272 = vmax.xlane.f32.xlu0 %v1271
        %v1273 = vpop.xlane.xlu0 %1272
        %v1274 = vsub.f32 %v1266, %v1270
        %v1275 = vsub.f32 %v1267, %v1273
        %v1276 = vmul.f32 %v1274, 1.442695
        %v1277 = vpow.pop %v1276
        %v1278 = vmul.f32 %v1275, 1.442695
        %v1279 = vpow.pop %v1278
        %v1280 = vsel %vm822, %v1277, 0.0
        %1281 = vadd.xlane.f32.xlu0 %v1280
        %v1282 = vpop.xlane.xlu0 %1281
        %v1283 = vsel %vm822, %v1279, 0.0
        %1284 = vadd.xlane.f32.xlu0 %v1283
        %v1285 = vpop.xlane.xlu0 %1284
        %v1286 = vpack.c.bf16 %v1279, %v1277
        %1287 = vrot.lane.b32.xlu0 %v1173, 56
        %v1288 = vpop.permute.xlu0 %1287
        %v1291 = vsel %vm822, %v1286, 0
        %1293 = vmatpush.bf16.msra.mxu0 0
        %1294 = vmatpush.bf16.msra.mxu0 0
        %1295 = vmatpush.bf16.msra.mxu0 0
        %1296 = vmatpush.bf16.msra.mxu0 0
        %1297 = vmatpush.bf16.msra.mxu0 0
        %1298 = vmatpush.bf16.msra.mxu0 0
        %1299 = vmatpush.bf16.msra.mxu0 0
        %1300 = vmatpush.bf16.msra.mxu0 %v1288
        %1301 = vmatmul.bf16.gmra.mxu0 %v1291
        %v1302 = vpop.f32.mrf.mxu0
        %v1303 = vadd.f32 0.0, %v1302
        %v1304 = vpop.f32.mrf.mxu0
        %v1305 = vadd.f32 0.0, %v1304
        %1306 = vdwg.mxu0
        %v1307 = vrcp.pop %v1282
        %v1308 = vrcp.pop %v1285
        %v1309 = vmul.f32 %v1303, %v1307
        %v1310 = vmul.f32 %v1305, %v1308
        %v1311 = vpack.c.bf16 %v1310, %v1309
        %v1313 = vsel %vm799, %v1311, 0
        %v1316 = vsel %vm940, %v1164, 0
        %1318 = vmatpush.bf16.msra.mxu0 0
        %1319 = vmatpush.bf16.msra.mxu0 0
        %1320 = vmatpush.bf16.msra.mxu0 0
        %1321 = vmatpush.bf16.msra.mxu0 0
        %1322 = vmatpush.bf16.msra.mxu0 0
        %1323 = vmatpush.bf16.msra.mxu0 0
        %1324 = vmatpush.bf16.msra.mxu0 0
        %1325 = vmatpush.bf16.msra.mxu0 %v1316
        %1326 = vmatmul.bf16.gmra.mxu0 %v1313
        %v1327 = vpop.f32.mrf.mxu0
        %v1328 = vadd.f32 0.0, %v1327
        %v1329 = vpop.f32.mrf.mxu0
        %v1330 = vadd.f32 0.0, %v1329
        %1331 = vdwg.mxu0
        %v1333 = vsel %vm799, %v1241, 0
        %v1336 = vsel %vm940, %v1163, 0
        %1338 = vmatpush.bf16.msra.mxu0 0
        %1339 = vmatpush.bf16.msra.mxu0 0
        %1340 = vmatpush.bf16.msra.mxu0 0
        %1341 = vmatpush.bf16.msra.mxu0 0
        %1342 = vmatpush.bf16.msra.mxu0 0
        %1343 = vmatpush.bf16.msra.mxu0 0
        %1344 = vmatpush.bf16.msra.mxu0 0
        %1345 = vmatpush.bf16.msra.mxu0 %v1336
        %1346 = vmatmul.bf16.gmra.mxu0 %v1333
        %v1347 = vpop.f32.mrf.mxu0
        %v1348 = vadd.f32 %v1328, %v1347
        %v1349 = vpop.f32.mrf.mxu0
        %v1350 = vadd.f32 %v1330, %v1349
        %1351 = vdwg.mxu0
        %1352 = vrot.lane.b32.xlu0 %v791, 80
        %v1353 = vpop.permute.xlu0 %1352
        %1354 = vrot.lane.b32.xlu0 %v1173, 80
        %v1355 = vpop.permute.xlu0 %1354
        %v1357 = vsel %vm799, %v1353, 0
        %v1360 = vsel %vm799, %v1355, 0
        %1362 = vmatpush.bf16.xpose.msra.mxu0 0
        %1363 = vmatpush.bf16.xpose.msra.mxu0 0
        %1364 = vmatpush.bf16.xpose.msra.mxu0 0
        %1365 = vmatpush.bf16.xpose.msra.mxu0 0
        %1366 = vmatpush.bf16.xpose.msra.mxu0 0
        %1367 = vmatpush.bf16.xpose.msra.mxu0 0
        %1368 = vmatpush.bf16.xpose.msra.mxu0 0
        %1369 = vmatpush.bf16.xpose.msra.mxu0 %v1360
        %1370 = vmatmul.bf16.gmra.mxu0 %v1357
        %v1371 = vpop.f32.mrf.mxu0
        %v1372 = vadd.f32 0.0, %v1371
        %v1373 = vpop.f32.mrf.mxu0
        %v1374 = vadd.f32 0.0, %v1373
        %1375 = vdwg.mxu0
        %v1376 = vmul.f32 %v1372, 0.35355338
        %v1377 = vmul.f32 %v1374, 0.35355338
        %v1378 = vsel %vm822, %v1376, -inf
        %1379 = vmax.xlane.f32.xlu0 %v1378
        %v1380 = vpop.xlane.xlu0 %1379
        %v1381 = vsel %vm822, %v1377, -inf
        %1382 = vmax.xlane.f32.xlu0 %v1381
        %v1383 = vpop.xlane.xlu0 %1382
        %v1384 = vsub.f32 %v1376, %v1380
        %v1385 = vsub.f32 %v1377, %v1383
        %v1386 = vmul.f32 %v1384, 1.442695
        %v1387 = vpow.pop %v1386
        %v1388 = vmul.f32 %v1385, 1.442695
        %v1389 = vpow.pop %v1388
        %v1390 = vsel %vm822, %v1387, 0.0
        %1391 = vadd.xlane.f32.xlu0 %v1390
        %v1392 = vpop.xlane.xlu0 %1391
        %v1393 = vsel %vm822, %v1389, 0.0
        %1394 = vadd.xlane.f32.xlu0 %v1393
        %v1395 = vpop.xlane.xlu0 %1394
        %v1396 = vpack.c.bf16 %v1389, %v1387
        %1397 = vrot.lane.b32.xlu0 %v1173, 48
        %v1398 = vpop.permute.xlu0 %1397
        %v1401 = vsel %vm822, %v1396, 0
        %1403 = vmatpush.bf16.msra.mxu0 0
        %1404 = vmatpush.bf16.msra.mxu0 0
        %1405 = vmatpush.bf16.msra.mxu0 0
        %1406 = vmatpush.bf16.msra.mxu0 0
        %1407 = vmatpush.bf16.msra.mxu0 0
        %1408 = vmatpush.bf16.msra.mxu0 0
        %1409 = vmatpush.bf16.msra.mxu0 0
        %1410 = vmatpush.bf16.msra.mxu0 %v1398
        %1411 = vmatmul.bf16.gmra.mxu0 %v1401
        %v1412 = vpop.f32.mrf.mxu0
        %v1413 = vadd.f32 0.0, %v1412
        %v1414 = vpop.f32.mrf.mxu0
        %v1415 = vadd.f32 0.0, %v1414
        %1416 = vdwg.mxu0
        %v1417 = vrcp.pop %v1392
        %v1418 = vrcp.pop %v1395
        %v1419 = vmul.f32 %v1413, %v1417
        %v1420 = vmul.f32 %v1415, %v1418
        %v1421 = vpack.c.bf16 %v1420, %v1419
        %v1423 = vsel %vm799, %v1421, 0
        %v1426 = vsel %vm940, %v1165, 0
        %1428 = vmatpush.bf16.msra.mxu0 0
        %1429 = vmatpush.bf16.msra.mxu0 0
        %1430 = vmatpush.bf16.msra.mxu0 0
        %1431 = vmatpush.bf16.msra.mxu0 0
        %1432 = vmatpush.bf16.msra.mxu0 0
        %1433 = vmatpush.bf16.msra.mxu0 0
        %1434 = vmatpush.bf16.msra.mxu0 0
        %1435 = vmatpush.bf16.msra.mxu0 %v1426
        %1436 = vmatmul.bf16.gmra.mxu0 %v1423
        %v1437 = vpop.f32.mrf.mxu0
        %v1438 = vadd.f32 0.0, %v1437
        %v1439 = vpop.f32.mrf.mxu0
        %v1440 = vadd.f32 0.0, %v1439
        %1441 = vdwg.mxu0
        %v1442 = vadd.f32 %v1348, %v1438
        %v1443 = vadd.f32 %v1350, %v1440
        %1444 = vrot.lane.b32.xlu0 %v791, 72
        %v1445 = vpop.permute.xlu0 %1444
        %1446 = vrot.lane.b32.xlu0 %v1173, 72
        %v1447 = vpop.permute.xlu0 %1446
        %v1449 = vsel %vm799, %v1445, 0
        %v1452 = vsel %vm799, %v1447, 0
        %1454 = vmatpush.bf16.xpose.msra.mxu0 0
        %1455 = vmatpush.bf16.xpose.msra.mxu0 0
        %1456 = vmatpush.bf16.xpose.msra.mxu0 0
        %1457 = vmatpush.bf16.xpose.msra.mxu0 0
        %1458 = vmatpush.bf16.xpose.msra.mxu0 0
        %1459 = vmatpush.bf16.xpose.msra.mxu0 0
        %1460 = vmatpush.bf16.xpose.msra.mxu0 0
        %1461 = vmatpush.bf16.xpose.msra.mxu0 %v1452
        %1462 = vmatmul.bf16.gmra.mxu0 %v1449
        %v1463 = vpop.f32.mrf.mxu0
        %v1464 = vadd.f32 0.0, %v1463
        %v1465 = vpop.f32.mrf.mxu0
        %v1466 = vadd.f32 0.0, %v1465
        %1467 = vdwg.mxu0
        %v1468 = vmul.f32 %v1464, 0.35355338
        %v1469 = vmul.f32 %v1466, 0.35355338
        %v1470 = vsel %vm822, %v1468, -inf
        %1471 = vmax.xlane.f32.xlu0 %v1470
        %v1472 = vpop.xlane.xlu0 %1471
        %v1473 = vsel %vm822, %v1469, -inf
        %1474 = vmax.xlane.f32.xlu0 %v1473
        %v1475 = vpop.xlane.xlu0 %1474
        %v1476 = vsub.f32 %v1468, %v1472
        %v1477 = vsub.f32 %v1469, %v1475
        %v1478 = vmul.f32 %v1476, 1.442695
        %v1479 = vpow.pop %v1478
        %v1480 = vmul.f32 %v1477, 1.442695
        %v1481 = vpow.pop %v1480
        %v1482 = vsel %vm822, %v1479, 0.0
        %1483 = vadd.xlane.f32.xlu0 %v1482
        %v1484 = vpop.xlane.xlu0 %1483
        %v1485 = vsel %vm822, %v1481, 0.0
        %1486 = vadd.xlane.f32.xlu0 %v1485
        %v1487 = vpop.xlane.xlu0 %1486
        %v1488 = vpack.c.bf16 %v1481, %v1479
        %1489 = vrot.lane.b32.xlu0 %v1173, 40
        %v1490 = vpop.permute.xlu0 %1489
        %v1493 = vsel %vm822, %v1488, 0
        %1495 = vmatpush.bf16.msra.mxu0 0
        %1496 = vmatpush.bf16.msra.mxu0 0
        %1497 = vmatpush.bf16.msra.mxu0 0
        %1498 = vmatpush.bf16.msra.mxu0 0
        %1499 = vmatpush.bf16.msra.mxu0 0
        %1500 = vmatpush.bf16.msra.mxu0 0
        %1501 = vmatpush.bf16.msra.mxu0 0
        %1502 = vmatpush.bf16.msra.mxu0 %v1490
        %1503 = vmatmul.bf16.gmra.mxu0 %v1493
        %v1504 = vpop.f32.mrf.mxu0
        %v1505 = vadd.f32 0.0, %v1504
        %v1506 = vpop.f32.mrf.mxu0
        %v1507 = vadd.f32 0.0, %v1506
        %1508 = vdwg.mxu0
        %v1509 = vrcp.pop %v1484
        %v1510 = vrcp.pop %v1487
        %v1511 = vmul.f32 %v1505, %v1509
        %v1512 = vmul.f32 %v1507, %v1510
        %v1513 = vpack.c.bf16 %v1512, %v1511
        %v1515 = vsel %vm799, %v1513, 0
        %v1518 = vsel %vm940, %v1166, 0
        %1520 = vmatpush.bf16.msra.mxu0 0
        %1521 = vmatpush.bf16.msra.mxu0 0
        %1522 = vmatpush.bf16.msra.mxu0 0
        %1523 = vmatpush.bf16.msra.mxu0 0
        %1524 = vmatpush.bf16.msra.mxu0 0
        %1525 = vmatpush.bf16.msra.mxu0 0
        %1526 = vmatpush.bf16.msra.mxu0 0
        %1527 = vmatpush.bf16.msra.mxu0 %v1518
        %1528 = vmatmul.bf16.gmra.mxu0 %v1515
        %v1529 = vpop.f32.mrf.mxu0
        %v1530 = vadd.f32 0.0, %v1529
        %v1531 = vpop.f32.mrf.mxu0
        %v1532 = vadd.f32 0.0, %v1531
        %1533 = vdwg.mxu0
        %v1534 = vadd.f32 %v1442, %v1530
        %v1535 = vadd.f32 %v1443, %v1532
        %v1536 = vadd.f32 %v1160, %v1534
        %v1537 = vadd.f32 %v1161, %v1535
        %v1538 = vld [vmem:[%s10] sm:$0x1]
        %v1540 = vperm.slane %v1538, 0
        %v1542 = vadd.f32 %v1536, %v1540
        %v1543 = vadd.f32 %v1537, %v1540
        %s1544 = scalar_lea.vmem [#allocation13], 32
        %v1545 = vld [vmem:[%s1544] sm:$0xf]
        %v1546 = vld [vmem:[%s1544 + $0x4] sm:$0xf]
        %v1547 = vld [vmem:[%s1544 + $0x8] sm:$0xf]
        %v1548 = vld [vmem:[%s1544 + $0xc] sm:$0xf]
        %1549 = vrot.lane.b32.xlu0 %v791, 64
        %v1550 = vpop.permute.xlu0 %1549
        %v1552 = vsel %vm799, %v796, 0
        %v1555 = vsel %vm799, %v1550, 0
        %1557 = vmatpush.bf16.xpose.msra.mxu0 0
        %1558 = vmatpush.bf16.xpose.msra.mxu0 0
        %1559 = vmatpush.bf16.xpose.msra.mxu0 0
        %1560 = vmatpush.bf16.xpose.msra.mxu0 0
        %1561 = vmatpush.bf16.xpose.msra.mxu0 0
        %1562 = vmatpush.bf16.xpose.msra.mxu0 0
        %1563 = vmatpush.bf16.xpose.msra.mxu0 0
        %1564 = vmatpush.bf16.xpose.msra.mxu0 %v1555
        %1565 = vmatmul.bf16.gmra.mxu0 %v1552
        %v1566 = vpop.f32.mrf.mxu0
        %v1567 = vadd.f32 0.0, %v1566
        %v1568 = vpop.f32.mrf.mxu0
        %v1569 = vadd.f32 0.0, %v1568
        %1570 = vdwg.mxu0
        %v1571 = vmul.f32 %v1567, 0.35355338
        %v1572 = vmul.f32 %v1569, 0.35355338
        %v1573 = vsel %vm822, %v1571, -inf
        %1574 = vmax.xlane.f32.xlu0 %v1573
        %v1575 = vpop.xlane.xlu0 %1574
        %v1576 = vsel %vm822, %v1572, -inf
        %1577 = vmax.xlane.f32.xlu0 %v1576
        %v1578 = vpop.xlane.xlu0 %1577
        %v1579 = vsub.f32 %v1571, %v1575
        %v1580 = vsub.f32 %v1572, %v1578
        %v1581 = vmul.f32 %v1579, 1.442695
        %v1582 = vpow.pop %v1581
        %v1583 = vmul.f32 %v1580, 1.442695
        %v1584 = vpow.pop %v1583
        %v1585 = vsel %vm822, %v1582, 0.0
        %1586 = vadd.xlane.f32.xlu0 %v1585
        %v1587 = vpop.xlane.xlu0 %1586
        %v1588 = vsel %vm822, %v1584, 0.0
        %1589 = vadd.xlane.f32.xlu0 %v1588
        %v1590 = vpop.xlane.xlu0 %1589
        %v1591 = vpack.c.bf16 %v1584, %v1582
        %1592 = vrot.lane.b32.xlu0 %v791, 32
        %v1593 = vpop.permute.xlu0 %1592
        %v1596 = vsel %vm822, %v1591, 0
        %1598 = vmatpush.bf16.msra.mxu0 0
        %1599 = vmatpush.bf16.msra.mxu0 0
        %1600 = vmatpush.bf16.msra.mxu0 0
        %1601 = vmatpush.bf16.msra.mxu0 0
        %1602 = vmatpush.bf16.msra.mxu0 0
        %1603 = vmatpush.bf16.msra.mxu0 0
        %1604 = vmatpush.bf16.msra.mxu0 0
        %1605 = vmatpush.bf16.msra.mxu0 %v1593
        %1606 = vmatmul.bf16.gmra.mxu0 %v1596
        %v1607 = vpop.f32.mrf.mxu0
        %v1608 = vadd.f32 0.0, %v1607
        %v1609 = vpop.f32.mrf.mxu0
        %v1610 = vadd.f32 0.0, %v1609
        %1611 = vdwg.mxu0
        %v1612 = vrcp.pop %v1587
        %v1613 = vrcp.pop %v1590
        %v1614 = vmul.f32 %v1608, %v1612
        %v1615 = vmul.f32 %v1610, %v1613
        %v1616 = vpack.c.bf16 %v1615, %v1614
        %1617 = vrot.lane.b32.xlu0 %v796, 120
        %v1618 = vpop.permute.xlu0 %1617
        %1619 = vrot.lane.b32.xlu0 %v791, 56
        %v1620 = vpop.permute.xlu0 %1619
        %v1622 = vsel %vm799, %v1618, 0
        %v1625 = vsel %vm799, %v1620, 0
        %1627 = vmatpush.bf16.xpose.msra.mxu0 0
        %1628 = vmatpush.bf16.xpose.msra.mxu0 0
        %1629 = vmatpush.bf16.xpose.msra.mxu0 0
        %1630 = vmatpush.bf16.xpose.msra.mxu0 0
        %1631 = vmatpush.bf16.xpose.msra.mxu0 0
        %1632 = vmatpush.bf16.xpose.msra.mxu0 0
        %1633 = vmatpush.bf16.xpose.msra.mxu0 0
        %1634 = vmatpush.bf16.xpose.msra.mxu0 %v1625
        %1635 = vmatmul.bf16.gmra.mxu0 %v1622
        %v1636 = vpop.f32.mrf.mxu0
        %v1637 = vadd.f32 0.0, %v1636
        %v1638 = vpop.f32.mrf.mxu0
        %v1639 = vadd.f32 0.0, %v1638
        %1640 = vdwg.mxu0
        %v1641 = vmul.f32 %v1637, 0.35355338
        %v1642 = vmul.f32 %v1639, 0.35355338
        %v1643 = vsel %vm822, %v1641, -inf
        %1644 = vmax.xlane.f32.xlu0 %v1643
        %v1645 = vpop.xlane.xlu0 %1644
        %v1646 = vsel %vm822, %v1642, -inf
        %1647 = vmax.xlane.f32.xlu0 %v1646
        %v1648 = vpop.xlane.xlu0 %1647
        %v1649 = vsub.f32 %v1641, %v1645
        %v1650 = vsub.f32 %v1642, %v1648
        %v1651 = vmul.f32 %v1649, 1.442695
        %v1652 = vpow.pop %v1651
        %v1653 = vmul.f32 %v1650, 1.442695
        %v1654 = vpow.pop %v1653
        %v1655 = vsel %vm822, %v1652, 0.0
        %1656 = vadd.xlane.f32.xlu0 %v1655
        %v1657 = vpop.xlane.xlu0 %1656
        %v1658 = vsel %vm822, %v1654, 0.0
        %1659 = vadd.xlane.f32.xlu0 %v1658
        %v1660 = vpop.xlane.xlu0 %1659
        %v1661 = vpack.c.bf16 %v1654, %v1652
        %1662 = vrot.lane.b32.xlu0 %v791, 24
        %v1663 = vpop.permute.xlu0 %1662
        %v1666 = vsel %vm822, %v1661, 0
        %1668 = vmatpush.bf16.msra.mxu0 0
        %1669 = vmatpush.bf16.msra.mxu0 0
        %1670 = vmatpush.bf16.msra.mxu0 0
        %1671 = vmatpush.bf16.msra.mxu0 0
        %1672 = vmatpush.bf16.msra.mxu0 0
        %1673 = vmatpush.bf16.msra.mxu0 0
        %1674 = vmatpush.bf16.msra.mxu0 0
        %1675 = vmatpush.bf16.msra.mxu0 %v1663
        %1676 = vmatmul.bf16.gmra.mxu0 %v1666
        %v1677 = vpop.f32.mrf.mxu0
        %v1678 = vadd.f32 0.0, %v1677
        %v1679 = vpop.f32.mrf.mxu0
        %v1680 = vadd.f32 0.0, %v1679
        %1681 = vdwg.mxu0
        %v1682 = vrcp.pop %v1657
        %v1683 = vrcp.pop %v1660
        %v1684 = vmul.f32 %v1678, %v1682
        %v1685 = vmul.f32 %v1680, %v1683
        %v1686 = vpack.c.bf16 %v1685, %v1684
        %v1688 = vsel %vm799, %v1686, 0
        %v1691 = vsel %vm940, %v1546, 0
        %1693 = vmatpush.bf16.msra.mxu0 0
        %1694 = vmatpush.bf16.msra.mxu0 0
        %1695 = vmatpush.bf16.msra.mxu0 0
        %1696 = vmatpush.bf16.msra.mxu0 0
        %1697 = vmatpush.bf16.msra.mxu0 0
        %1698 = vmatpush.bf16.msra.mxu0 0
        %1699 = vmatpush.bf16.msra.mxu0 0
        %1700 = vmatpush.bf16.msra.mxu0 %v1691
        %1701 = vmatmul.bf16.gmra.mxu0 %v1688
        %v1702 = vpop.f32.mrf.mxu0
        %v1703 = vadd.f32 0.0, %v1702
        %v1704 = vpop.f32.mrf.mxu0
        %v1705 = vadd.f32 0.0, %v1704
        %1706 = vdwg.mxu0
        %v1708 = vsel %vm799, %v1616, 0
        %v1711 = vsel %vm940, %v1545, 0
        %1713 = vmatpush.bf16.msra.mxu0 0
        %1714 = vmatpush.bf16.msra.mxu0 0
        %1715 = vmatpush.bf16.msra.mxu0 0
        %1716 = vmatpush.bf16.msra.mxu0 0
        %1717 = vmatpush.bf16.msra.mxu0 0
        %1718 = vmatpush.bf16.msra.mxu0 0
        %1719 = vmatpush.bf16.msra.mxu0 0
        %1720 = vmatpush.bf16.msra.mxu0 %v1711
        %1721 = vmatmul.bf16.gmra.mxu0 %v1708
        %v1722 = vpop.f32.mrf.mxu0
        %v1723 = vadd.f32 %v1703, %v1722
        %v1724 = vpop.f32.mrf.mxu0
        %v1725 = vadd.f32 %v1705, %v1724
        %1726 = vdwg.mxu0
        %1727 = vrot.lane.b32.xlu0 %v796, 112
        %v1728 = vpop.permute.xlu0 %1727
        %1729 = vrot.lane.b32.xlu0 %v791, 48
        %v1730 = vpop.permute.xlu0 %1729
        %v1732 = vsel %vm799, %v1728, 0
        %v1735 = vsel %vm799, %v1730, 0
        %1737 = vmatpush.bf16.xpose.msra.mxu0 0
        %1738 = vmatpush.bf16.xpose.msra.mxu0 0
        %1739 = vmatpush.bf16.xpose.msra.mxu0 0
        %1740 = vmatpush.bf16.xpose.msra.mxu0 0
        %1741 = vmatpush.bf16.xpose.msra.mxu0 0
        %1742 = vmatpush.bf16.xpose.msra.mxu0 0
        %1743 = vmatpush.bf16.xpose.msra.mxu0 0
        %1744 = vmatpush.bf16.xpose.msra.mxu0 %v1735
        %1745 = vmatmul.bf16.gmra.mxu0 %v1732
        %v1746 = vpop.f32.mrf.mxu0
        %v1747 = vadd.f32 0.0, %v1746
        %v1748 = vpop.f32.mrf.mxu0
        %v1749 = vadd.f32 0.0, %v1748
        %1750 = vdwg.mxu0
        %v1751 = vmul.f32 %v1747, 0.35355338
        %v1752 = vmul.f32 %v1749, 0.35355338
        %v1753 = vsel %vm822, %v1751, -inf
        %1754 = vmax.xlane.f32.xlu0 %v1753
        %v1755 = vpop.xlane.xlu0 %1754
        %v1756 = vsel %vm822, %v1752, -inf
        %1757 = vmax.xlane.f32.xlu0 %v1756
        %v1758 = vpop.xlane.xlu0 %1757
        %v1759 = vsub.f32 %v1751, %v1755
        %v1760 = vsub.f32 %v1752, %v1758
        %v1761 = vmul.f32 %v1759, 1.442695
        %v1762 = vpow.pop %v1761
        %v1763 = vmul.f32 %v1760, 1.442695
        %v1764 = vpow.pop %v1763
        %v1765 = vsel %vm822, %v1762, 0.0
        %1766 = vadd.xlane.f32.xlu0 %v1765
        %v1767 = vpop.xlane.xlu0 %1766
        %v1768 = vsel %vm822, %v1764, 0.0
        %1769 = vadd.xlane.f32.xlu0 %v1768
        %v1770 = vpop.xlane.xlu0 %1769
        %v1771 = vpack.c.bf16 %v1764, %v1762
        %1772 = vrot.lane.b32.xlu0 %v791, 16
        %v1773 = vpop.permute.xlu0 %1772
        %v1776 = vsel %vm822, %v1771, 0
        %1778 = vmatpush.bf16.msra.mxu0 0
        %1779 = vmatpush.bf16.msra.mxu0 0
        %1780 = vmatpush.bf16.msra.mxu0 0
        %1781 = vmatpush.bf16.msra.mxu0 0
        %1782 = vmatpush.bf16.msra.mxu0 0
        %1783 = vmatpush.bf16.msra.mxu0 0
        %1784 = vmatpush.bf16.msra.mxu0 0
        %1785 = vmatpush.bf16.msra.mxu0 %v1773
        %1786 = vmatmul.bf16.gmra.mxu0 %v1776
        %v1787 = vpop.f32.mrf.mxu0
        %v1788 = vadd.f32 0.0, %v1787
        %v1789 = vpop.f32.mrf.mxu0
        %v1790 = vadd.f32 0.0, %v1789
        %1791 = vdwg.mxu0
        %v1792 = vrcp.pop %v1767
        %v1793 = vrcp.pop %v1770
        %v1794 = vmul.f32 %v1788, %v1792
        %v1795 = vmul.f32 %v1790, %v1793
        %v1796 = vpack.c.bf16 %v1795, %v1794
        %v1798 = vsel %vm799, %v1796, 0
        %v1801 = vsel %vm940, %v1547, 0
        %1803 = vmatpush.bf16.msra.mxu0 0
        %1804 = vmatpush.bf16.msra.mxu0 0
        %1805 = vmatpush.bf16.msra.mxu0 0
        %1806 = vmatpush.bf16.msra.mxu0 0
        %1807 = vmatpush.bf16.msra.mxu0 0
        %1808 = vmatpush.bf16.msra.mxu0 0
        %1809 = vmatpush.bf16.msra.mxu0 0
        %1810 = vmatpush.bf16.msra.mxu0 %v1801
        %1811 = vmatmul.bf16.gmra.mxu0 %v1798
        %v1812 = vpop.f32.mrf.mxu0
        %v1813 = vadd.f32 0.0, %v1812
        %v1814 = vpop.f32.mrf.mxu0
        %v1815 = vadd.f32 0.0, %v1814
        %1816 = vdwg.mxu0
        %v1817 = vadd.f32 %v1723, %v1813
        %v1818 = vadd.f32 %v1725, %v1815
        %1819 = vrot.lane.b32.xlu0 %v796, 104
        %v1820 = vpop.permute.xlu0 %1819
        %1821 = vrot.lane.b32.xlu0 %v791, 40
        %v1822 = vpop.permute.xlu0 %1821
        %v1824 = vsel %vm799, %v1820, 0
        %v1827 = vsel %vm799, %v1822, 0
        %1829 = vmatpush.bf16.xpose.msra.mxu0 0
        %1830 = vmatpush.bf16.xpose.msra.mxu0 0
        %1831 = vmatpush.bf16.xpose.msra.mxu0 0
        %1832 = vmatpush.bf16.xpose.msra.mxu0 0
        %1833 = vmatpush.bf16.xpose.msra.mxu0 0
        %1834 = vmatpush.bf16.xpose.msra.mxu0 0
        %1835 = vmatpush.bf16.xpose.msra.mxu0 0
        %1836 = vmatpush.bf16.xpose.msra.mxu0 %v1827
        %1837 = vmatmul.bf16.gmra.mxu0 %v1824
        %v1838 = vpop.f32.mrf.mxu0
        %v1839 = vadd.f32 0.0, %v1838
        %v1840 = vpop.f32.mrf.mxu0
        %v1841 = vadd.f32 0.0, %v1840
        %1842 = vdwg.mxu0
        %v1843 = vmul.f32 %v1839, 0.35355338
        %v1844 = vmul.f32 %v1841, 0.35355338
        %v1845 = vsel %vm822, %v1843, -inf
        %1846 = vmax.xlane.f32.xlu0 %v1845
        %v1847 = vpop.xlane.xlu0 %1846
        %v1848 = vsel %vm822, %v1844, -inf
        %1849 = vmax.xlane.f32.xlu0 %v1848
        %v1850 = vpop.xlane.xlu0 %1849
        %v1851 = vsub.f32 %v1843, %v1847
        %v1852 = vsub.f32 %v1844, %v1850
        %v1853 = vmul.f32 %v1851, 1.442695
        %v1854 = vpow.pop %v1853
        %v1855 = vmul.f32 %v1852, 1.442695
        %v1856 = vpow.pop %v1855
        %v1857 = vsel %vm822, %v1854, 0.0
        %1858 = vadd.xlane.f32.xlu0 %v1857
        %v1859 = vpop.xlane.xlu0 %1858
        %v1860 = vsel %vm822, %v1856, 0.0
        %1861 = vadd.xlane.f32.xlu0 %v1860
        %v1862 = vpop.xlane.xlu0 %1861
        %v1863 = vpack.c.bf16 %v1856, %v1854
        %1864 = vrot.lane.b32.xlu0 %v791, 8
        %v1865 = vpop.permute.xlu0 %1864
        %v1868 = vsel %vm822, %v1863, 0
        %1870 = vmatpush.bf16.msra.mxu0 0
        %1871 = vmatpush.bf16.msra.mxu0 0
        %1872 = vmatpush.bf16.msra.mxu0 0
        %1873 = vmatpush.bf16.msra.mxu0 0
        %1874 = vmatpush.bf16.msra.mxu0 0
        %1875 = vmatpush.bf16.msra.mxu0 0
        %1876 = vmatpush.bf16.msra.mxu0 0
        %1877 = vmatpush.bf16.msra.mxu0 %v1865
        %1878 = vmatmul.bf16.gmra.mxu0 %v1868
        %v1879 = vpop.f32.mrf.mxu0
        %v1880 = vadd.f32 0.0, %v1879
        %v1881 = vpop.f32.mrf.mxu0
        %v1882 = vadd.f32 0.0, %v1881
        %1883 = vdwg.mxu0
        %v1884 = vrcp.pop %v1859
        %v1885 = vrcp.pop %v1862
        %v1886 = vmul.f32 %v1880, %v1884
        %v1887 = vmul.f32 %v1882, %v1885
        %v1888 = vpack.c.bf16 %v1887, %v1886
        %v1890 = vsel %vm799, %v1888, 0
        %v1893 = vsel %vm940, %v1548, 0
        %1895 = vmatpush.bf16.msra.mxu0 0
        %1896 = vmatpush.bf16.msra.mxu0 0
        %1897 = vmatpush.bf16.msra.mxu0 0
        %1898 = vmatpush.bf16.msra.mxu0 0
        %1899 = vmatpush.bf16.msra.mxu0 0
        %1900 = vmatpush.bf16.msra.mxu0 0
        %1901 = vmatpush.bf16.msra.mxu0 0
        %1902 = vmatpush.bf16.msra.mxu0 %v1893
        %1903 = vmatmul.bf16.gmra.mxu0 %v1890
        %v1904 = vpop.f32.mrf.mxu0
        %v1905 = vadd.f32 0.0, %v1904
        %v1906 = vpop.f32.mrf.mxu0
        %v1907 = vadd.f32 0.0, %v1906
        %1908 = vdwg.mxu0
        %v1909 = vadd.f32 %v1817, %v1905
        %v1910 = vadd.f32 %v1818, %v1907
        %s1911 = scalar_lea.vmem [#allocation13], 48
        %v1912 = vld [vmem:[%s1911] sm:$0xf]
        %v1913 = vld [vmem:[%s1911 + $0x4] sm:$0xf]
        %v1914 = vld [vmem:[%s1911 + $0x8] sm:$0xf]
        %v1915 = vld [vmem:[%s1911 + $0xc] sm:$0xf]
        %v1916 = vunpack.c.h.b16 %v693
        %v1917 = vunpack.c.h.b16 %v694
        %v1918 = vpack.c.b16 %v1917, %v1916
        %v1920 = vsel %vm799, %v1173, 0
        %v1923 = vsel %vm799, %v1918, 0
        %1925 = vmatpush.bf16.xpose.msra.mxu0 0
        %1926 = vmatpush.bf16.xpose.msra.mxu0 0
        %1927 = vmatpush.bf16.xpose.msra.mxu0 0
        %1928 = vmatpush.bf16.xpose.msra.mxu0 0
        %1929 = vmatpush.bf16.xpose.msra.mxu0 0
        %1930 = vmatpush.bf16.xpose.msra.mxu0 0
        %1931 = vmatpush.bf16.xpose.msra.mxu0 0
        %1932 = vmatpush.bf16.xpose.msra.mxu0 %v1923
        %1933 = vmatmul.bf16.gmra.mxu0 %v1920
        %v1934 = vpop.f32.mrf.mxu0
        %v1935 = vadd.f32 0.0, %v1934
        %v1936 = vpop.f32.mrf.mxu0
        %v1937 = vadd.f32 0.0, %v1936
        %1938 = vdwg.mxu0
        %v1939 = vmul.f32 %v1935, 0.35355338
        %v1940 = vmul.f32 %v1937, 0.35355338
        %v1941 = vsel %vm822, %v1939, -inf
        %1942 = vmax.xlane.f32.xlu0 %v1941
        %v1943 = vpop.xlane.xlu0 %1942
        %v1944 = vsel %vm822, %v1940, -inf
        %1945 = vmax.xlane.f32.xlu0 %v1944
        %v1946 = vpop.xlane.xlu0 %1945
        %v1947 = vsub.f32 %v1939, %v1943
        %v1948 = vsub.f32 %v1940, %v1946
        %v1949 = vmul.f32 %v1947, 1.442695
        %v1950 = vpow.pop %v1949
        %v1951 = vmul.f32 %v1948, 1.442695
        %v1952 = vpow.pop %v1951
        %v1953 = vsel %vm822, %v1950, 0.0
        %1954 = vadd.xlane.f32.xlu0 %v1953
        %v1955 = vpop.xlane.xlu0 %1954
        %v1956 = vsel %vm822, %v1952, 0.0
        %1957 = vadd.xlane.f32.xlu0 %v1956
        %v1958 = vpop.xlane.xlu0 %1957
        %v1959 = vpack.c.bf16 %v1952, %v1950
        %1960 = vrot.lane.b32.xlu0 %v1918, 96
        %v1961 = vpop.permute.xlu0 %1960
        %v1964 = vsel %vm822, %v1959, 0
        %1966 = vmatpush.bf16.msra.mxu0 0
        %1967 = vmatpush.bf16.msra.mxu0 0
        %1968 = vmatpush.bf16.msra.mxu0 0
        %1969 = vmatpush.bf16.msra.mxu0 0
        %1970 = vmatpush.bf16.msra.mxu0 0
        %1971 = vmatpush.bf16.msra.mxu0 0
        %1972 = vmatpush.bf16.msra.mxu0 0
        %1973 = vmatpush.bf16.msra.mxu0 %v1961
        %1974 = vmatmul.bf16.gmra.mxu0 %v1964
        %v1975 = vpop.f32.mrf.mxu0
        %v1976 = vadd.f32 0.0, %v1975
        %v1977 = vpop.f32.mrf.mxu0
        %v1978 = vadd.f32 0.0, %v1977
        %1979 = vdwg.mxu0
        %v1980 = vrcp.pop %v1955
        %v1981 = vrcp.pop %v1958
        %v1982 = vmul.f32 %v1976, %v1980
        %v1983 = vmul.f32 %v1978, %v1981
        %v1984 = vpack.c.bf16 %v1983, %v1982
        %1985 = vrot.lane.b32.xlu0 %v1173, 120
        %v1986 = vpop.permute.xlu0 %1985
        %1987 = vrot.lane.b32.xlu0 %v1918, 120
        %v1988 = vpop.permute.xlu0 %1987
        %v1990 = vsel %vm799, %v1986, 0
        %v1993 = vsel %vm799, %v1988, 0
        %1995 = vmatpush.bf16.xpose.msra.mxu0 0
        %1996 = vmatpush.bf16.xpose.msra.mxu0 0
        %1997 = vmatpush.bf16.xpose.msra.mxu0 0
        %1998 = vmatpush.bf16.xpose.msra.mxu0 0
        %1999 = vmatpush.bf16.xpose.msra.mxu0 0
        %2000 = vmatpush.bf16.xpose.msra.mxu0 0
        %2001 = vmatpush.bf16.xpose.msra.mxu0 0
        %2002 = vmatpush.bf16.xpose.msra.mxu0 %v1993
        %2003 = vmatmul.bf16.gmra.mxu0 %v1990
        %v2004 = vpop.f32.mrf.mxu0
        %v2005 = vadd.f32 0.0, %v2004
        %v2006 = vpop.f32.mrf.mxu0
        %v2007 = vadd.f32 0.0, %v2006
        %2008 = vdwg.mxu0
        %v2009 = vmul.f32 %v2005, 0.35355338
        %v2010 = vmul.f32 %v2007, 0.35355338
        %v2011 = vsel %vm822, %v2009, -inf
        %2012 = vmax.xlane.f32.xlu0 %v2011
        %v2013 = vpop.xlane.xlu0 %2012
        %v2014 = vsel %vm822, %v2010, -inf
        %2015 = vmax.xlane.f32.xlu0 %v2014
        %v2016 = vpop.xlane.xlu0 %2015
        %v2017 = vsub.f32 %v2009, %v2013
        %v2018 = vsub.f32 %v2010, %v2016
        %v2019 = vmul.f32 %v2017, 1.442695
        %v2020 = vpow.pop %v2019
        %v2021 = vmul.f32 %v2018, 1.442695
        %v2022 = vpow.pop %v2021
        %v2023 = vsel %vm822, %v2020, 0.0
        %2024 = vadd.xlane.f32.xlu0 %v2023
        %v2025 = vpop.xlane.xlu0 %2024
        %v2026 = vsel %vm822, %v2022, 0.0
        %2027 = vadd.xlane.f32.xlu0 %v2026
        %v2028 = vpop.xlane.xlu0 %2027
        %v2029 = vpack.c.bf16 %v2022, %v2020
        %2030 = vrot.lane.b32.xlu0 %v1918, 88
        %v2031 = vpop.permute.xlu0 %2030
        %v2034 = vsel %vm822, %v2029, 0
        %2036 = vmatpush.bf16.msra.mxu0 0
        %2037 = vmatpush.bf16.msra.mxu0 0
        %2038 = vmatpush.bf16.msra.mxu0 0
        %2039 = vmatpush.bf16.msra.mxu0 0
        %2040 = vmatpush.bf16.msra.mxu0 0
        %2041 = vmatpush.bf16.msra.mxu0 0
        %2042 = vmatpush.bf16.msra.mxu0 0
        %2043 = vmatpush.bf16.msra.mxu0 %v2031
        %2044 = vmatmul.bf16.gmra.mxu0 %v2034
        %v2045 = vpop.f32.mrf.mxu0
        %v2046 = vadd.f32 0.0, %v2045
        %v2047 = vpop.f32.mrf.mxu0
        %v2048 = vadd.f32 0.0, %v2047
        %2049 = vdwg.mxu0
        %v2050 = vrcp.pop %v2025
        %v2051 = vrcp.pop %v2028
        %v2052 = vmul.f32 %v2046, %v2050
        %v2053 = vmul.f32 %v2048, %v2051
        %v2054 = vpack.c.bf16 %v2053, %v2052
        %v2056 = vsel %vm799, %v2054, 0
        %v2059 = vsel %vm940, %v1913, 0
        %2061 = vmatpush.bf16.msra.mxu0 0
        %2062 = vmatpush.bf16.msra.mxu0 0
        %2063 = vmatpush.bf16.msra.mxu0 0
        %2064 = vmatpush.bf16.msra.mxu0 0
        %2065 = vmatpush.bf16.msra.mxu0 0
        %2066 = vmatpush.bf16.msra.mxu0 0
        %2067 = vmatpush.bf16.msra.mxu0 0
        %2068 = vmatpush.bf16.msra.mxu0 %v2059
        %2069 = vmatmul.bf16.gmra.mxu0 %v2056
        %v2070 = vpop.f32.mrf.mxu0
        %v2071 = vadd.f32 0.0, %v2070
        %v2072 = vpop.f32.mrf.mxu0
        %v2073 = vadd.f32 0.0, %v2072
        %2074 = vdwg.mxu0
        %v2076 = vsel %vm799, %v1984, 0
        %v2079 = vsel %vm940, %v1912, 0
        %2081 = vmatpush.bf16.msra.mxu0 0
        %2082 = vmatpush.bf16.msra.mxu0 0
        %2083 = vmatpush.bf16.msra.mxu0 0
        %2084 = vmatpush.bf16.msra.mxu0 0
        %2085 = vmatpush.bf16.msra.mxu0 0
        %2086 = vmatpush.bf16.msra.mxu0 0
        %2087 = vmatpush.bf16.msra.mxu0 0
        %2088 = vmatpush.bf16.msra.mxu0 %v2079
        %2089 = vmatmul.bf16.gmra.mxu0 %v2076
        %v2090 = vpop.f32.mrf.mxu0
        %v2091 = vadd.f32 %v2071, %v2090
        %v2092 = vpop.f32.mrf.mxu0
        %v2093 = vadd.f32 %v2073, %v2092
        %2094 = vdwg.mxu0
        %2095 = vrot.lane.b32.xlu0 %v1173, 112
        %v2096 = vpop.permute.xlu0 %2095
        %2097 = vrot.lane.b32.xlu0 %v1918, 112
        %v2098 = vpop.permute.xlu0 %2097
        %v2100 = vsel %vm799, %v2096, 0
        %v2103 = vsel %vm799, %v2098, 0
        %2105 = vmatpush.bf16.xpose.msra.mxu0 0
        %2106 = vmatpush.bf16.xpose.msra.mxu0 0
        %2107 = vmatpush.bf16.xpose.msra.mxu0 0
        %2108 = vmatpush.bf16.xpose.msra.mxu0 0
        %2109 = vmatpush.bf16.xpose.msra.mxu0 0
        %2110 = vmatpush.bf16.xpose.msra.mxu0 0
        %2111 = vmatpush.bf16.xpose.msra.mxu0 0
        %2112 = vmatpush.bf16.xpose.msra.mxu0 %v2103
        %2113 = vmatmul.bf16.gmra.mxu0 %v2100
        %v2114 = vpop.f32.mrf.mxu0
        %v2115 = vadd.f32 0.0, %v2114
        %v2116 = vpop.f32.mrf.mxu0
        %v2117 = vadd.f32 0.0, %v2116
        %2118 = vdwg.mxu0
        %v2119 = vmul.f32 %v2115, 0.35355338
        %v2120 = vmul.f32 %v2117, 0.35355338
        %v2121 = vsel %vm822, %v2119, -inf
        %2122 = vmax.xlane.f32.xlu0 %v2121
        %v2123 = vpop.xlane.xlu0 %2122
        %v2124 = vsel %vm822, %v2120, -inf
        %2125 = vmax.xlane.f32.xlu0 %v2124
        %v2126 = vpop.xlane.xlu0 %2125
        %v2127 = vsub.f32 %v2119, %v2123
        %v2128 = vsub.f32 %v2120, %v2126
        %v2129 = vmul.f32 %v2127, 1.442695
        %v2130 = vpow.pop %v2129
        %v2131 = vmul.f32 %v2128, 1.442695
        %v2132 = vpow.pop %v2131
        %v2133 = vsel %vm822, %v2130, 0.0
        %2134 = vadd.xlane.f32.xlu0 %v2133
        %v2135 = vpop.xlane.xlu0 %2134
        %v2136 = vsel %vm822, %v2132, 0.0
        %2137 = vadd.xlane.f32.xlu0 %v2136
        %v2138 = vpop.xlane.xlu0 %2137
        %v2139 = vpack.c.bf16 %v2132, %v2130
        %2140 = vrot.lane.b32.xlu0 %v1918, 80
        %v2141 = vpop.permute.xlu0 %2140
        %v2144 = vsel %vm822, %v2139, 0
        %2146 = vmatpush.bf16.msra.mxu0 0
        %2147 = vmatpush.bf16.msra.mxu0 0
        %2148 = vmatpush.bf16.msra.mxu0 0
        %2149 = vmatpush.bf16.msra.mxu0 0
        %2150 = vmatpush.bf16.msra.mxu0 0
        %2151 = vmatpush.bf16.msra.mxu0 0
        %2152 = vmatpush.bf16.msra.mxu0 0
        %2153 = vmatpush.bf16.msra.mxu0 %v2141
        %2154 = vmatmul.bf16.gmra.mxu0 %v2144
        %v2155 = vpop.f32.mrf.mxu0
        %v2156 = vadd.f32 0.0, %v2155
        %v2157 = vpop.f32.mrf.mxu0
        %v2158 = vadd.f32 0.0, %v2157
        %2159 = vdwg.mxu0
        %v2160 = vrcp.pop %v2135
        %v2161 = vrcp.pop %v2138
        %v2162 = vmul.f32 %v2156, %v2160
        %v2163 = vmul.f32 %v2158, %v2161
        %v2164 = vpack.c.bf16 %v2163, %v2162
        %v2166 = vsel %vm799, %v2164, 0
        %v2169 = vsel %vm940, %v1914, 0
        %2171 = vmatpush.bf16.msra.mxu0 0
        %2172 = vmatpush.bf16.msra.mxu0 0
        %2173 = vmatpush.bf16.msra.mxu0 0
        %2174 = vmatpush.bf16.msra.mxu0 0
        %2175 = vmatpush.bf16.msra.mxu0 0
        %2176 = vmatpush.bf16.msra.mxu0 0
        %2177 = vmatpush.bf16.msra.mxu0 0
        %2178 = vmatpush.bf16.msra.mxu0 %v2169
        %2179 = vmatmul.bf16.gmra.mxu0 %v2166
        %v2180 = vpop.f32.mrf.mxu0
        %v2181 = vadd.f32 0.0, %v2180
        %v2182 = vpop.f32.mrf.mxu0
        %v2183 = vadd.f32 0.0, %v2182
        %2184 = vdwg.mxu0
        %v2185 = vadd.f32 %v2091, %v2181
        %v2186 = vadd.f32 %v2093, %v2183
        %2187 = vrot.lane.b32.xlu0 %v1173, 104
        %v2188 = vpop.permute.xlu0 %2187
        %2189 = vrot.lane.b32.xlu0 %v1918, 104
        %v2190 = vpop.permute.xlu0 %2189
        %v2192 = vsel %vm799, %v2188, 0
        %v2195 = vsel %vm799, %v2190, 0
        %2197 = vmatpush.bf16.xpose.msra.mxu0 0
        %2198 = vmatpush.bf16.xpose.msra.mxu0 0
        %2199 = vmatpush.bf16.xpose.msra.mxu0 0
        %2200 = vmatpush.bf16.xpose.msra.mxu0 0
        %2201 = vmatpush.bf16.xpose.msra.mxu0 0
        %2202 = vmatpush.bf16.xpose.msra.mxu0 0
        %2203 = vmatpush.bf16.xpose.msra.mxu0 0
        %2204 = vmatpush.bf16.xpose.msra.mxu0 %v2195
        %2205 = vmatmul.bf16.gmra.mxu0 %v2192
        %v2206 = vpop.f32.mrf.mxu0
        %v2207 = vadd.f32 0.0, %v2206
        %v2208 = vpop.f32.mrf.mxu0
        %v2209 = vadd.f32 0.0, %v2208
        %2210 = vdwg.mxu0
        %v2211 = vmul.f32 %v2207, 0.35355338
        %v2212 = vmul.f32 %v2209, 0.35355338
        %v2213 = vsel %vm822, %v2211, -inf
        %2214 = vmax.xlane.f32.xlu0 %v2213
        %v2215 = vpop.xlane.xlu0 %2214
        %v2216 = vsel %vm822, %v2212, -inf
        %2217 = vmax.xlane.f32.xlu0 %v2216
        %v2218 = vpop.xlane.xlu0 %2217
        %v2219 = vsub.f32 %v2211, %v2215
        %v2220 = vsub.f32 %v2212, %v2218
        %v2221 = vmul.f32 %v2219, 1.442695
        %v2222 = vpow.pop %v2221
        %v2223 = vmul.f32 %v2220, 1.442695
        %v2224 = vpow.pop %v2223
        %v2225 = vsel %vm822, %v2222, 0.0
        %2226 = vadd.xlane.f32.xlu0 %v2225
        %v2227 = vpop.xlane.xlu0 %2226
        %v2228 = vsel %vm822, %v2224, 0.0
        %2229 = vadd.xlane.f32.xlu0 %v2228
        %v2230 = vpop.xlane.xlu0 %2229
        %v2231 = vpack.c.bf16 %v2224, %v2222
        %2232 = vrot.lane.b32.xlu0 %v1918, 72
        %v2233 = vpop.permute.xlu0 %2232
        %v2236 = vsel %vm822, %v2231, 0
        %2238 = vmatpush.bf16.msra.mxu0 0
        %2239 = vmatpush.bf16.msra.mxu0 0
        %2240 = vmatpush.bf16.msra.mxu0 0
        %2241 = vmatpush.bf16.msra.mxu0 0
        %2242 = vmatpush.bf16.msra.mxu0 0
        %2243 = vmatpush.bf16.msra.mxu0 0
        %2244 = vmatpush.bf16.msra.mxu0 0
        %2245 = vmatpush.bf16.msra.mxu0 %v2233
        %2246 = vmatmul.bf16.gmra.mxu0 %v2236
        %v2247 = vpop.f32.mrf.mxu0
        %v2248 = vadd.f32 0.0, %v2247
        %v2249 = vpop.f32.mrf.mxu0
        %v2250 = vadd.f32 0.0, %v2249
        %2251 = vdwg.mxu0
        %v2252 = vrcp.pop %v2227
        %v2253 = vrcp.pop %v2230
        %v2254 = vmul.f32 %v2248, %v2252
        %v2255 = vmul.f32 %v2250, %v2253
        %v2256 = vpack.c.bf16 %v2255, %v2254
        %v2258 = vsel %vm799, %v2256, 0
        %v2261 = vsel %vm940, %v1915, 0
        %2263 = vmatpush.bf16.msra.mxu0 0
        %2264 = vmatpush.bf16.msra.mxu0 0
        %2265 = vmatpush.bf16.msra.mxu0 0
        %2266 = vmatpush.bf16.msra.mxu0 0
        %2267 = vmatpush.bf16.msra.mxu0 0
        %2268 = vmatpush.bf16.msra.mxu0 0
        %2269 = vmatpush.bf16.msra.mxu0 0
        %2270 = vmatpush.bf16.msra.mxu0 %v2261
        %2271 = vmatmul.bf16.gmra.mxu0 %v2258
        %v2272 = vpop.f32.mrf.mxu0
        %v2273 = vadd.f32 0.0, %v2272
        %v2274 = vpop.f32.mrf.mxu0
        %v2275 = vadd.f32 0.0, %v2274
        %2276 = vdwg.mxu0
        %v2277 = vadd.f32 %v2185, %v2273
        %v2278 = vadd.f32 %v2186, %v2275
        %v2279 = vadd.f32 %v1909, %v2277
        %v2280 = vadd.f32 %v1910, %v2278
        %v2281 = vld [vmem:[%s11] sm:$0x1]
        %v2283 = vperm.slane %v2281, 0
        %v2285 = vadd.f32 %v2279, %v2283
        %v2286 = vadd.f32 %v2280, %v2283
        %2287 = vst.msk [vmem:[%s611] sm:$0xff] %vm661, %v1542
        %2288 = vst.msk [vmem:[%s611 + $0x8] sm:$0xff] %vm661, %v1543
        %2289 = vst.msk [vmem:[%s618] sm:$0xff] %vm661, %v2285
        %2290 = vst.msk [vmem:[%s618 + $0x8] sm:$0xff] %vm661, %v2286
        %s2291 = sand.u32 %s314, 1
        %s2292 = scalar_lea.sflag [#allocation4], %s2291
        %s2293 = sand.u32 %s314, 1
        %s2294 = smul.addr %s2293, 16
        %s2295 = scalar_lea.vmem [#allocation14], %s2294
        %s2296 = sand.u32 %s340, 1
        %s2297 = scalar_lea.sflag [#allocation16], %s2296
        %s2298 = sand.u32 %s340, 1
        %s2299 = smul.addr %s2298, 16
        %s2300 = scalar_lea.vmem [#allocation15], %s2299
        // Predicated region
        $region97: #{tpu_custom_call.1} parent=67 // pred_check
          %p2301 = pneg %p324
        $region98: #{tpu_custom_call.1} parent=67 // pred_check_branch
          %2303 = sbr.rel (%p2301) target = $region100
        $region99: #{tpu_custom_call.1} parent=67 // pred_region
          %2305 = vsyncadd %s2292, 0
          %s2306 = smul.addr %s39, 2
          %s2307 = smul.addr %s2306, 8
          %s2308 = scalar_lea.hbm %s12, %s2307
          %s2309 = sshll.u32 %s2295, 4
          %s2310 = int_to_ptr.vmem [resolvable:$true] %s2309
          %s2311 = sshll.u32 %s2308, 4
          %s2312 = int_to_ptr.hbm [resolvable:$true] %s2311
          %2317 = dma.vmem_to_hbm [thread:$0]  %s2310, 256, %s2312, %s2292, 128, 128, 8
        $region100: #{tpu_custom_call.1} parent=67 // pred_fallthru
          _
        // Predicated region
        $region101: #{tpu_custom_call.1} parent=67 // pred_check
          %p2318 = pneg %p350
        $region102: #{tpu_custom_call.1} parent=67 // pred_check_branch
          %2320 = sbr.rel (%p2318) target = $region104
        $region103: #{tpu_custom_call.1} parent=67 // pred_region
          %2322 = vsyncadd %s2297, 0
          %s2323 = smul.addr %s39, 2
          %s2324 = smul.addr %s2323, 8
          %s2325 = scalar_lea.hbm %s13, %s2324
          %s2326 = sshll.u32 %s2300, 4
          %s2327 = int_to_ptr.vmem [resolvable:$true] %s2326
          %s2328 = sshll.u32 %s2325, 4
          %s2329 = int_to_ptr.hbm [resolvable:$true] %s2328
          %2334 = dma.vmem_to_hbm [thread:$0]  %s2327, 256, %s2329, %s2297, 128, 128, 8
        $region104: #{tpu_custom_call.1} parent=67 // pred_fallthru
          _
      $region68: #{tpu_custom_call.1} parent=5 // pred_fallthru
        _
      %p2335 = scmp.le.s32.totalorder 2, %s34
      // Predicated region
      $region105: #{tpu_custom_call.1} parent=5 // pred_check
        %p2336 = pneg %p2335
      $region106: #{tpu_custom_call.1} parent=5 // pred_check_branch
        %2338 = sbr.rel (%p2336) target = $region108
      $region107: #{tpu_custom_call.1} parent=5 // pred_region
        %s2339 = ssub.s32 %s34, 2
        // Predicated region
        $region109: #{tpu_custom_call.1} parent=107 // pred_check
          %p2340 = pneg %p330
        $region110: #{tpu_custom_call.1} parent=107 // pred_check_branch
          %2342 = sbr.rel (%p2340) target = $region112
        $region111: #{tpu_custom_call.1} parent=107 // pred_region
          %s2343 = sand.u32 %s315, 1
          %s2344 = scalar_lea.sflag [#allocation4], %s2343
          %s2345 = sand.u32 %s315, 1
          %s2346 = smul.addr %s2345, 16
          %s2347 = scalar_lea.vmem [#allocation14], %s2346
          %2349 = dma.done %s2344, 256
        $region112: #{tpu_custom_call.1} parent=107 // pred_fallthru
          _
        // Predicated region
        $region113: #{tpu_custom_call.1} parent=107 // pred_check
          %p2350 = pneg %p356
        $region114: #{tpu_custom_call.1} parent=107 // pred_check_branch
          %2352 = sbr.rel (%p2350) target = $region116
        $region115: #{tpu_custom_call.1} parent=107 // pred_region
          %s2353 = sand.u32 %s341, 1
          %s2354 = scalar_lea.sflag [#allocation16], %s2353
          %s2355 = sand.u32 %s341, 1
          %s2356 = smul.addr %s2355, 16
          %s2357 = scalar_lea.vmem [#allocation15], %s2356
          %2359 = dma.done %s2354, 256
        $region116: #{tpu_custom_call.1} parent=107 // pred_fallthru
          _
      $region108: #{tpu_custom_call.1} parent=5 // pred_fallthru
        _
    $region6: #{tpu_custom_call.1} parent=1 // loop_footer
      %s38 = sadd.s32 1, %s34
    $region7: #{tpu_custom_call.1} parent=1 // loop_footer_branch
      %33 = sbr.rel target = $region3
    $region8: #{tpu_custom_call.1} parent=1 // loop_exit
      _
    %2360 = vsyncpa [#allocation3], 1
    %s2361 = scalar_lea.sflag [#allocation3], 1
    %2362 = vsyncpa %s2361, 1
    %2363 = vsyncpa [#allocation6], 1
    %s2364 = scalar_lea.sflag [#allocation6], 1
    %2365 = vsyncpa %s2364, 1
    %2366 = vsyncpa [#allocation9], 1
    %2367 = vsyncpa [#allocation12], 1
    %2368 = vsyncpa [#allocation4], 1
    %s2369 = scalar_lea.sflag [#allocation4], 1
    %2370 = vsyncpa %s2369, 1
    %2371 = vsyncpa [#allocation16], 1
    %s2372 = scalar_lea.sflag [#allocation16], 1
    %2373 = vsyncpa %s2372, 1

</llo_original>
